<compile_context>
chip_gen: v6e
topology: v6e:2x2x1
jax: 0.10.0
libtpu: 0.0.40
codegen_flags: <defaults>
</compile_context>

<pallas_src>
import jax
import jax.numpy as jnp
from jax.experimental import pallas as pl
from jax.experimental.pallas import tpu as pltpu

NUM_CLASSES = 10
IMG_DIM = 28 * 28                        # 784
IN_DIM = IMG_DIM + NUM_CLASSES           # 794
K_PAD = 896                              # 7 * 128, fc1 K zero-padded
H1, H2, H3, OUT = 1024, 512, 256, 1


def _round_up(n, m):
    return ((n + m - 1) // m) * m


def _leaky_relu(x, slope=0.2):
    return jnp.where(x > 0, x, slope * x)


def _disc_kernel(xc_ref,
                 w1_ref, b1_ref,
                 w2_ref, b2_ref,
                 w3_ref, b3_ref,
                 w4_ref, b4_ref,
                 o_ref):
    # fc1: single fused matmul over the zero-padded concat(image, labels) K.
    xc = xc_ref[...].astype(jnp.bfloat16)
    h = jnp.dot(xc, w1_ref[...], preferred_element_type=jnp.float32)
    h = _leaky_relu(h + b1_ref[...])
    # fc2 + LeakyReLU.
    h = jnp.dot(h.astype(jnp.bfloat16), w2_ref[...],
                preferred_element_type=jnp.float32)
    h = _leaky_relu(h + b2_ref[...])
    # fc3 + LeakyReLU.
    h = jnp.dot(h.astype(jnp.bfloat16), w3_ref[...],
                preferred_element_type=jnp.float32)
    h = _leaky_relu(h + b3_ref[...])
    # fc4 (256 -> 1): VPU multiply + lane reduce instead of a 1-column MXU pass.
    logit = jnp.sum(h * w4_ref[...], axis=-1, keepdims=True) + b4_ref[...]
    o_ref[...] = jax.nn.sigmoid(logit)


def prepare_params(params):
    """Cast/stage the nn.Linear params for the kernel (do this once)."""
    (w1, b1), (w2, b2), (w3, b3), (w4, b4) = params
    # Fuse the image/label halves of fc1 and zero-pad K to 896.
    w1_pad = jnp.zeros((K_PAD, H1), jnp.float32).at[:IN_DIM, :].set(w1)
    w1b = w1_pad.astype(jnp.bfloat16)                  # (896, 1024)
    w2b = w2.astype(jnp.bfloat16)                      # (1024, 512)
    w3b = w3.astype(jnp.bfloat16)                      # (512, 256)
    w4r = w4.reshape(1, H3).astype(jnp.float32)        # (1, 256) f32 row
    b4s = b4.reshape(1, 1).astype(jnp.float32)         # (1, 1)
    return (w1b, b1.astype(jnp.float32),
            w2b, b2.astype(jnp.float32),
            w3b, b3.astype(jnp.float32),
            w4r, b4s)


def _pick_tile(B):
    """Batch tile: multiple of 16; grid >= 2 whenever the batch allows it."""
    if B >= 1024:
        TB = 512
    else:
        TB = min(256, _round_up(B, 16))
    B_pad = _round_up(B, TB)
    if B_pad // TB == 1 and TB >= 32:
        # Split so the "parallel" batch axis can shard across v7x's two TCs.
        TB = _round_up(TB // 2, 16)
        B_pad = _round_up(B, TB)
    return TB, B_pad


def discriminator_forward(x, labels, prepared):
    """x: (B, 1, 28, 28) f32, labels: (B, num_classes) f32 -> (B, 1) f32."""
    B = x.shape[0]
    x_flat = x.reshape(B, IMG_DIM)
    # Concat image + labels, zero-pad K to 896 (matches the fused fc1 weight).
    xc = jnp.concatenate([x_flat, labels], axis=1)          # (B, 794)
    xc = jnp.pad(xc, ((0, 0), (0, K_PAD - IN_DIM)))          # (B, 896)

    TB, B_pad = _pick_tile(B)
    if B_pad != B:
        xc = jnp.pad(xc, ((0, B_pad - B), (0, 0)))

    (w1, b1, w2, b2, w3, b3, w4r, b4) = prepared

    def batch_spec(cols):
        return pl.BlockSpec((TB, cols), lambda i: (i, 0))

    def const_spec(shape):
        # Constant index_map -> weights/biases stay VMEM resident across tiles.
        return pl.BlockSpec(shape, lambda i: (0, 0))

    out = pl.pallas_call(
        _disc_kernel,
        out_shape=jax.ShapeDtypeStruct((B_pad, OUT), jnp.float32),
        grid_spec=pltpu.PrefetchScalarGridSpec(
            num_scalar_prefetch=0,
            grid=(B_pad // TB,),
            in_specs=[
                batch_spec(K_PAD),                   # concat(x, labels) tile
                const_spec((K_PAD, H1)),             # fused w1 (bf16)
                const_spec((1, H1)),                 # b1
                const_spec((H1, H2)),                # w2 (bf16)
                const_spec((1, H2)),                 # b2
                const_spec((H2, H3)),                # w3 (bf16)
                const_spec((1, H3)),                 # b3
                const_spec((1, H3)),                 # w4 row (f32)
                const_spec((1, 1)),                  # b4
            ],
            out_specs=batch_spec(OUT),
        ),
        compiler_params=pltpu.CompilerParams(
            dimension_semantics=("parallel",),
            vmem_limit_bytes=32 << 20,
        ),
    )(xc, w1, b1, w2, b2, w3, b3, w4r, b4)
    return out[:B]


def init_params(key):
    """Deterministic init mimicking nn.Linear (uniform +/- 1/sqrt(fan_in))."""
    dims = [(IN_DIM, H1), (H1, H2), (H2, H3), (H3, OUT)]
    params = []
    for fi, fo in dims:
        kw, kb, key = jax.random.split(key, 3)
        bound = 1.0 / (fi ** 0.5)
        w = jax.random.uniform(kw, (fi, fo), jnp.float32, -bound, bound)
        b = jax.random.uniform(kb, (1, fo), jnp.float32, -bound, bound)
        params.append((w, b))
    return params


def reference_forward(x, labels, prepared):
    """Pure-JAX reference mirroring the kernel's bf16-weight math."""
    B = x.shape[0]
    (w1, b1, w2, b2, w3, b3, w4r, b4) = prepared
    xc = jnp.concatenate([x.reshape(B, IMG_DIM), labels], axis=1)
    xc = jnp.pad(xc, ((0, 0), (0, K_PAD - IN_DIM))).astype(jnp.bfloat16)
    h = jnp.dot(xc, w1, preferred_element_type=jnp.float32)
    h = _leaky_relu(h + b1)
    h = jnp.dot(h.astype(jnp.bfloat16), w2, preferred_element_type=jnp.float32)
    h = _leaky_relu(h + b2)
    h = jnp.dot(h.astype(jnp.bfloat16), w3, preferred_element_type=jnp.float32)
    h = _leaky_relu(h + b3)
    logit = jnp.sum(h * w4r, axis=-1, keepdims=True) + b4
    return jax.nn.sigmoid(logit)


if __name__ == "__main__":
    key = jax.random.PRNGKey(0)
    kx, kl, kp = jax.random.split(key, 3)

    B = 2
    x = jax.random.normal(kx, (B, 1, 28, 28), jnp.float32)
    label_idx = jax.random.randint(kl, (B,), 0, NUM_CLASSES)
    labels = jax.nn.one_hot(label_idx, NUM_CLASSES, dtype=jnp.float32)

    params = init_params(kp)
    prepared = prepare_params(params)

    out = discriminator_forward(x, labels, prepared)
    out = jax.block_until_ready(out)

    ref = reference_forward(x, labels, prepared)
    assert out.shape == (B, 1)
    assert jnp.allclose(out, ref, atol=1e-3, rtol=1e-3), (out, ref)

    print("KERNEL_OK")
</pallas_src>

<mosaic_0001>
module attributes {stable_mosaic.version = 11 : i64} {
  func.func @_disc_kernel(%arg0: i32, %arg1: memref<16x896xf32, #tpu.memory_space<vmem>>, %arg2: memref<896x1024xbf16, #tpu.memory_space<vmem>>, %arg3: memref<1x1024xf32, #tpu.memory_space<vmem>>, %arg4: memref<1024x512xbf16, #tpu.memory_space<vmem>>, %arg5: memref<1x512xf32, #tpu.memory_space<vmem>>, %arg6: memref<512x256xbf16, #tpu.memory_space<vmem>>, %arg7: memref<1x256xf32, #tpu.memory_space<vmem>>, %arg8: memref<1x256xf32, #tpu.memory_space<vmem>>, %arg9: memref<1x1xf32, #tpu.memory_space<vmem>>, %arg10: memref<16x1xf32, #tpu.memory_space<vmem>>) attributes {dimension_semantics = [#tpu.dimension_semantics<parallel>], iteration_bounds = array<i64: 1>, scalar_prefetch = 0 : i64, scratch_operands = 0 : i64, tpu.core_type = #tpu.core_type<tc>, window_params = [{transform_indices = @transform_0, window_bounds = array<i64: 16, 896>}, {pipeline_mode = #tpu.pipeline_mode<synchronous>, transform_indices = @transform_1, window_bounds = array<i64: 896, 1024>}, {pipeline_mode = #tpu.pipeline_mode<synchronous>, transform_indices = @transform_2, window_bounds = array<i64: 1, 1024>}, {pipeline_mode = #tpu.pipeline_mode<synchronous>, transform_indices = @transform_3, window_bounds = array<i64: 1024, 512>}, {pipeline_mode = #tpu.pipeline_mode<synchronous>, transform_indices = @transform_4, window_bounds = array<i64: 1, 512>}, {pipeline_mode = #tpu.pipeline_mode<synchronous>, transform_indices = @transform_5, window_bounds = array<i64: 512, 256>}, {pipeline_mode = #tpu.pipeline_mode<synchronous>, transform_indices = @transform_6, window_bounds = array<i64: 1, 256>}, {pipeline_mode = #tpu.pipeline_mode<synchronous>, transform_indices = @transform_7, window_bounds = array<i64: 1, 256>}, {pipeline_mode = #tpu.pipeline_mode<synchronous>, transform_indices = @transform_8, window_bounds = array<i64: 1, 1>}, {transform_indices = @transform_9, window_bounds = array<i64: 16, 1>}]} {
    %c0 = arith.constant 0 : index
    %c0_0 = arith.constant 0 : index
    %0 = vector.load %arg1[%c0, %c0_0] : memref<16x896xf32, #tpu.memory_space<vmem>>, vector<16x896xf32>
    %1 = arith.truncf %0 : vector<16x896xf32> to vector<16x896xbf16>
    %c0_1 = arith.constant 0 : index
    %c0_2 = arith.constant 0 : index
    %2 = vector.load %arg2[%c0_1, %c0_2] : memref<896x1024xbf16, #tpu.memory_space<vmem>>, vector<896x1024xbf16>
    %cst = arith.constant dense<0.000000e+00> : vector<16x1024xf32>
    %3 = tpu.matmul %1, %2, %cst {dimension_numbers = #tpu.dot_dimension_numbers<[1], [0], [0], [1], [0, 0, 1, 1], [], []>} : vector<16x896xbf16>, vector<896x1024xbf16>, vector<16x1024xf32> -> vector<16x1024xf32>
    %c0_3 = arith.constant 0 : index
    %c0_4 = arith.constant 0 : index
    %4 = vector.load %arg3[%c0_3, %c0_4] : memref<1x1024xf32, #tpu.memory_space<vmem>>, vector<1x1024xf32>
    %5 = vector.broadcast %4 : vector<1x1024xf32> to vector<16x1024xf32>
    %6 = arith.addf %3, %5 : vector<16x1024xf32>
    %cst_5 = arith.constant 0.000000e+00 : f32
    %7 = vector.broadcast %cst_5 : f32 to vector<16x1024xf32>
    %8 = arith.cmpf ogt, %6, %7 : vector<16x1024xf32>
    %cst_6 = arith.constant 2.000000e-01 : f32
    %9 = vector.broadcast %cst_6 : f32 to vector<16x1024xf32>
    %10 = arith.mulf %9, %6 : vector<16x1024xf32>
    %11 = arith.select %8, %6, %10 : vector<16x1024xi1>, vector<16x1024xf32>
    %12 = arith.truncf %11 : vector<16x1024xf32> to vector<16x1024xbf16>
    %c0_7 = arith.constant 0 : index
    %c0_8 = arith.constant 0 : index
    %13 = vector.load %arg4[%c0_7, %c0_8] : memref<1024x512xbf16, #tpu.memory_space<vmem>>, vector<1024x512xbf16>
    %cst_9 = arith.constant dense<0.000000e+00> : vector<16x512xf32>
    %14 = tpu.matmul %12, %13, %cst_9 {dimension_numbers = #tpu.dot_dimension_numbers<[1], [0], [0], [1], [0, 0, 1, 1], [], []>} : vector<16x1024xbf16>, vector<1024x512xbf16>, vector<16x512xf32> -> vector<16x512xf32>
    %c0_10 = arith.constant 0 : index
    %c0_11 = arith.constant 0 : index
    %15 = vector.load %arg5[%c0_10, %c0_11] : memref<1x512xf32, #tpu.memory_space<vmem>>, vector<1x512xf32>
    %16 = vector.broadcast %15 : vector<1x512xf32> to vector<16x512xf32>
    %17 = arith.addf %14, %16 : vector<16x512xf32>
    %cst_12 = arith.constant 0.000000e+00 : f32
    %18 = vector.broadcast %cst_12 : f32 to vector<16x512xf32>
    %19 = arith.cmpf ogt, %17, %18 : vector<16x512xf32>
    %cst_13 = arith.constant 2.000000e-01 : f32
    %20 = vector.broadcast %cst_13 : f32 to vector<16x512xf32>
    %21 = arith.mulf %20, %17 : vector<16x512xf32>
    %22 = arith.select %19, %17, %21 : vector<16x512xi1>, vector<16x512xf32>
    %23 = arith.truncf %22 : vector<16x512xf32> to vector<16x512xbf16>
    %c0_14 = arith.constant 0 : index
    %c0_15 = arith.constant 0 : index
    %24 = vector.load %arg6[%c0_14, %c0_15] : memref<512x256xbf16, #tpu.memory_space<vmem>>, vector<512x256xbf16>
    %cst_16 = arith.constant dense<0.000000e+00> : vector<16x256xf32>
    %25 = tpu.matmul %23, %24, %cst_16 {dimension_numbers = #tpu.dot_dimension_numbers<[1], [0], [0], [1], [0, 0, 1, 1], [], []>} : vector<16x512xbf16>, vector<512x256xbf16>, vector<16x256xf32> -> vector<16x256xf32>
    %c0_17 = arith.constant 0 : index
    %c0_18 = arith.constant 0 : index
    %26 = vector.load %arg7[%c0_17, %c0_18] : memref<1x256xf32, #tpu.memory_space<vmem>>, vector<1x256xf32>
    %27 = vector.broadcast %26 : vector<1x256xf32> to vector<16x256xf32>
    %28 = arith.addf %25, %27 : vector<16x256xf32>
    %cst_19 = arith.constant 0.000000e+00 : f32
    %29 = vector.broadcast %cst_19 : f32 to vector<16x256xf32>
    %30 = arith.cmpf ogt, %28, %29 : vector<16x256xf32>
    %cst_20 = arith.constant 2.000000e-01 : f32
    %31 = vector.broadcast %cst_20 : f32 to vector<16x256xf32>
    %32 = arith.mulf %31, %28 : vector<16x256xf32>
    %33 = arith.select %30, %28, %32 : vector<16x256xi1>, vector<16x256xf32>
    %c0_21 = arith.constant 0 : index
    %c0_22 = arith.constant 0 : index
    %34 = vector.load %arg8[%c0_21, %c0_22] : memref<1x256xf32, #tpu.memory_space<vmem>>, vector<1x256xf32>
    %35 = vector.broadcast %34 : vector<1x256xf32> to vector<16x256xf32>
    %36 = arith.mulf %33, %35 : vector<16x256xf32>
    %cst_23 = arith.constant dense<0.000000e+00> : vector<16xf32>
    %37 = vector.multi_reduction <add>, %36, %cst_23 [1] : vector<16x256xf32> to vector<16xf32>
    %38 = vector.shape_cast %37 : vector<16xf32> to vector<16x1xf32>
    %c0_24 = arith.constant 0 : index
    %c0_25 = arith.constant 0 : index
    %39 = vector.load %arg9[%c0_24, %c0_25] : memref<1x1xf32, #tpu.memory_space<vmem>>, vector<1x1xf32>
    %40 = vector.broadcast %39 : vector<1x1xf32> to vector<16x1xf32>
    %41 = arith.addf %38, %40 : vector<16x1xf32>
    %42 = arith.negf %41 : vector<16x1xf32>
    %43 = math.exp %42 : vector<16x1xf32>
    %cst_26 = arith.constant 1.000000e+00 : f32
    %44 = vector.broadcast %cst_26 : f32 to vector<16x1xf32>
    %45 = arith.addf %44, %43 : vector<16x1xf32>
    %46 = arith.divf %44, %45 : vector<16x1xf32>
    %c0_27 = arith.constant 0 : index
    %c0_28 = arith.constant 0 : index
    %47 = vector.load %arg10[%c0_27, %c0_28] : memref<16x1xf32, #tpu.memory_space<vmem>>, vector<16x1xf32>
    tpu.vector_store %arg10[%c0_27, %c0_28], %46 {strides = array<i32>} : memref<16x1xf32, #tpu.memory_space<vmem>>, vector<16x1xf32>,
    return
  }
  func.func @transform_0(%arg0: i32) -> (i32, i32) {
    %c0_i32 = arith.constant 0 : i32
    %c0_i32_0 = arith.constant 0 : i32
    return %arg0, %c0_i32 : i32, i32
  }
  func.func @transform_1(%arg0: i32) -> (i32, i32) {
    %c0_i32 = arith.constant 0 : i32
    %c0_i32_0 = arith.constant 0 : i32
    %c0_i32_1 = arith.constant 0 : i32
    return %c0_i32, %c0_i32_0 : i32, i32
  }
  func.func @transform_2(%arg0: i32) -> (i32, i32) {
    %c0_i32 = arith.constant 0 : i32
    %c0_i32_0 = arith.constant 0 : i32
    %c0_i32_1 = arith.constant 0 : i32
    return %c0_i32, %c0_i32_0 : i32, i32
  }
  func.func @transform_3(%arg0: i32) -> (i32, i32) {
    %c0_i32 = arith.constant 0 : i32
    %c0_i32_0 = arith.constant 0 : i32
    %c0_i32_1 = arith.constant 0 : i32
    return %c0_i32, %c0_i32_0 : i32, i32
  }
  func.func @transform_4(%arg0: i32) -> (i32, i32) {
    %c0_i32 = arith.constant 0 : i32
    %c0_i32_0 = arith.constant 0 : i32
    %c0_i32_1 = arith.constant 0 : i32
    return %c0_i32, %c0_i32_0 : i32, i32
  }
  func.func @transform_5(%arg0: i32) -> (i32, i32) {
    %c0_i32 = arith.constant 0 : i32
    %c0_i32_0 = arith.constant 0 : i32
    %c0_i32_1 = arith.constant 0 : i32
    return %c0_i32, %c0_i32_0 : i32, i32
  }
  func.func @transform_6(%arg0: i32) -> (i32, i32) {
    %c0_i32 = arith.constant 0 : i32
    %c0_i32_0 = arith.constant 0 : i32
    %c0_i32_1 = arith.constant 0 : i32
    return %c0_i32, %c0_i32_0 : i32, i32
  }
  func.func @transform_7(%arg0: i32) -> (i32, i32) {
    %c0_i32 = arith.constant 0 : i32
    %c0_i32_0 = arith.constant 0 : i32
    %c0_i32_1 = arith.constant 0 : i32
    return %c0_i32, %c0_i32_0 : i32, i32
  }
  func.func @transform_8(%arg0: i32) -> (i32, i32) {
    %c0_i32 = arith.constant 0 : i32
    %c0_i32_0 = arith.constant 0 : i32
    %c0_i32_1 = arith.constant 0 : i32
    return %c0_i32, %c0_i32_0 : i32, i32
  }
  func.func @transform_9(%arg0: i32) -> (i32, i32) {
    %c0_i32 = arith.constant 0 : i32
    %c0_i32_0 = arith.constant 0 : i32
    return %arg0, %c0_i32 : i32, i32
  }
}

</mosaic_0001>

<llo_original>
// kernel: tpu_custom_call.1
$region0: #{tpu_custom_call.1}
  #allocation0 [shape = 'u32[]', space=smem, size = 0x4, offset = 0x4, fixed_abs, tag = 'smem constant byte address 0x4 - core index']
  #allocation1 [shape = 'u32[144,128]{1,0:T(1,128)}', space=vmem, size = 0x12000, scoped, tag = 'internal scratch']
  #allocation2 [shape = 'f32[1,1]{1,0:T(1,128)S(1)}', space=vmem, size = 0x200, scoped, tag = 'scoped memory for tpu_custom_call.1']
  %s0 = inlined_call_operand.hbm [shape: f32[16,896], index: 0, kind: input, shape index: {}]
  %s1 = inlined_call_operand.hbm [shape: bf16[896,1024], index: 1, kind: input, shape index: {}]
  %s2 = inlined_call_operand.hbm [shape: f32[1,1024], index: 2, kind: input, shape index: {}]
  %s3 = inlined_call_operand.hbm [shape: bf16[1024,512], index: 3, kind: input, shape index: {}]
  %s4 = inlined_call_operand.hbm [shape: f32[1,512], index: 4, kind: input, shape index: {}]
  %s5 = inlined_call_operand.hbm [shape: bf16[512,256], index: 5, kind: input, shape index: {}]
  %s6 = inlined_call_operand.hbm [shape: f32[1,256], index: 6, kind: input, shape index: {}]
  %s7 = inlined_call_operand.hbm [shape: f32[1,256], index: 7, kind: input, shape index: {}]
  %s8 = inlined_call_operand.<no memory space> [shape: f32[1,1], index: 8, kind: input, shape index: {}]
  %s9 = inlined_call_operand.vmem [shape: f32[16,1], index: 9, kind: output, shape index: {}]
  %s10 = sld [smem:[#allocation0]]
  $region78: #{tpu_custom_call.1} parent=0
    _
  %s12 = ssub.s32 1, %s10
  %s13 = scalar_select 0, %s12, %s10
  %v14 = vstv %s8
  %15 = vst [vmem:[#allocation2] sm:$0x1] %v14
  $region1: #{tpu_custom_call.1} parent=0
    #allocation3 [shape = 'u8[57344]{0}', space=vmem, size = 0xe000, scoped, tag = 'input window, operand 0, single buffered']
    #allocation4 [shape = 's32[1]{0}', space=sflag, size = 0x4, scoped, tag = 'scoped memory for tpu_custom_call.1']
    #allocation5 [shape = 'u8[1835008]{0}', space=vmem, size = 0x1c0000, scoped, tag = 'input window, operand 1, single buffered']
    #allocation6 [shape = 's32[1]{0}', space=sflag, size = 0x4, scoped, tag = 'scoped memory for tpu_custom_call.1']
    #allocation7 [shape = 'u8[4096]{0}', space=vmem, size = 0x1000, scoped, tag = 'input window, operand 2, single buffered']
    #allocation8 [shape = 'u8[1048576]{0}', space=vmem, size = 0x100000, scoped, tag = 'input window, operand 3, single buffered']
    #allocation9 [shape = 's32[1]{0}', space=sflag, size = 0x4, scoped, tag = 'scoped memory for tpu_custom_call.1']
    #allocation10 [shape = 'u8[2048]{0}', space=vmem, size = 0x800, scoped, tag = 'input window, operand 4, single buffered']
    #allocation11 [shape = 'u8[262144]{0}', space=vmem, size = 0x40000, scoped, tag = 'input window, operand 5, single buffered']
    #allocation12 [shape = 's32[1]{0}', space=sflag, size = 0x4, scoped, tag = 'scoped memory for tpu_custom_call.1']
    #allocation13 [shape = 'u8[1024]{0}', space=vmem, size = 0x400, scoped, tag = 'input window, operand 6, single buffered']
    #allocation14 [shape = 'u8[1024]{0}', space=vmem, size = 0x400, scoped, tag = 'input window, operand 7, single buffered']
    #allocation15 [shape = 's32[1]{0}', space=sflag, size = 0x4, scoped, tag = 'scoped memory for tpu_custom_call.1']
    %16 = vsyncpa [#allocation4], 0
    %17 = vsyncpa [#allocation6], 0
    %18 = vsyncpa [#allocation9], 0
    %19 = vsyncpa [#allocation12], 0
    %20 = vsyncpa [#allocation15], 0
    // Predicated region
    $region2: #{tpu_custom_call.1} parent=1 // pred_check
      _
    $region3: #{tpu_custom_call.1} parent=1 // pred_check_branch
      %22 = sbr.rel (0) target = $region5
    $region4: #{tpu_custom_call.1} parent=1 // pred_region
      %s24 = ssub.s32 1792, 1792
      %25 = vsyncadd [#allocation4], %s24
      %s26 = sshll.u32 [#allocation3], 4
      %s27 = int_to_ptr.vmem [resolvable:$true] %s26
      %32 = dma.hbm_to_vmem [thread:$0]  %s0, 1792, %s27, [#allocation4], 896, 896, 56
    $region5: #{tpu_custom_call.1} parent=1 // pred_fallthru
      _
    // Predicated region
    $region6: #{tpu_custom_call.1} parent=1 // pred_check
      _
    $region7: #{tpu_custom_call.1} parent=1 // pred_check_branch
      %34 = sbr.rel (0) target = $region9
    $region8: #{tpu_custom_call.1} parent=1 // pred_region
      %s36 = ssub.s32 57344, 57344
      %37 = vsyncadd [#allocation6], %s36
      %s38 = sshll.u32 [#allocation5], 4
      %s39 = int_to_ptr.vmem [resolvable:$true] %s38
      %44 = dma.hbm_to_vmem [thread:$0]  %s1, 57344, %s39, [#allocation6], 512, 512, 32
    $region9: #{tpu_custom_call.1} parent=1 // pred_fallthru
      _
    // Predicated region
    $region10: #{tpu_custom_call.1} parent=1 // pred_check
      _
    $region11: #{tpu_custom_call.1} parent=1 // pred_check_branch
      %46 = sbr.rel (0) target = $region13
    $region12: #{tpu_custom_call.1} parent=1 // pred_region
      %s48 = ssub.s32 128, 128
      %49 = vsyncadd [#allocation6], %s48
      %s51 = sshll.u32 [#allocation7], 4
      %s52 = int_to_ptr.vmem [resolvable:$true] %s51
      %54 = dma.hbm_to_vmem [thread:$0]  %s2, 128, %s52, [#allocation6]
    $region13: #{tpu_custom_call.1} parent=1 // pred_fallthru
      _
    // Predicated region
    $region14: #{tpu_custom_call.1} parent=1 // pred_check
      _
    $region15: #{tpu_custom_call.1} parent=1 // pred_check_branch
      %56 = sbr.rel (0) target = $region17
    $region16: #{tpu_custom_call.1} parent=1 // pred_region
      %s58 = ssub.s32 32768, 32768
      %59 = vsyncadd [#allocation9], %s58
      %s60 = sshll.u32 [#allocation8], 4
      %s61 = int_to_ptr.vmem [resolvable:$true] %s60
      %66 = dma.hbm_to_vmem [thread:$0]  %s3, 32768, %s61, [#allocation9], 256, 256, 16
    $region17: #{tpu_custom_call.1} parent=1 // pred_fallthru
      _
    // Predicated region
    $region18: #{tpu_custom_call.1} parent=1 // pred_check
      _
    $region19: #{tpu_custom_call.1} parent=1 // pred_check_branch
      %68 = sbr.rel (0) target = $region21
    $region20: #{tpu_custom_call.1} parent=1 // pred_region
      %s70 = ssub.s32 64, 64
      %71 = vsyncadd [#allocation9], %s70
      %s73 = sshll.u32 [#allocation10], 4
      %s74 = int_to_ptr.vmem [resolvable:$true] %s73
      %76 = dma.hbm_to_vmem [thread:$0]  %s4, 64, %s74, [#allocation9]
    $region21: #{tpu_custom_call.1} parent=1 // pred_fallthru
      _
    // Predicated region
    $region22: #{tpu_custom_call.1} parent=1 // pred_check
      _
    $region23: #{tpu_custom_call.1} parent=1 // pred_check_branch
      %78 = sbr.rel (0) target = $region25
    $region24: #{tpu_custom_call.1} parent=1 // pred_region
      %s80 = ssub.s32 8192, 8192
      %81 = vsyncadd [#allocation12], %s80
      %s82 = sshll.u32 [#allocation11], 4
      %s83 = int_to_ptr.vmem [resolvable:$true] %s82
      %88 = dma.hbm_to_vmem [thread:$0]  %s5, 8192, %s83, [#allocation12], 128, 128, 8
    $region25: #{tpu_custom_call.1} parent=1 // pred_fallthru
      _
    // Predicated region
    $region26: #{tpu_custom_call.1} parent=1 // pred_check
      _
    $region27: #{tpu_custom_call.1} parent=1 // pred_check_branch
      %90 = sbr.rel (0) target = $region29
    $region28: #{tpu_custom_call.1} parent=1 // pred_region
      %s92 = ssub.s32 32, 32
      %93 = vsyncadd [#allocation12], %s92
      %s95 = sshll.u32 [#allocation13], 4
      %s96 = int_to_ptr.vmem [resolvable:$true] %s95
      %98 = dma.hbm_to_vmem [thread:$0]  %s6, 32, %s96, [#allocation12]
    $region29: #{tpu_custom_call.1} parent=1 // pred_fallthru
      _
    // Predicated region
    $region30: #{tpu_custom_call.1} parent=1 // pred_check
      _
    $region31: #{tpu_custom_call.1} parent=1 // pred_check_branch
      %100 = sbr.rel (0) target = $region33
    $region32: #{tpu_custom_call.1} parent=1 // pred_region
      %s102 = ssub.s32 32, 32
      %103 = vsyncadd [#allocation15], %s102
      %s105 = sshll.u32 [#allocation14], 4
      %s106 = int_to_ptr.vmem [resolvable:$true] %s105
      %108 = dma.hbm_to_vmem [thread:$0]  %s7, 32, %s106, [#allocation15]
    $region33: #{tpu_custom_call.1} parent=1 // pred_fallthru
      _
    // Predicated region
    $region34: #{tpu_custom_call.1} parent=1 // pred_check
      _
    $region35: #{tpu_custom_call.1} parent=1 // pred_check_branch
      %110 = sbr.rel (0) target = $region37
    $region36: #{tpu_custom_call.1} parent=1 // pred_region
      _
    $region37: #{tpu_custom_call.1} parent=1 // pred_fallthru
      _
    // Predicated region
    $region38: #{tpu_custom_call.1} parent=1 // pred_check
      _
    $region39: #{tpu_custom_call.1} parent=1 // pred_check_branch
      %112 = sbr.rel (0) target = $region41
    $region40: #{tpu_custom_call.1} parent=1 // pred_region
      %113 = dma.done [#allocation4], 1792
    $region41: #{tpu_custom_call.1} parent=1 // pred_fallthru
      _
    // Predicated region
    $region42: #{tpu_custom_call.1} parent=1 // pred_check
      _
    $region43: #{tpu_custom_call.1} parent=1 // pred_check_branch
      %115 = sbr.rel (0) target = $region45
    $region44: #{tpu_custom_call.1} parent=1 // pred_region
      %116 = dma.done [#allocation6], 57344
    $region45: #{tpu_custom_call.1} parent=1 // pred_fallthru
      _
    // Predicated region
    $region46: #{tpu_custom_call.1} parent=1 // pred_check
      _
    $region47: #{tpu_custom_call.1} parent=1 // pred_check_branch
      %118 = sbr.rel (0) target = $region49
    $region48: #{tpu_custom_call.1} parent=1 // pred_region
      %119 = dma.done [#allocation6], 128
    $region49: #{tpu_custom_call.1} parent=1 // pred_fallthru
      _
    // Predicated region
    $region50: #{tpu_custom_call.1} parent=1 // pred_check
      _
    $region51: #{tpu_custom_call.1} parent=1 // pred_check_branch
      %121 = sbr.rel (0) target = $region53
    $region52: #{tpu_custom_call.1} parent=1 // pred_region
      %122 = dma.done [#allocation9], 32768
    $region53: #{tpu_custom_call.1} parent=1 // pred_fallthru
      _
    // Predicated region
    $region54: #{tpu_custom_call.1} parent=1 // pred_check
      _
    $region55: #{tpu_custom_call.1} parent=1 // pred_check_branch
      %124 = sbr.rel (0) target = $region57
    $region56: #{tpu_custom_call.1} parent=1 // pred_region
      %125 = dma.done [#allocation9], 64
    $region57: #{tpu_custom_call.1} parent=1 // pred_fallthru
      _
    // Predicated region
    $region58: #{tpu_custom_call.1} parent=1 // pred_check
      _
    $region59: #{tpu_custom_call.1} parent=1 // pred_check_branch
      %127 = sbr.rel (0) target = $region61
    $region60: #{tpu_custom_call.1} parent=1 // pred_region
      %128 = dma.done [#allocation12], 8192
    $region61: #{tpu_custom_call.1} parent=1 // pred_fallthru
      _
    // Predicated region
    $region62: #{tpu_custom_call.1} parent=1 // pred_check
      _
    $region63: #{tpu_custom_call.1} parent=1 // pred_check_branch
      %130 = sbr.rel (0) target = $region65
    $region64: #{tpu_custom_call.1} parent=1 // pred_region
      %131 = dma.done [#allocation12], 32
    $region65: #{tpu_custom_call.1} parent=1 // pred_fallthru
      _
    // Predicated region
    $region66: #{tpu_custom_call.1} parent=1 // pred_check
      _
    $region67: #{tpu_custom_call.1} parent=1 // pred_check_branch
      %133 = sbr.rel (0) target = $region69
    $region68: #{tpu_custom_call.1} parent=1 // pred_region
      %134 = dma.done [#allocation15], 32
    $region69: #{tpu_custom_call.1} parent=1 // pred_fallthru
      _
    %v136 = vld [vmem:[#allocation3] sm:$0xff]
    %v137 = vld [vmem:[#allocation3 + $0x8] sm:$0xff]
    %v138 = vld [vmem:[#allocation3 + $0x10] sm:$0xff]
    %v139 = vld [vmem:[#allocation3 + $0x18] sm:$0xff]
    %v140 = vld [vmem:[#allocation3 + $0x20] sm:$0xff]
    %v141 = vld [vmem:[#allocation3 + $0x28] sm:$0xff]
    %v142 = vld [vmem:[#allocation3 + $0x30] sm:$0xff]
    %v143 = vld [vmem:[#allocation3 + $0x38] sm:$0xff]
    %v144 = vld [vmem:[#allocation3 + $0x40] sm:$0xff]
    %v145 = vld [vmem:[#allocation3 + $0x48] sm:$0xff]
    %v146 = vld [vmem:[#allocation3 + $0x50] sm:$0xff]
    %v147 = vld [vmem:[#allocation3 + $0x58] sm:$0xff]
    %v148 = vld [vmem:[#allocation3 + $0x60] sm:$0xff]
    %v149 = vld [vmem:[#allocation3 + $0x68] sm:$0xff]
    %v150 = vpack.c.bf16 %v143, %v136
    %v151 = vpack.c.bf16 %v144, %v137
    %v152 = vpack.c.bf16 %v145, %v138
    %v153 = vpack.c.bf16 %v146, %v139
    %v154 = vpack.c.bf16 %v147, %v140
    %v155 = vpack.c.bf16 %v148, %v141
    %v156 = vpack.c.bf16 %v149, %v142
    %v157 = vld [vmem:[#allocation5] sm:$0xff]
    %v158 = vld [vmem:[#allocation5 + $0x8] sm:$0xff]
    %v159 = vld [vmem:[#allocation5 + $0x10] sm:$0xff]
    %v160 = vld [vmem:[#allocation5 + $0x18] sm:$0xff]
    %v161 = vld [vmem:[#allocation5 + $0x20] sm:$0xff]
    %v162 = vld [vmem:[#allocation5 + $0x28] sm:$0xff]
    %v163 = vld [vmem:[#allocation5 + $0x30] sm:$0xff]
    %v164 = vld [vmem:[#allocation5 + $0x38] sm:$0xff]
    %v165 = vld [vmem:[#allocation5 + $0x40] sm:$0xff]
    %v166 = vld [vmem:[#allocation5 + $0x48] sm:$0xff]
    %v167 = vld [vmem:[#allocation5 + $0x50] sm:$0xff]
    %v168 = vld [vmem:[#allocation5 + $0x58] sm:$0xff]
    %v169 = vld [vmem:[#allocation5 + $0x60] sm:$0xff]
    %v170 = vld [vmem:[#allocation5 + $0x68] sm:$0xff]
    %v171 = vld [vmem:[#allocation5 + $0x70] sm:$0xff]
    %v172 = vld [vmem:[#allocation5 + $0x78] sm:$0xff]
    %v173 = vld [vmem:[#allocation5 + $0x80] sm:$0xff]
    %v174 = vld [vmem:[#allocation5 + $0x88] sm:$0xff]
    %v175 = vld [vmem:[#allocation5 + $0x90] sm:$0xff]
    %v176 = vld [vmem:[#allocation5 + $0x98] sm:$0xff]
    %v177 = vld [vmem:[#allocation5 + $0xa0] sm:$0xff]
    %v178 = vld [vmem:[#allocation5 + $0xa8] sm:$0xff]
    %v179 = vld [vmem:[#allocation5 + $0xb0] sm:$0xff]
    %v180 = vld [vmem:[#allocation5 + $0xb8] sm:$0xff]
    %v181 = vld [vmem:[#allocation5 + $0xc0] sm:$0xff]
    %v182 = vld [vmem:[#allocation5 + $0xc8] sm:$0xff]
    %v183 = vld [vmem:[#allocation5 + $0xd0] sm:$0xff]
    %v184 = vld [vmem:[#allocation5 + $0xd8] sm:$0xff]
    %v185 = vld [vmem:[#allocation5 + $0xe0] sm:$0xff]
    %v186 = vld [vmem:[#allocation5 + $0xe8] sm:$0xff]
    %v187 = vld [vmem:[#allocation5 + $0xf0] sm:$0xff]
    %v188 = vld [vmem:[#allocation5 + $0xf8] sm:$0xff]
    %v189 = vld [vmem:[#allocation5 + $0x100] sm:$0xff]
    %v190 = vld [vmem:[#allocation5 + $0x108] sm:$0xff]
    %v191 = vld [vmem:[#allocation5 + $0x110] sm:$0xff]
    %v192 = vld [vmem:[#allocation5 + $0x118] sm:$0xff]
    %v193 = vld [vmem:[#allocation5 + $0x120] sm:$0xff]
    %v194 = vld [vmem:[#allocation5 + $0x128] sm:$0xff]
    %v195 = vld [vmem:[#allocation5 + $0x130] sm:$0xff]
    %v196 = vld [vmem:[#allocation5 + $0x138] sm:$0xff]
    %v197 = vld [vmem:[#allocation5 + $0x140] sm:$0xff]
    %v198 = vld [vmem:[#allocation5 + $0x148] sm:$0xff]
    %v199 = vld [vmem:[#allocation5 + $0x150] sm:$0xff]
    %v200 = vld [vmem:[#allocation5 + $0x158] sm:$0xff]
    %v201 = vld [vmem:[#allocation5 + $0x160] sm:$0xff]
    %v202 = vld [vmem:[#allocation5 + $0x168] sm:$0xff]
    %v203 = vld [vmem:[#allocation5 + $0x170] sm:$0xff]
    %v204 = vld [vmem:[#allocation5 + $0x178] sm:$0xff]
    %v205 = vld [vmem:[#allocation5 + $0x180] sm:$0xff]
    %v206 = vld [vmem:[#allocation5 + $0x188] sm:$0xff]
    %v207 = vld [vmem:[#allocation5 + $0x190] sm:$0xff]
    %v208 = vld [vmem:[#allocation5 + $0x198] sm:$0xff]
    %v209 = vld [vmem:[#allocation5 + $0x1a0] sm:$0xff]
    %v210 = vld [vmem:[#allocation5 + $0x1a8] sm:$0xff]
    %v211 = vld [vmem:[#allocation5 + $0x1b0] sm:$0xff]
    %v212 = vld [vmem:[#allocation5 + $0x1b8] sm:$0xff]
    %v213 = vld [vmem:[#allocation5 + $0x1c0] sm:$0xff]
    %v214 = vld [vmem:[#allocation5 + $0x1c8] sm:$0xff]
    %v215 = vld [vmem:[#allocation5 + $0x1d0] sm:$0xff]
    %v216 = vld [vmem:[#allocation5 + $0x1d8] sm:$0xff]
    %v217 = vld [vmem:[#allocation5 + $0x1e0] sm:$0xff]
    %v218 = vld [vmem:[#allocation5 + $0x1e8] sm:$0xff]
    %v219 = vld [vmem:[#allocation5 + $0x1f0] sm:$0xff]
    %v220 = vld [vmem:[#allocation5 + $0x1f8] sm:$0xff]
    %v221 = vld [vmem:[#allocation5 + $0x200] sm:$0xff]
    %v222 = vld [vmem:[#allocation5 + $0x208] sm:$0xff]
    %v223 = vld [vmem:[#allocation5 + $0x210] sm:$0xff]
    %v224 = vld [vmem:[#allocation5 + $0x218] sm:$0xff]
    %v225 = vld [vmem:[#allocation5 + $0x220] sm:$0xff]
    %v226 = vld [vmem:[#allocation5 + $0x228] sm:$0xff]
    %v227 = vld [vmem:[#allocation5 + $0x230] sm:$0xff]
    %v228 = vld [vmem:[#allocation5 + $0x238] sm:$0xff]
    %v229 = vld [vmem:[#allocation5 + $0x240] sm:$0xff]
    %v230 = vld [vmem:[#allocation5 + $0x248] sm:$0xff]
    %v231 = vld [vmem:[#allocation5 + $0x250] sm:$0xff]
    %v232 = vld [vmem:[#allocation5 + $0x258] sm:$0xff]
    %v233 = vld [vmem:[#allocation5 + $0x260] sm:$0xff]
    %v234 = vld [vmem:[#allocation5 + $0x268] sm:$0xff]
    %v235 = vld [vmem:[#allocation5 + $0x270] sm:$0xff]
    %v236 = vld [vmem:[#allocation5 + $0x278] sm:$0xff]
    %v237 = vld [vmem:[#allocation5 + $0x280] sm:$0xff]
    %v238 = vld [vmem:[#allocation5 + $0x288] sm:$0xff]
    %v239 = vld [vmem:[#allocation5 + $0x290] sm:$0xff]
    %v240 = vld [vmem:[#allocation5 + $0x298] sm:$0xff]
    %v241 = vld [vmem:[#allocation5 + $0x2a0] sm:$0xff]
    %v242 = vld [vmem:[#allocation5 + $0x2a8] sm:$0xff]
    %v243 = vld [vmem:[#allocation5 + $0x2b0] sm:$0xff]
    %v244 = vld [vmem:[#allocation5 + $0x2b8] sm:$0xff]
    %v245 = vld [vmem:[#allocation5 + $0x2c0] sm:$0xff]
    %v246 = vld [vmem:[#allocation5 + $0x2c8] sm:$0xff]
    %v247 = vld [vmem:[#allocation5 + $0x2d0] sm:$0xff]
    %v248 = vld [vmem:[#allocation5 + $0x2d8] sm:$0xff]
    %v249 = vld [vmem:[#allocation5 + $0x2e0] sm:$0xff]
    %v250 = vld [vmem:[#allocation5 + $0x2e8] sm:$0xff]
    %v251 = vld [vmem:[#allocation5 + $0x2f0] sm:$0xff]
    %v252 = vld [vmem:[#allocation5 + $0x2f8] sm:$0xff]
    %v253 = vld [vmem:[#allocation5 + $0x300] sm:$0xff]
    %v254 = vld [vmem:[#allocation5 + $0x308] sm:$0xff]
    %v255 = vld [vmem:[#allocation5 + $0x310] sm:$0xff]
    %v256 = vld [vmem:[#allocation5 + $0x318] sm:$0xff]
    %v257 = vld [vmem:[#allocation5 + $0x320] sm:$0xff]
    %v258 = vld [vmem:[#allocation5 + $0x328] sm:$0xff]
    %v259 = vld [vmem:[#allocation5 + $0x330] sm:$0xff]
    %v260 = vld [vmem:[#allocation5 + $0x338] sm:$0xff]
    %v261 = vld [vmem:[#allocation5 + $0x340] sm:$0xff]
    %v262 = vld [vmem:[#allocation5 + $0x348] sm:$0xff]
    %v263 = vld [vmem:[#allocation5 + $0x350] sm:$0xff]
    %v264 = vld [vmem:[#allocation5 + $0x358] sm:$0xff]
    %v265 = vld [vmem:[#allocation5 + $0x360] sm:$0xff]
    %v266 = vld [vmem:[#allocation5 + $0x368] sm:$0xff]
    %v267 = vld [vmem:[#allocation5 + $0x370] sm:$0xff]
    %v268 = vld [vmem:[#allocation5 + $0x378] sm:$0xff]
    %v269 = vld [vmem:[#allocation5 + $0x380] sm:$0xff]
    %v270 = vld [vmem:[#allocation5 + $0x388] sm:$0xff]
    %v271 = vld [vmem:[#allocation5 + $0x390] sm:$0xff]
    %v272 = vld [vmem:[#allocation5 + $0x398] sm:$0xff]
    %v273 = vld [vmem:[#allocation5 + $0x3a0] sm:$0xff]
    %v274 = vld [vmem:[#allocation5 + $0x3a8] sm:$0xff]
    %v275 = vld [vmem:[#allocation5 + $0x3b0] sm:$0xff]
    %v276 = vld [vmem:[#allocation5 + $0x3b8] sm:$0xff]
    %v277 = vld [vmem:[#allocation5 + $0x3c0] sm:$0xff]
    %v278 = vld [vmem:[#allocation5 + $0x3c8] sm:$0xff]
    %v279 = vld [vmem:[#allocation5 + $0x3d0] sm:$0xff]
    %v280 = vld [vmem:[#allocation5 + $0x3d8] sm:$0xff]
    %v281 = vld [vmem:[#allocation5 + $0x3e0] sm:$0xff]
    %v282 = vld [vmem:[#allocation5 + $0x3e8] sm:$0xff]
    %v283 = vld [vmem:[#allocation5 + $0x3f0] sm:$0xff]
    %v284 = vld [vmem:[#allocation5 + $0x3f8] sm:$0xff]
    %v285 = vld [vmem:[#allocation5 + $0x400] sm:$0xff]
    %v286 = vld [vmem:[#allocation5 + $0x408] sm:$0xff]
    %v287 = vld [vmem:[#allocation5 + $0x410] sm:$0xff]
    %v288 = vld [vmem:[#allocation5 + $0x418] sm:$0xff]
    %v289 = vld [vmem:[#allocation5 + $0x420] sm:$0xff]
    %v290 = vld [vmem:[#allocation5 + $0x428] sm:$0xff]
    %v291 = vld [vmem:[#allocation5 + $0x430] sm:$0xff]
    %v292 = vld [vmem:[#allocation5 + $0x438] sm:$0xff]
    %v293 = vld [vmem:[#allocation5 + $0x440] sm:$0xff]
    %v294 = vld [vmem:[#allocation5 + $0x448] sm:$0xff]
    %v295 = vld [vmem:[#allocation5 + $0x450] sm:$0xff]
    %v296 = vld [vmem:[#allocation5 + $0x458] sm:$0xff]
    %v297 = vld [vmem:[#allocation5 + $0x460] sm:$0xff]
    %v298 = vld [vmem:[#allocation5 + $0x468] sm:$0xff]
    %v299 = vld [vmem:[#allocation5 + $0x470] sm:$0xff]
    %v300 = vld [vmem:[#allocation5 + $0x478] sm:$0xff]
    %v301 = vld [vmem:[#allocation5 + $0x480] sm:$0xff]
    %v302 = vld [vmem:[#allocation5 + $0x488] sm:$0xff]
    %v303 = vld [vmem:[#allocation5 + $0x490] sm:$0xff]
    %v304 = vld [vmem:[#allocation5 + $0x498] sm:$0xff]
    %v305 = vld [vmem:[#allocation5 + $0x4a0] sm:$0xff]
    %v306 = vld [vmem:[#allocation5 + $0x4a8] sm:$0xff]
    %v307 = vld [vmem:[#allocation5 + $0x4b0] sm:$0xff]
    %v308 = vld [vmem:[#allocation5 + $0x4b8] sm:$0xff]
    %v309 = vld [vmem:[#allocation5 + $0x4c0] sm:$0xff]
    %v310 = vld [vmem:[#allocation5 + $0x4c8] sm:$0xff]
    %v311 = vld [vmem:[#allocation5 + $0x4d0] sm:$0xff]
    %v312 = vld [vmem:[#allocation5 + $0x4d8] sm:$0xff]
    %v313 = vld [vmem:[#allocation5 + $0x4e0] sm:$0xff]
    %v314 = vld [vmem:[#allocation5 + $0x4e8] sm:$0xff]
    %v315 = vld [vmem:[#allocation5 + $0x4f0] sm:$0xff]
    %v316 = vld [vmem:[#allocation5 + $0x4f8] sm:$0xff]
    %v317 = vld [vmem:[#allocation5 + $0x500] sm:$0xff]
    %v318 = vld [vmem:[#allocation5 + $0x508] sm:$0xff]
    %v319 = vld [vmem:[#allocation5 + $0x510] sm:$0xff]
    %v320 = vld [vmem:[#allocation5 + $0x518] sm:$0xff]
    %v321 = vld [vmem:[#allocation5 + $0x520] sm:$0xff]
    %v322 = vld [vmem:[#allocation5 + $0x528] sm:$0xff]
    %v323 = vld [vmem:[#allocation5 + $0x530] sm:$0xff]
    %v324 = vld [vmem:[#allocation5 + $0x538] sm:$0xff]
    %v325 = vld [vmem:[#allocation5 + $0x540] sm:$0xff]
    %v326 = vld [vmem:[#allocation5 + $0x548] sm:$0xff]
    %v327 = vld [vmem:[#allocation5 + $0x550] sm:$0xff]
    %v328 = vld [vmem:[#allocation5 + $0x558] sm:$0xff]
    %v329 = vld [vmem:[#allocation5 + $0x560] sm:$0xff]
    %v330 = vld [vmem:[#allocation5 + $0x568] sm:$0xff]
    %v331 = vld [vmem:[#allocation5 + $0x570] sm:$0xff]
    %v332 = vld [vmem:[#allocation5 + $0x578] sm:$0xff]
    %v333 = vld [vmem:[#allocation5 + $0x580] sm:$0xff]
    %v334 = vld [vmem:[#allocation5 + $0x588] sm:$0xff]
    %v335 = vld [vmem:[#allocation5 + $0x590] sm:$0xff]
    %v336 = vld [vmem:[#allocation5 + $0x598] sm:$0xff]
    %v337 = vld [vmem:[#allocation5 + $0x5a0] sm:$0xff]
    %v338 = vld [vmem:[#allocation5 + $0x5a8] sm:$0xff]
    %v339 = vld [vmem:[#allocation5 + $0x5b0] sm:$0xff]
    %v340 = vld [vmem:[#allocation5 + $0x5b8] sm:$0xff]
    %v341 = vld [vmem:[#allocation5 + $0x5c0] sm:$0xff]
    %v342 = vld [vmem:[#allocation5 + $0x5c8] sm:$0xff]
    %v343 = vld [vmem:[#allocation5 + $0x5d0] sm:$0xff]
    %v344 = vld [vmem:[#allocation5 + $0x5d8] sm:$0xff]
    %v345 = vld [vmem:[#allocation5 + $0x5e0] sm:$0xff]
    %v346 = vld [vmem:[#allocation5 + $0x5e8] sm:$0xff]
    %v347 = vld [vmem:[#allocation5 + $0x5f0] sm:$0xff]
    %v348 = vld [vmem:[#allocation5 + $0x5f8] sm:$0xff]
    %v349 = vld [vmem:[#allocation5 + $0x600] sm:$0xff]
    %v350 = vld [vmem:[#allocation5 + $0x608] sm:$0xff]
    %v351 = vld [vmem:[#allocation5 + $0x610] sm:$0xff]
    %v352 = vld [vmem:[#allocation5 + $0x618] sm:$0xff]
    %v353 = vld [vmem:[#allocation5 + $0x620] sm:$0xff]
    %v354 = vld [vmem:[#allocation5 + $0x628] sm:$0xff]
    %v355 = vld [vmem:[#allocation5 + $0x630] sm:$0xff]
    %v356 = vld [vmem:[#allocation5 + $0x638] sm:$0xff]
    %v357 = vld [vmem:[#allocation5 + $0x640] sm:$0xff]
    %v358 = vld [vmem:[#allocation5 + $0x648] sm:$0xff]
    %v359 = vld [vmem:[#allocation5 + $0x650] sm:$0xff]
    %v360 = vld [vmem:[#allocation5 + $0x658] sm:$0xff]
    %v361 = vld [vmem:[#allocation5 + $0x660] sm:$0xff]
    %v362 = vld [vmem:[#allocation5 + $0x668] sm:$0xff]
    %v363 = vld [vmem:[#allocation5 + $0x670] sm:$0xff]
    %v364 = vld [vmem:[#allocation5 + $0x678] sm:$0xff]
    %v365 = vld [vmem:[#allocation5 + $0x680] sm:$0xff]
    %v366 = vld [vmem:[#allocation5 + $0x688] sm:$0xff]
    %v367 = vld [vmem:[#allocation5 + $0x690] sm:$0xff]
    %v368 = vld [vmem:[#allocation5 + $0x698] sm:$0xff]
    %v369 = vld [vmem:[#allocation5 + $0x6a0] sm:$0xff]
    %v370 = vld [vmem:[#allocation5 + $0x6a8] sm:$0xff]
    %v371 = vld [vmem:[#allocation5 + $0x6b0] sm:$0xff]
    %v372 = vld [vmem:[#allocation5 + $0x6b8] sm:$0xff]
    %v373 = vld [vmem:[#allocation5 + $0x6c0] sm:$0xff]
    %v374 = vld [vmem:[#allocation5 + $0x6c8] sm:$0xff]
    %v375 = vld [vmem:[#allocation5 + $0x6d0] sm:$0xff]
    %v376 = vld [vmem:[#allocation5 + $0x6d8] sm:$0xff]
    %v377 = vld [vmem:[#allocation5 + $0x6e0] sm:$0xff]
    %v378 = vld [vmem:[#allocation5 + $0x6e8] sm:$0xff]
    %v379 = vld [vmem:[#allocation5 + $0x6f0] sm:$0xff]
    %v380 = vld [vmem:[#allocation5 + $0x6f8] sm:$0xff]
    %v381 = vld [vmem:[#allocation5 + $0x700] sm:$0xff]
    %v382 = vld [vmem:[#allocation5 + $0x708] sm:$0xff]
    %v383 = vld [vmem:[#allocation5 + $0x710] sm:$0xff]
    %v384 = vld [vmem:[#allocation5 + $0x718] sm:$0xff]
    %v385 = vld [vmem:[#allocation5 + $0x720] sm:$0xff]
    %v386 = vld [vmem:[#allocation5 + $0x728] sm:$0xff]
    %v387 = vld [vmem:[#allocation5 + $0x730] sm:$0xff]
    %v388 = vld [vmem:[#allocation5 + $0x738] sm:$0xff]
    %v389 = vld [vmem:[#allocation5 + $0x740] sm:$0xff]
    %v390 = vld [vmem:[#allocation5 + $0x748] sm:$0xff]
    %v391 = vld [vmem:[#allocation5 + $0x750] sm:$0xff]
    %v392 = vld [vmem:[#allocation5 + $0x758] sm:$0xff]
    %v393 = vld [vmem:[#allocation5 + $0x760] sm:$0xff]
    %v394 = vld [vmem:[#allocation5 + $0x768] sm:$0xff]
    %v395 = vld [vmem:[#allocation5 + $0x770] sm:$0xff]
    %v396 = vld [vmem:[#allocation5 + $0x778] sm:$0xff]
    %v397 = vld [vmem:[#allocation5 + $0x780] sm:$0xff]
    %v398 = vld [vmem:[#allocation5 + $0x788] sm:$0xff]
    %v399 = vld [vmem:[#allocation5 + $0x790] sm:$0xff]
    %v400 = vld [vmem:[#allocation5 + $0x798] sm:$0xff]
    %v401 = vld [vmem:[#allocation5 + $0x7a0] sm:$0xff]
    %v402 = vld [vmem:[#allocation5 + $0x7a8] sm:$0xff]
    %v403 = vld [vmem:[#allocation5 + $0x7b0] sm:$0xff]
    %v404 = vld [vmem:[#allocation5 + $0x7b8] sm:$0xff]
    %v405 = vld [vmem:[#allocation5 + $0x7c0] sm:$0xff]
    %v406 = vld [vmem:[#allocation5 + $0x7c8] sm:$0xff]
    %v407 = vld [vmem:[#allocation5 + $0x7d0] sm:$0xff]
    %v408 = vld [vmem:[#allocation5 + $0x7d8] sm:$0xff]
    %v409 = vld [vmem:[#allocation5 + $0x7e0] sm:$0xff]
    %v410 = vld [vmem:[#allocation5 + $0x7e8] sm:$0xff]
    %v411 = vld [vmem:[#allocation5 + $0x7f0] sm:$0xff]
    %v412 = vld [vmem:[#allocation5 + $0x7f8] sm:$0xff]
    %v413 = vld [vmem:[#allocation5 + $0x800] sm:$0xff]
    %v414 = vld [vmem:[#allocation5 + $0x808] sm:$0xff]
    %v415 = vld [vmem:[#allocation5 + $0x810] sm:$0xff]
    %v416 = vld [vmem:[#allocation5 + $0x818] sm:$0xff]
    %v417 = vld [vmem:[#allocation5 + $0x820] sm:$0xff]
    %v418 = vld [vmem:[#allocation5 + $0x828] sm:$0xff]
    %v419 = vld [vmem:[#allocation5 + $0x830] sm:$0xff]
    %v420 = vld [vmem:[#allocation5 + $0x838] sm:$0xff]
    %v421 = vld [vmem:[#allocation5 + $0x840] sm:$0xff]
    %v422 = vld [vmem:[#allocation5 + $0x848] sm:$0xff]
    %v423 = vld [vmem:[#allocation5 + $0x850] sm:$0xff]
    %v424 = vld [vmem:[#allocation5 + $0x858] sm:$0xff]
    %v425 = vld [vmem:[#allocation5 + $0x860] sm:$0xff]
    %v426 = vld [vmem:[#allocation5 + $0x868] sm:$0xff]
    %v427 = vld [vmem:[#allocation5 + $0x870] sm:$0xff]
    %v428 = vld [vmem:[#allocation5 + $0x878] sm:$0xff]
    %v429 = vld [vmem:[#allocation5 + $0x880] sm:$0xff]
    %v430 = vld [vmem:[#allocation5 + $0x888] sm:$0xff]
    %v431 = vld [vmem:[#allocation5 + $0x890] sm:$0xff]
    %v432 = vld [vmem:[#allocation5 + $0x898] sm:$0xff]
    %v433 = vld [vmem:[#allocation5 + $0x8a0] sm:$0xff]
    %v434 = vld [vmem:[#allocation5 + $0x8a8] sm:$0xff]
    %v435 = vld [vmem:[#allocation5 + $0x8b0] sm:$0xff]
    %v436 = vld [vmem:[#allocation5 + $0x8b8] sm:$0xff]
    %v437 = vld [vmem:[#allocation5 + $0x8c0] sm:$0xff]
    %v438 = vld [vmem:[#allocation5 + $0x8c8] sm:$0xff]
    %v439 = vld [vmem:[#allocation5 + $0x8d0] sm:$0xff]
    %v440 = vld [vmem:[#allocation5 + $0x8d8] sm:$0xff]
    %v441 = vld [vmem:[#allocation5 + $0x8e0] sm:$0xff]
    %v442 = vld [vmem:[#allocation5 + $0x8e8] sm:$0xff]
    %v443 = vld [vmem:[#allocation5 + $0x8f0] sm:$0xff]
    %v444 = vld [vmem:[#allocation5 + $0x8f8] sm:$0xff]
    %v445 = vld [vmem:[#allocation5 + $0x900] sm:$0xff]
    %v446 = vld [vmem:[#allocation5 + $0x908] sm:$0xff]
    %v447 = vld [vmem:[#allocation5 + $0x910] sm:$0xff]
    %v448 = vld [vmem:[#allocation5 + $0x918] sm:$0xff]
    %v449 = vld [vmem:[#allocation5 + $0x920] sm:$0xff]
    %v450 = vld [vmem:[#allocation5 + $0x928] sm:$0xff]
    %v451 = vld [vmem:[#allocation5 + $0x930] sm:$0xff]
    %v452 = vld [vmem:[#allocation5 + $0x938] sm:$0xff]
    %v453 = vld [vmem:[#allocation5 + $0x940] sm:$0xff]
    %v454 = vld [vmem:[#allocation5 + $0x948] sm:$0xff]
    %v455 = vld [vmem:[#allocation5 + $0x950] sm:$0xff]
    %v456 = vld [vmem:[#allocation5 + $0x958] sm:$0xff]
    %v457 = vld [vmem:[#allocation5 + $0x960] sm:$0xff]
    %v458 = vld [vmem:[#allocation5 + $0x968] sm:$0xff]
    %v459 = vld [vmem:[#allocation5 + $0x970] sm:$0xff]
    %v460 = vld [vmem:[#allocation5 + $0x978] sm:$0xff]
    %v461 = vld [vmem:[#allocation5 + $0x980] sm:$0xff]
    %v462 = vld [vmem:[#allocation5 + $0x988] sm:$0xff]
    %v463 = vld [vmem:[#allocation5 + $0x990] sm:$0xff]
    %v464 = vld [vmem:[#allocation5 + $0x998] sm:$0xff]
    %v465 = vld [vmem:[#allocation5 + $0x9a0] sm:$0xff]
    %v466 = vld [vmem:[#allocation5 + $0x9a8] sm:$0xff]
    %v467 = vld [vmem:[#allocation5 + $0x9b0] sm:$0xff]
    %v468 = vld [vmem:[#allocation5 + $0x9b8] sm:$0xff]
    %v469 = vld [vmem:[#allocation5 + $0x9c0] sm:$0xff]
    %v470 = vld [vmem:[#allocation5 + $0x9c8] sm:$0xff]
    %v471 = vld [vmem:[#allocation5 + $0x9d0] sm:$0xff]
    %v472 = vld [vmem:[#allocation5 + $0x9d8] sm:$0xff]
    %v473 = vld [vmem:[#allocation5 + $0x9e0] sm:$0xff]
    %v474 = vld [vmem:[#allocation5 + $0x9e8] sm:$0xff]
    %v475 = vld [vmem:[#allocation5 + $0x9f0] sm:$0xff]
    %v476 = vld [vmem:[#allocation5 + $0x9f8] sm:$0xff]
    %v477 = vld [vmem:[#allocation5 + $0xa00] sm:$0xff]
    %v478 = vld [vmem:[#allocation5 + $0xa08] sm:$0xff]
    %v479 = vld [vmem:[#allocation5 + $0xa10] sm:$0xff]
    %v480 = vld [vmem:[#allocation5 + $0xa18] sm:$0xff]
    %v481 = vld [vmem:[#allocation5 + $0xa20] sm:$0xff]
    %v482 = vld [vmem:[#allocation5 + $0xa28] sm:$0xff]
    %v483 = vld [vmem:[#allocation5 + $0xa30] sm:$0xff]
    %v484 = vld [vmem:[#allocation5 + $0xa38] sm:$0xff]
    %v485 = vld [vmem:[#allocation5 + $0xa40] sm:$0xff]
    %v486 = vld [vmem:[#allocation5 + $0xa48] sm:$0xff]
    %v487 = vld [vmem:[#allocation5 + $0xa50] sm:$0xff]
    %v488 = vld [vmem:[#allocation5 + $0xa58] sm:$0xff]
    %v489 = vld [vmem:[#allocation5 + $0xa60] sm:$0xff]
    %v490 = vld [vmem:[#allocation5 + $0xa68] sm:$0xff]
    %v491 = vld [vmem:[#allocation5 + $0xa70] sm:$0xff]
    %v492 = vld [vmem:[#allocation5 + $0xa78] sm:$0xff]
    %v493 = vld [vmem:[#allocation5 + $0xa80] sm:$0xff]
    %v494 = vld [vmem:[#allocation5 + $0xa88] sm:$0xff]
    %v495 = vld [vmem:[#allocation5 + $0xa90] sm:$0xff]
    %v496 = vld [vmem:[#allocation5 + $0xa98] sm:$0xff]
    %v497 = vld [vmem:[#allocation5 + $0xaa0] sm:$0xff]
    %v498 = vld [vmem:[#allocation5 + $0xaa8] sm:$0xff]
    %v499 = vld [vmem:[#allocation5 + $0xab0] sm:$0xff]
    %v500 = vld [vmem:[#allocation5 + $0xab8] sm:$0xff]
    %v501 = vld [vmem:[#allocation5 + $0xac0] sm:$0xff]
    %v502 = vld [vmem:[#allocation5 + $0xac8] sm:$0xff]
    %v503 = vld [vmem:[#allocation5 + $0xad0] sm:$0xff]
    %v504 = vld [vmem:[#allocation5 + $0xad8] sm:$0xff]
    %v505 = vld [vmem:[#allocation5 + $0xae0] sm:$0xff]
    %v506 = vld [vmem:[#allocation5 + $0xae8] sm:$0xff]
    %v507 = vld [vmem:[#allocation5 + $0xaf0] sm:$0xff]
    %v508 = vld [vmem:[#allocation5 + $0xaf8] sm:$0xff]
    %v509 = vld [vmem:[#allocation5 + $0xb00] sm:$0xff]
    %v510 = vld [vmem:[#allocation5 + $0xb08] sm:$0xff]
    %v511 = vld [vmem:[#allocation5 + $0xb10] sm:$0xff]
    %v512 = vld [vmem:[#allocation5 + $0xb18] sm:$0xff]
    %v513 = vld [vmem:[#allocation5 + $0xb20] sm:$0xff]
    %v514 = vld [vmem:[#allocation5 + $0xb28] sm:$0xff]
    %v515 = vld [vmem:[#allocation5 + $0xb30] sm:$0xff]
    %v516 = vld [vmem:[#allocation5 + $0xb38] sm:$0xff]
    %v517 = vld [vmem:[#allocation5 + $0xb40] sm:$0xff]
    %v518 = vld [vmem:[#allocation5 + $0xb48] sm:$0xff]
    %v519 = vld [vmem:[#allocation5 + $0xb50] sm:$0xff]
    %v520 = vld [vmem:[#allocation5 + $0xb58] sm:$0xff]
    %v521 = vld [vmem:[#allocation5 + $0xb60] sm:$0xff]
    %v522 = vld [vmem:[#allocation5 + $0xb68] sm:$0xff]
    %v523 = vld [vmem:[#allocation5 + $0xb70] sm:$0xff]
    %v524 = vld [vmem:[#allocation5 + $0xb78] sm:$0xff]
    %v525 = vld [vmem:[#allocation5 + $0xb80] sm:$0xff]
    %v526 = vld [vmem:[#allocation5 + $0xb88] sm:$0xff]
    %v527 = vld [vmem:[#allocation5 + $0xb90] sm:$0xff]
    %v528 = vld [vmem:[#allocation5 + $0xb98] sm:$0xff]
    %v529 = vld [vmem:[#allocation5 + $0xba0] sm:$0xff]
    %v530 = vld [vmem:[#allocation5 + $0xba8] sm:$0xff]
    %v531 = vld [vmem:[#allocation5 + $0xbb0] sm:$0xff]
    %v532 = vld [vmem:[#allocation5 + $0xbb8] sm:$0xff]
    %v533 = vld [vmem:[#allocation5 + $0xbc0] sm:$0xff]
    %v534 = vld [vmem:[#allocation5 + $0xbc8] sm:$0xff]
    %v535 = vld [vmem:[#allocation5 + $0xbd0] sm:$0xff]
    %v536 = vld [vmem:[#allocation5 + $0xbd8] sm:$0xff]
    %v537 = vld [vmem:[#allocation5 + $0xbe0] sm:$0xff]
    %v538 = vld [vmem:[#allocation5 + $0xbe8] sm:$0xff]
    %v539 = vld [vmem:[#allocation5 + $0xbf0] sm:$0xff]
    %v540 = vld [vmem:[#allocation5 + $0xbf8] sm:$0xff]
    %v541 = vld [vmem:[#allocation5 + $0xc00] sm:$0xff]
    %v542 = vld [vmem:[#allocation5 + $0xc08] sm:$0xff]
    %v543 = vld [vmem:[#allocation5 + $0xc10] sm:$0xff]
    %v544 = vld [vmem:[#allocation5 + $0xc18] sm:$0xff]
    %v545 = vld [vmem:[#allocation5 + $0xc20] sm:$0xff]
    %v546 = vld [vmem:[#allocation5 + $0xc28] sm:$0xff]
    %v547 = vld [vmem:[#allocation5 + $0xc30] sm:$0xff]
    %v548 = vld [vmem:[#allocation5 + $0xc38] sm:$0xff]
    %v549 = vld [vmem:[#allocation5 + $0xc40] sm:$0xff]
    %v550 = vld [vmem:[#allocation5 + $0xc48] sm:$0xff]
    %v551 = vld [vmem:[#allocation5 + $0xc50] sm:$0xff]
    %v552 = vld [vmem:[#allocation5 + $0xc58] sm:$0xff]
    %v553 = vld [vmem:[#allocation5 + $0xc60] sm:$0xff]
    %v554 = vld [vmem:[#allocation5 + $0xc68] sm:$0xff]
    %v555 = vld [vmem:[#allocation5 + $0xc70] sm:$0xff]
    %v556 = vld [vmem:[#allocation5 + $0xc78] sm:$0xff]
    %v557 = vld [vmem:[#allocation5 + $0xc80] sm:$0xff]
    %v558 = vld [vmem:[#allocation5 + $0xc88] sm:$0xff]
    %v559 = vld [vmem:[#allocation5 + $0xc90] sm:$0xff]
    %v560 = vld [vmem:[#allocation5 + $0xc98] sm:$0xff]
    %v561 = vld [vmem:[#allocation5 + $0xca0] sm:$0xff]
    %v562 = vld [vmem:[#allocation5 + $0xca8] sm:$0xff]
    %v563 = vld [vmem:[#allocation5 + $0xcb0] sm:$0xff]
    %v564 = vld [vmem:[#allocation5 + $0xcb8] sm:$0xff]
    %v565 = vld [vmem:[#allocation5 + $0xcc0] sm:$0xff]
    %v566 = vld [vmem:[#allocation5 + $0xcc8] sm:$0xff]
    %v567 = vld [vmem:[#allocation5 + $0xcd0] sm:$0xff]
    %v568 = vld [vmem:[#allocation5 + $0xcd8] sm:$0xff]
    %v569 = vld [vmem:[#allocation5 + $0xce0] sm:$0xff]
    %v570 = vld [vmem:[#allocation5 + $0xce8] sm:$0xff]
    %v571 = vld [vmem:[#allocation5 + $0xcf0] sm:$0xff]
    %v572 = vld [vmem:[#allocation5 + $0xcf8] sm:$0xff]
    %v573 = vld [vmem:[#allocation5 + $0xd00] sm:$0xff]
    %v574 = vld [vmem:[#allocation5 + $0xd08] sm:$0xff]
    %v575 = vld [vmem:[#allocation5 + $0xd10] sm:$0xff]
    %v576 = vld [vmem:[#allocation5 + $0xd18] sm:$0xff]
    %v577 = vld [vmem:[#allocation5 + $0xd20] sm:$0xff]
    %v578 = vld [vmem:[#allocation5 + $0xd28] sm:$0xff]
    %v579 = vld [vmem:[#allocation5 + $0xd30] sm:$0xff]
    %v580 = vld [vmem:[#allocation5 + $0xd38] sm:$0xff]
    %v581 = vld [vmem:[#allocation5 + $0xd40] sm:$0xff]
    %v582 = vld [vmem:[#allocation5 + $0xd48] sm:$0xff]
    %v583 = vld [vmem:[#allocation5 + $0xd50] sm:$0xff]
    %v584 = vld [vmem:[#allocation5 + $0xd58] sm:$0xff]
    %v585 = vld [vmem:[#allocation5 + $0xd60] sm:$0xff]
    %v586 = vld [vmem:[#allocation5 + $0xd68] sm:$0xff]
    %v587 = vld [vmem:[#allocation5 + $0xd70] sm:$0xff]
    %v588 = vld [vmem:[#allocation5 + $0xd78] sm:$0xff]
    %v589 = vld [vmem:[#allocation5 + $0xd80] sm:$0xff]
    %v590 = vld [vmem:[#allocation5 + $0xd88] sm:$0xff]
    %v591 = vld [vmem:[#allocation5 + $0xd90] sm:$0xff]
    %v592 = vld [vmem:[#allocation5 + $0xd98] sm:$0xff]
    %v593 = vld [vmem:[#allocation5 + $0xda0] sm:$0xff]
    %v594 = vld [vmem:[#allocation5 + $0xda8] sm:$0xff]
    %v595 = vld [vmem:[#allocation5 + $0xdb0] sm:$0xff]
    %v596 = vld [vmem:[#allocation5 + $0xdb8] sm:$0xff]
    %v597 = vld [vmem:[#allocation5 + $0xdc0] sm:$0xff]
    %v598 = vld [vmem:[#allocation5 + $0xdc8] sm:$0xff]
    %v599 = vld [vmem:[#allocation5 + $0xdd0] sm:$0xff]
    %v600 = vld [vmem:[#allocation5 + $0xdd8] sm:$0xff]
    %v601 = vld [vmem:[#allocation5 + $0xde0] sm:$0xff]
    %v602 = vld [vmem:[#allocation5 + $0xde8] sm:$0xff]
    %v603 = vld [vmem:[#allocation5 + $0xdf0] sm:$0xff]
    %v604 = vld [vmem:[#allocation5 + $0xdf8] sm:$0xff]
    %v605 = vld [vmem:[#allocation7] sm:$0xff]
    %v607 = vlaneseq
    %v608 = vshrl.u32 %v607, 7
    %v609 = vsub.s32 0, %v608
    %v610 = vrot.slane %v605, %v609
    %v611 = vlaneseq
    %v612 = vshrl.u32 %v611, 7
    %v613 = vsub.s32 1, %v612
    %v614 = vrot.slane %v605, %v613
    %v615 = vlaneseq
    %v616 = vshrl.u32 %v615, 7
    %v617 = vsub.s32 2, %v616
    %v618 = vrot.slane %v605, %v617
    %v619 = vlaneseq
    %v620 = vshrl.u32 %v619, 7
    %v621 = vsub.s32 3, %v620
    %v622 = vrot.slane %v605, %v621
    %v623 = vlaneseq
    %v624 = vshrl.u32 %v623, 7
    %v625 = vsub.s32 4, %v624
    %v626 = vrot.slane %v605, %v625
    %v627 = vlaneseq
    %v628 = vshrl.u32 %v627, 7
    %v629 = vsub.s32 5, %v628
    %v630 = vrot.slane %v605, %v629
    %v631 = vlaneseq
    %v632 = vshrl.u32 %v631, 7
    %v633 = vsub.s32 6, %v632
    %v634 = vrot.slane %v605, %v633
    %v635 = vlaneseq
    %v636 = vshrl.u32 %v635, 7
    %v637 = vsub.s32 7, %v636
    %v638 = vrot.slane %v605, %v637
    %v1095 = vunpack.c.l.b16 %v157
    %v1096 = vunpack.c.h.b16 %v157
    %v1097 = vunpack.c.l.b16 %v158
    %v1098 = vunpack.c.h.b16 %v158
    %v1099 = vunpack.c.l.b16 %v159
    %v1100 = vunpack.c.h.b16 %v159
    %v1101 = vunpack.c.l.b16 %v160
    %v1102 = vunpack.c.h.b16 %v160
    %v1103 = vunpack.c.l.b16 %v161
    %v1104 = vunpack.c.h.b16 %v161
    %v1105 = vunpack.c.l.b16 %v162
    %v1106 = vunpack.c.h.b16 %v162
    %v1107 = vunpack.c.l.b16 %v163
    %v1108 = vunpack.c.h.b16 %v163
    %v1109 = vunpack.c.l.b16 %v164
    %v1110 = vunpack.c.h.b16 %v164
    %v1111 = vunpack.c.l.b16 %v165
    %v1112 = vunpack.c.h.b16 %v165
    %v1113 = vunpack.c.l.b16 %v166
    %v1114 = vunpack.c.h.b16 %v166
    %v1115 = vunpack.c.l.b16 %v167
    %v1116 = vunpack.c.h.b16 %v167
    %v1117 = vunpack.c.l.b16 %v168
    %v1118 = vunpack.c.h.b16 %v168
    %v1119 = vunpack.c.l.b16 %v169
    %v1120 = vunpack.c.h.b16 %v169
    %v1121 = vunpack.c.l.b16 %v170
    %v1122 = vunpack.c.h.b16 %v170
    %v1123 = vunpack.c.l.b16 %v171
    %v1124 = vunpack.c.h.b16 %v171
    %v1125 = vunpack.c.l.b16 %v172
    %v1126 = vunpack.c.h.b16 %v172
    %v1127 = vunpack.c.l.b16 %v173
    %v1128 = vunpack.c.h.b16 %v173
    %v1129 = vunpack.c.l.b16 %v174
    %v1130 = vunpack.c.h.b16 %v174
    %v1131 = vunpack.c.l.b16 %v175
    %v1132 = vunpack.c.h.b16 %v175
    %v1133 = vunpack.c.l.b16 %v176
    %v1134 = vunpack.c.h.b16 %v176
    %v1135 = vunpack.c.l.b16 %v177
    %v1136 = vunpack.c.h.b16 %v177
    %v1137 = vunpack.c.l.b16 %v178
    %v1138 = vunpack.c.h.b16 %v178
    %v1139 = vunpack.c.l.b16 %v179
    %v1140 = vunpack.c.h.b16 %v179
    %v1141 = vunpack.c.l.b16 %v180
    %v1142 = vunpack.c.h.b16 %v180
    %v1143 = vunpack.c.l.b16 %v181
    %v1144 = vunpack.c.h.b16 %v181
    %v1145 = vunpack.c.l.b16 %v182
    %v1146 = vunpack.c.h.b16 %v182
    %v1147 = vunpack.c.l.b16 %v183
    %v1148 = vunpack.c.h.b16 %v183
    %v1149 = vunpack.c.l.b16 %v184
    %v1150 = vunpack.c.h.b16 %v184
    %v1151 = vunpack.c.l.b16 %v185
    %v1152 = vunpack.c.h.b16 %v185
    %v1153 = vunpack.c.l.b16 %v186
    %v1154 = vunpack.c.h.b16 %v186
    %v1155 = vunpack.c.l.b16 %v187
    %v1156 = vunpack.c.h.b16 %v187
    %v1157 = vunpack.c.l.b16 %v188
    %v1158 = vunpack.c.h.b16 %v188
    %v1159 = vunpack.c.l.b16 %v189
    %v1160 = vunpack.c.h.b16 %v189
    %v1161 = vunpack.c.l.b16 %v190
    %v1162 = vunpack.c.h.b16 %v190
    %v1163 = vunpack.c.l.b16 %v191
    %v1164 = vunpack.c.h.b16 %v191
    %v1165 = vunpack.c.l.b16 %v192
    %v1166 = vunpack.c.h.b16 %v192
    %v1167 = vunpack.c.l.b16 %v193
    %v1168 = vunpack.c.h.b16 %v193
    %v1169 = vunpack.c.l.b16 %v194
    %v1170 = vunpack.c.h.b16 %v194
    %v1171 = vunpack.c.l.b16 %v195
    %v1172 = vunpack.c.h.b16 %v195
    %v1173 = vunpack.c.l.b16 %v196
    %v1174 = vunpack.c.h.b16 %v196
    %v1175 = vunpack.c.l.b16 %v197
    %v1176 = vunpack.c.h.b16 %v197
    %v1177 = vunpack.c.l.b16 %v198
    %v1178 = vunpack.c.h.b16 %v198
    %v1179 = vunpack.c.l.b16 %v199
    %v1180 = vunpack.c.h.b16 %v199
    %v1181 = vunpack.c.l.b16 %v200
    %v1182 = vunpack.c.h.b16 %v200
    %v1183 = vunpack.c.l.b16 %v201
    %v1184 = vunpack.c.h.b16 %v201
    %v1185 = vunpack.c.l.b16 %v202
    %v1186 = vunpack.c.h.b16 %v202
    %v1187 = vunpack.c.l.b16 %v203
    %v1188 = vunpack.c.h.b16 %v203
    %v1189 = vunpack.c.l.b16 %v204
    %v1190 = vunpack.c.h.b16 %v204
    %v1191 = vunpack.c.l.b16 %v205
    %v1192 = vunpack.c.h.b16 %v205
    %v1193 = vunpack.c.l.b16 %v206
    %v1194 = vunpack.c.h.b16 %v206
    %v1195 = vunpack.c.l.b16 %v207
    %v1196 = vunpack.c.h.b16 %v207
    %v1197 = vunpack.c.l.b16 %v208
    %v1198 = vunpack.c.h.b16 %v208
    %v1199 = vunpack.c.l.b16 %v209
    %v1200 = vunpack.c.h.b16 %v209
    %v1201 = vunpack.c.l.b16 %v210
    %v1202 = vunpack.c.h.b16 %v210
    %v1203 = vunpack.c.l.b16 %v211
    %v1204 = vunpack.c.h.b16 %v211
    %v1205 = vunpack.c.l.b16 %v212
    %v1206 = vunpack.c.h.b16 %v212
    %v1207 = vunpack.c.l.b16 %v213
    %v1208 = vunpack.c.h.b16 %v213
    %v1209 = vunpack.c.l.b16 %v214
    %v1210 = vunpack.c.h.b16 %v214
    %v1211 = vunpack.c.l.b16 %v215
    %v1212 = vunpack.c.h.b16 %v215
    %v1213 = vunpack.c.l.b16 %v216
    %v1214 = vunpack.c.h.b16 %v216
    %v1215 = vunpack.c.l.b16 %v217
    %v1216 = vunpack.c.h.b16 %v217
    %v1217 = vunpack.c.l.b16 %v218
    %v1218 = vunpack.c.h.b16 %v218
    %v1219 = vunpack.c.l.b16 %v219
    %v1220 = vunpack.c.h.b16 %v219
    %v1221 = vunpack.c.l.b16 %v220
    %v1222 = vunpack.c.h.b16 %v220
    %v1223 = vunpack.c.l.b16 %v221
    %v1224 = vunpack.c.h.b16 %v221
    %v1225 = vunpack.c.l.b16 %v222
    %v1226 = vunpack.c.h.b16 %v222
    %v1227 = vunpack.c.l.b16 %v223
    %v1228 = vunpack.c.h.b16 %v223
    %v1229 = vunpack.c.l.b16 %v224
    %v1230 = vunpack.c.h.b16 %v224
    %v1231 = vunpack.c.l.b16 %v225
    %v1232 = vunpack.c.h.b16 %v225
    %v1233 = vunpack.c.l.b16 %v226
    %v1234 = vunpack.c.h.b16 %v226
    %v1235 = vunpack.c.l.b16 %v227
    %v1236 = vunpack.c.h.b16 %v227
    %v1237 = vunpack.c.l.b16 %v228
    %v1238 = vunpack.c.h.b16 %v228
    %v1239 = vunpack.c.l.b16 %v229
    %v1240 = vunpack.c.h.b16 %v229
    %v1241 = vunpack.c.l.b16 %v230
    %v1242 = vunpack.c.h.b16 %v230
    %v1243 = vunpack.c.l.b16 %v231
    %v1244 = vunpack.c.h.b16 %v231
    %v1245 = vunpack.c.l.b16 %v232
    %v1246 = vunpack.c.h.b16 %v232
    %v1247 = vunpack.c.l.b16 %v233
    %v1248 = vunpack.c.h.b16 %v233
    %v1249 = vunpack.c.l.b16 %v234
    %v1250 = vunpack.c.h.b16 %v234
    %v1251 = vunpack.c.l.b16 %v235
    %v1252 = vunpack.c.h.b16 %v235
    %v1253 = vunpack.c.l.b16 %v236
    %v1254 = vunpack.c.h.b16 %v236
    %v1255 = vunpack.c.l.b16 %v237
    %v1256 = vunpack.c.h.b16 %v237
    %v1257 = vunpack.c.l.b16 %v238
    %v1258 = vunpack.c.h.b16 %v238
    %v1259 = vunpack.c.l.b16 %v239
    %v1260 = vunpack.c.h.b16 %v239
    %v1261 = vunpack.c.l.b16 %v240
    %v1262 = vunpack.c.h.b16 %v240
    %v1263 = vunpack.c.l.b16 %v241
    %v1264 = vunpack.c.h.b16 %v241
    %v1265 = vunpack.c.l.b16 %v242
    %v1266 = vunpack.c.h.b16 %v242
    %v1267 = vunpack.c.l.b16 %v243
    %v1268 = vunpack.c.h.b16 %v243
    %v1269 = vunpack.c.l.b16 %v244
    %v1270 = vunpack.c.h.b16 %v244
    %v1271 = vunpack.c.l.b16 %v245
    %v1272 = vunpack.c.h.b16 %v245
    %v1273 = vunpack.c.l.b16 %v246
    %v1274 = vunpack.c.h.b16 %v246
    %v1275 = vunpack.c.l.b16 %v247
    %v1276 = vunpack.c.h.b16 %v247
    %v1277 = vunpack.c.l.b16 %v248
    %v1278 = vunpack.c.h.b16 %v248
    %v1279 = vunpack.c.l.b16 %v249
    %v1280 = vunpack.c.h.b16 %v249
    %v1281 = vunpack.c.l.b16 %v250
    %v1282 = vunpack.c.h.b16 %v250
    %v1283 = vunpack.c.l.b16 %v251
    %v1284 = vunpack.c.h.b16 %v251
    %v1285 = vunpack.c.l.b16 %v252
    %v1286 = vunpack.c.h.b16 %v252
    %v1287 = vunpack.c.l.b16 %v253
    %v1288 = vunpack.c.h.b16 %v253
    %v1289 = vunpack.c.l.b16 %v254
    %v1290 = vunpack.c.h.b16 %v254
    %v1291 = vunpack.c.l.b16 %v255
    %v1292 = vunpack.c.h.b16 %v255
    %v1293 = vunpack.c.l.b16 %v256
    %v1294 = vunpack.c.h.b16 %v256
    %v1295 = vunpack.c.l.b16 %v257
    %v1296 = vunpack.c.h.b16 %v257
    %v1297 = vunpack.c.l.b16 %v258
    %v1298 = vunpack.c.h.b16 %v258
    %v1299 = vunpack.c.l.b16 %v259
    %v1300 = vunpack.c.h.b16 %v259
    %v1301 = vunpack.c.l.b16 %v260
    %v1302 = vunpack.c.h.b16 %v260
    %v1303 = vunpack.c.l.b16 %v261
    %v1304 = vunpack.c.h.b16 %v261
    %v1305 = vunpack.c.l.b16 %v262
    %v1306 = vunpack.c.h.b16 %v262
    %v1307 = vunpack.c.l.b16 %v263
    %v1308 = vunpack.c.h.b16 %v263
    %v1309 = vunpack.c.l.b16 %v264
    %v1310 = vunpack.c.h.b16 %v264
    %v1311 = vunpack.c.l.b16 %v265
    %v1312 = vunpack.c.h.b16 %v265
    %v1313 = vunpack.c.l.b16 %v266
    %v1314 = vunpack.c.h.b16 %v266
    %v1315 = vunpack.c.l.b16 %v267
    %v1316 = vunpack.c.h.b16 %v267
    %v1317 = vunpack.c.l.b16 %v268
    %v1318 = vunpack.c.h.b16 %v268
    %v1319 = vunpack.c.l.b16 %v269
    %v1320 = vunpack.c.h.b16 %v269
    %v1321 = vunpack.c.l.b16 %v270
    %v1322 = vunpack.c.h.b16 %v270
    %v1323 = vunpack.c.l.b16 %v271
    %v1324 = vunpack.c.h.b16 %v271
    %v1325 = vunpack.c.l.b16 %v272
    %v1326 = vunpack.c.h.b16 %v272
    %v1327 = vunpack.c.l.b16 %v273
    %v1328 = vunpack.c.h.b16 %v273
    %v1329 = vunpack.c.l.b16 %v274
    %v1330 = vunpack.c.h.b16 %v274
    %v1331 = vunpack.c.l.b16 %v275
    %v1332 = vunpack.c.h.b16 %v275
    %v1333 = vunpack.c.l.b16 %v276
    %v1334 = vunpack.c.h.b16 %v276
    %v1335 = vunpack.c.l.b16 %v277
    %v1336 = vunpack.c.h.b16 %v277
    %v1337 = vunpack.c.l.b16 %v278
    %v1338 = vunpack.c.h.b16 %v278
    %v1339 = vunpack.c.l.b16 %v279
    %v1340 = vunpack.c.h.b16 %v279
    %v1341 = vunpack.c.l.b16 %v280
    %v1342 = vunpack.c.h.b16 %v280
    %v1343 = vunpack.c.l.b16 %v281
    %v1344 = vunpack.c.h.b16 %v281
    %v1345 = vunpack.c.l.b16 %v282
    %v1346 = vunpack.c.h.b16 %v282
    %v1347 = vunpack.c.l.b16 %v283
    %v1348 = vunpack.c.h.b16 %v283
    %v1349 = vunpack.c.l.b16 %v284
    %v1350 = vunpack.c.h.b16 %v284
    %v1351 = vunpack.c.l.b16 %v285
    %v1352 = vunpack.c.h.b16 %v285
    %v1353 = vunpack.c.l.b16 %v286
    %v1354 = vunpack.c.h.b16 %v286
    %v1355 = vunpack.c.l.b16 %v287
    %v1356 = vunpack.c.h.b16 %v287
    %v1357 = vunpack.c.l.b16 %v288
    %v1358 = vunpack.c.h.b16 %v288
    %v1359 = vunpack.c.l.b16 %v289
    %v1360 = vunpack.c.h.b16 %v289
    %v1361 = vunpack.c.l.b16 %v290
    %v1362 = vunpack.c.h.b16 %v290
    %v1363 = vunpack.c.l.b16 %v291
    %v1364 = vunpack.c.h.b16 %v291
    %v1365 = vunpack.c.l.b16 %v292
    %v1366 = vunpack.c.h.b16 %v292
    %v1367 = vunpack.c.l.b16 %v293
    %v1368 = vunpack.c.h.b16 %v293
    %v1369 = vunpack.c.l.b16 %v294
    %v1370 = vunpack.c.h.b16 %v294
    %v1371 = vunpack.c.l.b16 %v295
    %v1372 = vunpack.c.h.b16 %v295
    %v1373 = vunpack.c.l.b16 %v296
    %v1374 = vunpack.c.h.b16 %v296
    %v1375 = vunpack.c.l.b16 %v297
    %v1376 = vunpack.c.h.b16 %v297
    %v1377 = vunpack.c.l.b16 %v298
    %v1378 = vunpack.c.h.b16 %v298
    %v1379 = vunpack.c.l.b16 %v299
    %v1380 = vunpack.c.h.b16 %v299
    %v1381 = vunpack.c.l.b16 %v300
    %v1382 = vunpack.c.h.b16 %v300
    %v1383 = vunpack.c.l.b16 %v301
    %v1384 = vunpack.c.h.b16 %v301
    %v1385 = vunpack.c.l.b16 %v302
    %v1386 = vunpack.c.h.b16 %v302
    %v1387 = vunpack.c.l.b16 %v303
    %v1388 = vunpack.c.h.b16 %v303
    %v1389 = vunpack.c.l.b16 %v304
    %v1390 = vunpack.c.h.b16 %v304
    %v1391 = vunpack.c.l.b16 %v305
    %v1392 = vunpack.c.h.b16 %v305
    %v1393 = vunpack.c.l.b16 %v306
    %v1394 = vunpack.c.h.b16 %v306
    %v1395 = vunpack.c.l.b16 %v307
    %v1396 = vunpack.c.h.b16 %v307
    %v1397 = vunpack.c.l.b16 %v308
    %v1398 = vunpack.c.h.b16 %v308
    %v1399 = vunpack.c.l.b16 %v309
    %v1400 = vunpack.c.h.b16 %v309
    %v1401 = vunpack.c.l.b16 %v310
    %v1402 = vunpack.c.h.b16 %v310
    %v1403 = vunpack.c.l.b16 %v311
    %v1404 = vunpack.c.h.b16 %v311
    %v1405 = vunpack.c.l.b16 %v312
    %v1406 = vunpack.c.h.b16 %v312
    %v1407 = vunpack.c.l.b16 %v313
    %v1408 = vunpack.c.h.b16 %v313
    %v1409 = vunpack.c.l.b16 %v314
    %v1410 = vunpack.c.h.b16 %v314
    %v1411 = vunpack.c.l.b16 %v315
    %v1412 = vunpack.c.h.b16 %v315
    %v1413 = vunpack.c.l.b16 %v316
    %v1414 = vunpack.c.h.b16 %v316
    %v1415 = vunpack.c.l.b16 %v317
    %v1416 = vunpack.c.h.b16 %v317
    %v1417 = vunpack.c.l.b16 %v318
    %v1418 = vunpack.c.h.b16 %v318
    %v1419 = vunpack.c.l.b16 %v319
    %v1420 = vunpack.c.h.b16 %v319
    %v1421 = vunpack.c.l.b16 %v320
    %v1422 = vunpack.c.h.b16 %v320
    %v1423 = vunpack.c.l.b16 %v321
    %v1424 = vunpack.c.h.b16 %v321
    %v1425 = vunpack.c.l.b16 %v322
    %v1426 = vunpack.c.h.b16 %v322
    %v1427 = vunpack.c.l.b16 %v323
    %v1428 = vunpack.c.h.b16 %v323
    %v1429 = vunpack.c.l.b16 %v324
    %v1430 = vunpack.c.h.b16 %v324
    %v1431 = vunpack.c.l.b16 %v325
    %v1432 = vunpack.c.h.b16 %v325
    %v1433 = vunpack.c.l.b16 %v326
    %v1434 = vunpack.c.h.b16 %v326
    %v1435 = vunpack.c.l.b16 %v327
    %v1436 = vunpack.c.h.b16 %v327
    %v1437 = vunpack.c.l.b16 %v328
    %v1438 = vunpack.c.h.b16 %v328
    %v1439 = vunpack.c.l.b16 %v329
    %v1440 = vunpack.c.h.b16 %v329
    %v1441 = vunpack.c.l.b16 %v330
    %v1442 = vunpack.c.h.b16 %v330
    %v1443 = vunpack.c.l.b16 %v331
    %v1444 = vunpack.c.h.b16 %v331
    %v1445 = vunpack.c.l.b16 %v332
    %v1446 = vunpack.c.h.b16 %v332
    %v1447 = vunpack.c.l.b16 %v333
    %v1448 = vunpack.c.h.b16 %v333
    %v1449 = vunpack.c.l.b16 %v334
    %v1450 = vunpack.c.h.b16 %v334
    %v1451 = vunpack.c.l.b16 %v335
    %v1452 = vunpack.c.h.b16 %v335
    %v1453 = vunpack.c.l.b16 %v336
    %v1454 = vunpack.c.h.b16 %v336
    %v1455 = vunpack.c.l.b16 %v337
    %v1456 = vunpack.c.h.b16 %v337
    %v1457 = vunpack.c.l.b16 %v338
    %v1458 = vunpack.c.h.b16 %v338
    %v1459 = vunpack.c.l.b16 %v339
    %v1460 = vunpack.c.h.b16 %v339
    %v1461 = vunpack.c.l.b16 %v340
    %v1462 = vunpack.c.h.b16 %v340
    %v1463 = vunpack.c.l.b16 %v341
    %v1464 = vunpack.c.h.b16 %v341
    %v1465 = vunpack.c.l.b16 %v342
    %v1466 = vunpack.c.h.b16 %v342
    %v1467 = vunpack.c.l.b16 %v343
    %v1468 = vunpack.c.h.b16 %v343
    %v1469 = vunpack.c.l.b16 %v344
    %v1470 = vunpack.c.h.b16 %v344
    %v1471 = vunpack.c.l.b16 %v345
    %v1472 = vunpack.c.h.b16 %v345
    %v1473 = vunpack.c.l.b16 %v346
    %v1474 = vunpack.c.h.b16 %v346
    %v1475 = vunpack.c.l.b16 %v347
    %v1476 = vunpack.c.h.b16 %v347
    %v1477 = vunpack.c.l.b16 %v348
    %v1478 = vunpack.c.h.b16 %v348
    %v1479 = vunpack.c.l.b16 %v349
    %v1480 = vunpack.c.h.b16 %v349
    %v1481 = vunpack.c.l.b16 %v350
    %v1482 = vunpack.c.h.b16 %v350
    %v1483 = vunpack.c.l.b16 %v351
    %v1484 = vunpack.c.h.b16 %v351
    %v1485 = vunpack.c.l.b16 %v352
    %v1486 = vunpack.c.h.b16 %v352
    %v1487 = vunpack.c.l.b16 %v353
    %v1488 = vunpack.c.h.b16 %v353
    %v1489 = vunpack.c.l.b16 %v354
    %v1490 = vunpack.c.h.b16 %v354
    %v1491 = vunpack.c.l.b16 %v355
    %v1492 = vunpack.c.h.b16 %v355
    %v1493 = vunpack.c.l.b16 %v356
    %v1494 = vunpack.c.h.b16 %v356
    %v1495 = vunpack.c.l.b16 %v357
    %v1496 = vunpack.c.h.b16 %v357
    %v1497 = vunpack.c.l.b16 %v358
    %v1498 = vunpack.c.h.b16 %v358
    %v1499 = vunpack.c.l.b16 %v359
    %v1500 = vunpack.c.h.b16 %v359
    %v1501 = vunpack.c.l.b16 %v360
    %v1502 = vunpack.c.h.b16 %v360
    %v1503 = vunpack.c.l.b16 %v361
    %v1504 = vunpack.c.h.b16 %v361
    %v1505 = vunpack.c.l.b16 %v362
    %v1506 = vunpack.c.h.b16 %v362
    %v1507 = vunpack.c.l.b16 %v363
    %v1508 = vunpack.c.h.b16 %v363
    %v1509 = vunpack.c.l.b16 %v364
    %v1510 = vunpack.c.h.b16 %v364
    %v1511 = vunpack.c.l.b16 %v365
    %v1512 = vunpack.c.h.b16 %v365
    %v1513 = vunpack.c.l.b16 %v366
    %v1514 = vunpack.c.h.b16 %v366
    %v1515 = vunpack.c.l.b16 %v367
    %v1516 = vunpack.c.h.b16 %v367
    %v1517 = vunpack.c.l.b16 %v368
    %v1518 = vunpack.c.h.b16 %v368
    %v1519 = vunpack.c.l.b16 %v369
    %v1520 = vunpack.c.h.b16 %v369
    %v1521 = vunpack.c.l.b16 %v370
    %v1522 = vunpack.c.h.b16 %v370
    %v1523 = vunpack.c.l.b16 %v371
    %v1524 = vunpack.c.h.b16 %v371
    %v1525 = vunpack.c.l.b16 %v372
    %v1526 = vunpack.c.h.b16 %v372
    %v1527 = vunpack.c.l.b16 %v373
    %v1528 = vunpack.c.h.b16 %v373
    %v1529 = vunpack.c.l.b16 %v374
    %v1530 = vunpack.c.h.b16 %v374
    %v1531 = vunpack.c.l.b16 %v375
    %v1532 = vunpack.c.h.b16 %v375
    %v1533 = vunpack.c.l.b16 %v376
    %v1534 = vunpack.c.h.b16 %v376
    %v1535 = vunpack.c.l.b16 %v377
    %v1536 = vunpack.c.h.b16 %v377
    %v1537 = vunpack.c.l.b16 %v378
    %v1538 = vunpack.c.h.b16 %v378
    %v1539 = vunpack.c.l.b16 %v379
    %v1540 = vunpack.c.h.b16 %v379
    %v1541 = vunpack.c.l.b16 %v380
    %v1542 = vunpack.c.h.b16 %v380
    %v1543 = vunpack.c.l.b16 %v381
    %v1544 = vunpack.c.h.b16 %v381
    %v1545 = vunpack.c.l.b16 %v382
    %v1546 = vunpack.c.h.b16 %v382
    %v1547 = vunpack.c.l.b16 %v383
    %v1548 = vunpack.c.h.b16 %v383
    %v1549 = vunpack.c.l.b16 %v384
    %v1550 = vunpack.c.h.b16 %v384
    %v1551 = vunpack.c.l.b16 %v385
    %v1552 = vunpack.c.h.b16 %v385
    %v1553 = vunpack.c.l.b16 %v386
    %v1554 = vunpack.c.h.b16 %v386
    %v1555 = vunpack.c.l.b16 %v387
    %v1556 = vunpack.c.h.b16 %v387
    %v1557 = vunpack.c.l.b16 %v388
    %v1558 = vunpack.c.h.b16 %v388
    %v1559 = vunpack.c.l.b16 %v389
    %v1560 = vunpack.c.h.b16 %v389
    %v1561 = vunpack.c.l.b16 %v390
    %v1562 = vunpack.c.h.b16 %v390
    %v1563 = vunpack.c.l.b16 %v391
    %v1564 = vunpack.c.h.b16 %v391
    %v1565 = vunpack.c.l.b16 %v392
    %v1566 = vunpack.c.h.b16 %v392
    %v1567 = vunpack.c.l.b16 %v393
    %v1568 = vunpack.c.h.b16 %v393
    %v1569 = vunpack.c.l.b16 %v394
    %v1570 = vunpack.c.h.b16 %v394
    %v1571 = vunpack.c.l.b16 %v395
    %v1572 = vunpack.c.h.b16 %v395
    %v1573 = vunpack.c.l.b16 %v396
    %v1574 = vunpack.c.h.b16 %v396
    %v1575 = vunpack.c.l.b16 %v397
    %v1576 = vunpack.c.h.b16 %v397
    %v1577 = vunpack.c.l.b16 %v398
    %v1578 = vunpack.c.h.b16 %v398
    %v1579 = vunpack.c.l.b16 %v399
    %v1580 = vunpack.c.h.b16 %v399
    %v1581 = vunpack.c.l.b16 %v400
    %v1582 = vunpack.c.h.b16 %v400
    %v1583 = vunpack.c.l.b16 %v401
    %v1584 = vunpack.c.h.b16 %v401
    %v1585 = vunpack.c.l.b16 %v402
    %v1586 = vunpack.c.h.b16 %v402
    %v1587 = vunpack.c.l.b16 %v403
    %v1588 = vunpack.c.h.b16 %v403
    %v1589 = vunpack.c.l.b16 %v404
    %v1590 = vunpack.c.h.b16 %v404
    %v1591 = vunpack.c.l.b16 %v405
    %v1592 = vunpack.c.h.b16 %v405
    %v1593 = vunpack.c.l.b16 %v406
    %v1594 = vunpack.c.h.b16 %v406
    %v1595 = vunpack.c.l.b16 %v407
    %v1596 = vunpack.c.h.b16 %v407
    %v1597 = vunpack.c.l.b16 %v408
    %v1598 = vunpack.c.h.b16 %v408
    %v1599 = vunpack.c.l.b16 %v409
    %v1600 = vunpack.c.h.b16 %v409
    %v1601 = vunpack.c.l.b16 %v410
    %v1602 = vunpack.c.h.b16 %v410
    %v1603 = vunpack.c.l.b16 %v411
    %v1604 = vunpack.c.h.b16 %v411
    %v1605 = vunpack.c.l.b16 %v412
    %v1606 = vunpack.c.h.b16 %v412
    %v1607 = vunpack.c.l.b16 %v413
    %v1608 = vunpack.c.h.b16 %v413
    %v1609 = vunpack.c.l.b16 %v414
    %v1610 = vunpack.c.h.b16 %v414
    %v1611 = vunpack.c.l.b16 %v415
    %v1612 = vunpack.c.h.b16 %v415
    %v1613 = vunpack.c.l.b16 %v416
    %v1614 = vunpack.c.h.b16 %v416
    %v1615 = vunpack.c.l.b16 %v417
    %v1616 = vunpack.c.h.b16 %v417
    %v1617 = vunpack.c.l.b16 %v418
    %v1618 = vunpack.c.h.b16 %v418
    %v1619 = vunpack.c.l.b16 %v419
    %v1620 = vunpack.c.h.b16 %v419
    %v1621 = vunpack.c.l.b16 %v420
    %v1622 = vunpack.c.h.b16 %v420
    %v1623 = vunpack.c.l.b16 %v421
    %v1624 = vunpack.c.h.b16 %v421
    %v1625 = vunpack.c.l.b16 %v422
    %v1626 = vunpack.c.h.b16 %v422
    %v1627 = vunpack.c.l.b16 %v423
    %v1628 = vunpack.c.h.b16 %v423
    %v1629 = vunpack.c.l.b16 %v424
    %v1630 = vunpack.c.h.b16 %v424
    %v1631 = vunpack.c.l.b16 %v425
    %v1632 = vunpack.c.h.b16 %v425
    %v1633 = vunpack.c.l.b16 %v426
    %v1634 = vunpack.c.h.b16 %v426
    %v1635 = vunpack.c.l.b16 %v427
    %v1636 = vunpack.c.h.b16 %v427
    %v1637 = vunpack.c.l.b16 %v428
    %v1638 = vunpack.c.h.b16 %v428
    %v1639 = vunpack.c.l.b16 %v429
    %v1640 = vunpack.c.h.b16 %v429
    %v1641 = vunpack.c.l.b16 %v430
    %v1642 = vunpack.c.h.b16 %v430
    %v1643 = vunpack.c.l.b16 %v431
    %v1644 = vunpack.c.h.b16 %v431
    %v1645 = vunpack.c.l.b16 %v432
    %v1646 = vunpack.c.h.b16 %v432
    %v1647 = vunpack.c.l.b16 %v433
    %v1648 = vunpack.c.h.b16 %v433
    %v1649 = vunpack.c.l.b16 %v434
    %v1650 = vunpack.c.h.b16 %v434
    %v1651 = vunpack.c.l.b16 %v435
    %v1652 = vunpack.c.h.b16 %v435
    %v1653 = vunpack.c.l.b16 %v436
    %v1654 = vunpack.c.h.b16 %v436
    %v1655 = vunpack.c.l.b16 %v437
    %v1656 = vunpack.c.h.b16 %v437
    %v1657 = vunpack.c.l.b16 %v438
    %v1658 = vunpack.c.h.b16 %v438
    %v1659 = vunpack.c.l.b16 %v439
    %v1660 = vunpack.c.h.b16 %v439
    %v1661 = vunpack.c.l.b16 %v440
    %v1662 = vunpack.c.h.b16 %v440
    %v1663 = vunpack.c.l.b16 %v441
    %v1664 = vunpack.c.h.b16 %v441
    %v1665 = vunpack.c.l.b16 %v442
    %v1666 = vunpack.c.h.b16 %v442
    %v1667 = vunpack.c.l.b16 %v443
    %v1668 = vunpack.c.h.b16 %v443
    %v1669 = vunpack.c.l.b16 %v444
    %v1670 = vunpack.c.h.b16 %v444
    %v1671 = vunpack.c.l.b16 %v445
    %v1672 = vunpack.c.h.b16 %v445
    %v1673 = vunpack.c.l.b16 %v446
    %v1674 = vunpack.c.h.b16 %v446
    %v1675 = vunpack.c.l.b16 %v447
    %v1676 = vunpack.c.h.b16 %v447
    %v1677 = vunpack.c.l.b16 %v448
    %v1678 = vunpack.c.h.b16 %v448
    %v1679 = vunpack.c.l.b16 %v449
    %v1680 = vunpack.c.h.b16 %v449
    %v1681 = vunpack.c.l.b16 %v450
    %v1682 = vunpack.c.h.b16 %v450
    %v1683 = vunpack.c.l.b16 %v451
    %v1684 = vunpack.c.h.b16 %v451
    %v1685 = vunpack.c.l.b16 %v452
    %v1686 = vunpack.c.h.b16 %v452
    %v1687 = vunpack.c.l.b16 %v453
    %v1688 = vunpack.c.h.b16 %v453
    %v1689 = vunpack.c.l.b16 %v454
    %v1690 = vunpack.c.h.b16 %v454
    %v1691 = vunpack.c.l.b16 %v455
    %v1692 = vunpack.c.h.b16 %v455
    %v1693 = vunpack.c.l.b16 %v456
    %v1694 = vunpack.c.h.b16 %v456
    %v1695 = vunpack.c.l.b16 %v457
    %v1696 = vunpack.c.h.b16 %v457
    %v1697 = vunpack.c.l.b16 %v458
    %v1698 = vunpack.c.h.b16 %v458
    %v1699 = vunpack.c.l.b16 %v459
    %v1700 = vunpack.c.h.b16 %v459
    %v1701 = vunpack.c.l.b16 %v460
    %v1702 = vunpack.c.h.b16 %v460
    %v1703 = vunpack.c.l.b16 %v461
    %v1704 = vunpack.c.h.b16 %v461
    %v1705 = vunpack.c.l.b16 %v462
    %v1706 = vunpack.c.h.b16 %v462
    %v1707 = vunpack.c.l.b16 %v463
    %v1708 = vunpack.c.h.b16 %v463
    %v1709 = vunpack.c.l.b16 %v464
    %v1710 = vunpack.c.h.b16 %v464
    %v1711 = vunpack.c.l.b16 %v465
    %v1712 = vunpack.c.h.b16 %v465
    %v1713 = vunpack.c.l.b16 %v466
    %v1714 = vunpack.c.h.b16 %v466
    %v1715 = vunpack.c.l.b16 %v467
    %v1716 = vunpack.c.h.b16 %v467
    %v1717 = vunpack.c.l.b16 %v468
    %v1718 = vunpack.c.h.b16 %v468
    %v1719 = vunpack.c.l.b16 %v469
    %v1720 = vunpack.c.h.b16 %v469
    %v1721 = vunpack.c.l.b16 %v470
    %v1722 = vunpack.c.h.b16 %v470
    %v1723 = vunpack.c.l.b16 %v471
    %v1724 = vunpack.c.h.b16 %v471
    %v1725 = vunpack.c.l.b16 %v472
    %v1726 = vunpack.c.h.b16 %v472
    %v1727 = vunpack.c.l.b16 %v473
    %v1728 = vunpack.c.h.b16 %v473
    %v1729 = vunpack.c.l.b16 %v474
    %v1730 = vunpack.c.h.b16 %v474
    %v1731 = vunpack.c.l.b16 %v475
    %v1732 = vunpack.c.h.b16 %v475
    %v1733 = vunpack.c.l.b16 %v476
    %v1734 = vunpack.c.h.b16 %v476
    %v1735 = vunpack.c.l.b16 %v477
    %v1736 = vunpack.c.h.b16 %v477
    %v1737 = vunpack.c.l.b16 %v478
    %v1738 = vunpack.c.h.b16 %v478
    %v1739 = vunpack.c.l.b16 %v479
    %v1740 = vunpack.c.h.b16 %v479
    %v1741 = vunpack.c.l.b16 %v480
    %v1742 = vunpack.c.h.b16 %v480
    %v1743 = vunpack.c.l.b16 %v481
    %v1744 = vunpack.c.h.b16 %v481
    %v1745 = vunpack.c.l.b16 %v482
    %v1746 = vunpack.c.h.b16 %v482
    %v1747 = vunpack.c.l.b16 %v483
    %v1748 = vunpack.c.h.b16 %v483
    %v1749 = vunpack.c.l.b16 %v484
    %v1750 = vunpack.c.h.b16 %v484
    %v1751 = vunpack.c.l.b16 %v485
    %v1752 = vunpack.c.h.b16 %v485
    %v1753 = vunpack.c.l.b16 %v486
    %v1754 = vunpack.c.h.b16 %v486
    %v1755 = vunpack.c.l.b16 %v487
    %v1756 = vunpack.c.h.b16 %v487
    %v1757 = vunpack.c.l.b16 %v488
    %v1758 = vunpack.c.h.b16 %v488
    %v1759 = vunpack.c.l.b16 %v489
    %v1760 = vunpack.c.h.b16 %v489
    %v1761 = vunpack.c.l.b16 %v490
    %v1762 = vunpack.c.h.b16 %v490
    %v1763 = vunpack.c.l.b16 %v491
    %v1764 = vunpack.c.h.b16 %v491
    %v1765 = vunpack.c.l.b16 %v492
    %v1766 = vunpack.c.h.b16 %v492
    %v1767 = vunpack.c.l.b16 %v493
    %v1768 = vunpack.c.h.b16 %v493
    %v1769 = vunpack.c.l.b16 %v494
    %v1770 = vunpack.c.h.b16 %v494
    %v1771 = vunpack.c.l.b16 %v495
    %v1772 = vunpack.c.h.b16 %v495
    %v1773 = vunpack.c.l.b16 %v496
    %v1774 = vunpack.c.h.b16 %v496
    %v1775 = vunpack.c.l.b16 %v497
    %v1776 = vunpack.c.h.b16 %v497
    %v1777 = vunpack.c.l.b16 %v498
    %v1778 = vunpack.c.h.b16 %v498
    %v1779 = vunpack.c.l.b16 %v499
    %v1780 = vunpack.c.h.b16 %v499
    %v1781 = vunpack.c.l.b16 %v500
    %v1782 = vunpack.c.h.b16 %v500
    %v1783 = vunpack.c.l.b16 %v501
    %v1784 = vunpack.c.h.b16 %v501
    %v1785 = vunpack.c.l.b16 %v502
    %v1786 = vunpack.c.h.b16 %v502
    %v1787 = vunpack.c.l.b16 %v503
    %v1788 = vunpack.c.h.b16 %v503
    %v1789 = vunpack.c.l.b16 %v504
    %v1790 = vunpack.c.h.b16 %v504
    %v1791 = vunpack.c.l.b16 %v505
    %v1792 = vunpack.c.h.b16 %v505
    %v1793 = vunpack.c.l.b16 %v506
    %v1794 = vunpack.c.h.b16 %v506
    %v1795 = vunpack.c.l.b16 %v507
    %v1796 = vunpack.c.h.b16 %v507
    %v1797 = vunpack.c.l.b16 %v508
    %v1798 = vunpack.c.h.b16 %v508
    %v1799 = vunpack.c.l.b16 %v509
    %v1800 = vunpack.c.h.b16 %v509
    %v1801 = vunpack.c.l.b16 %v510
    %v1802 = vunpack.c.h.b16 %v510
    %v1803 = vunpack.c.l.b16 %v511
    %v1804 = vunpack.c.h.b16 %v511
    %v1805 = vunpack.c.l.b16 %v512
    %v1806 = vunpack.c.h.b16 %v512
    %v1807 = vunpack.c.l.b16 %v513
    %v1808 = vunpack.c.h.b16 %v513
    %v1809 = vunpack.c.l.b16 %v514
    %v1810 = vunpack.c.h.b16 %v514
    %v1811 = vunpack.c.l.b16 %v515
    %v1812 = vunpack.c.h.b16 %v515
    %v1813 = vunpack.c.l.b16 %v516
    %v1814 = vunpack.c.h.b16 %v516
    %v1815 = vunpack.c.l.b16 %v517
    %v1816 = vunpack.c.h.b16 %v517
    %v1817 = vunpack.c.l.b16 %v518
    %v1818 = vunpack.c.h.b16 %v518
    %v1819 = vunpack.c.l.b16 %v519
    %v1820 = vunpack.c.h.b16 %v519
    %v1821 = vunpack.c.l.b16 %v520
    %v1822 = vunpack.c.h.b16 %v520
    %v1823 = vunpack.c.l.b16 %v521
    %v1824 = vunpack.c.h.b16 %v521
    %v1825 = vunpack.c.l.b16 %v522
    %v1826 = vunpack.c.h.b16 %v522
    %v1827 = vunpack.c.l.b16 %v523
    %v1828 = vunpack.c.h.b16 %v523
    %v1829 = vunpack.c.l.b16 %v524
    %v1830 = vunpack.c.h.b16 %v524
    %v1831 = vunpack.c.l.b16 %v525
    %v1832 = vunpack.c.h.b16 %v525
    %v1833 = vunpack.c.l.b16 %v526
    %v1834 = vunpack.c.h.b16 %v526
    %v1835 = vunpack.c.l.b16 %v527
    %v1836 = vunpack.c.h.b16 %v527
    %v1837 = vunpack.c.l.b16 %v528
    %v1838 = vunpack.c.h.b16 %v528
    %v1839 = vunpack.c.l.b16 %v529
    %v1840 = vunpack.c.h.b16 %v529
    %v1841 = vunpack.c.l.b16 %v530
    %v1842 = vunpack.c.h.b16 %v530
    %v1843 = vunpack.c.l.b16 %v531
    %v1844 = vunpack.c.h.b16 %v531
    %v1845 = vunpack.c.l.b16 %v532
    %v1846 = vunpack.c.h.b16 %v532
    %v1847 = vunpack.c.l.b16 %v533
    %v1848 = vunpack.c.h.b16 %v533
    %v1849 = vunpack.c.l.b16 %v534
    %v1850 = vunpack.c.h.b16 %v534
    %v1851 = vunpack.c.l.b16 %v535
    %v1852 = vunpack.c.h.b16 %v535
    %v1853 = vunpack.c.l.b16 %v536
    %v1854 = vunpack.c.h.b16 %v536
    %v1855 = vunpack.c.l.b16 %v537
    %v1856 = vunpack.c.h.b16 %v537
    %v1857 = vunpack.c.l.b16 %v538
    %v1858 = vunpack.c.h.b16 %v538
    %v1859 = vunpack.c.l.b16 %v539
    %v1860 = vunpack.c.h.b16 %v539
    %v1861 = vunpack.c.l.b16 %v540
    %v1862 = vunpack.c.h.b16 %v540
    %v1863 = vunpack.c.l.b16 %v541
    %v1864 = vunpack.c.h.b16 %v541
    %v1865 = vunpack.c.l.b16 %v542
    %v1866 = vunpack.c.h.b16 %v542
    %v1867 = vunpack.c.l.b16 %v543
    %v1868 = vunpack.c.h.b16 %v543
    %v1869 = vunpack.c.l.b16 %v544
    %v1870 = vunpack.c.h.b16 %v544
    %v1871 = vunpack.c.l.b16 %v545
    %v1872 = vunpack.c.h.b16 %v545
    %v1873 = vunpack.c.l.b16 %v546
    %v1874 = vunpack.c.h.b16 %v546
    %v1875 = vunpack.c.l.b16 %v547
    %v1876 = vunpack.c.h.b16 %v547
    %v1877 = vunpack.c.l.b16 %v548
    %v1878 = vunpack.c.h.b16 %v548
    %v1879 = vunpack.c.l.b16 %v549
    %v1880 = vunpack.c.h.b16 %v549
    %v1881 = vunpack.c.l.b16 %v550
    %v1882 = vunpack.c.h.b16 %v550
    %v1883 = vunpack.c.l.b16 %v551
    %v1884 = vunpack.c.h.b16 %v551
    %v1885 = vunpack.c.l.b16 %v552
    %v1886 = vunpack.c.h.b16 %v552
    %v1887 = vunpack.c.l.b16 %v553
    %v1888 = vunpack.c.h.b16 %v553
    %v1889 = vunpack.c.l.b16 %v554
    %v1890 = vunpack.c.h.b16 %v554
    %v1891 = vunpack.c.l.b16 %v555
    %v1892 = vunpack.c.h.b16 %v555
    %v1893 = vunpack.c.l.b16 %v556
    %v1894 = vunpack.c.h.b16 %v556
    %v1895 = vunpack.c.l.b16 %v557
    %v1896 = vunpack.c.h.b16 %v557
    %v1897 = vunpack.c.l.b16 %v558
    %v1898 = vunpack.c.h.b16 %v558
    %v1899 = vunpack.c.l.b16 %v559
    %v1900 = vunpack.c.h.b16 %v559
    %v1901 = vunpack.c.l.b16 %v560
    %v1902 = vunpack.c.h.b16 %v560
    %v1903 = vunpack.c.l.b16 %v561
    %v1904 = vunpack.c.h.b16 %v561
    %v1905 = vunpack.c.l.b16 %v562
    %v1906 = vunpack.c.h.b16 %v562
    %v1907 = vunpack.c.l.b16 %v563
    %v1908 = vunpack.c.h.b16 %v563
    %v1909 = vunpack.c.l.b16 %v564
    %v1910 = vunpack.c.h.b16 %v564
    %v1911 = vunpack.c.l.b16 %v565
    %v1912 = vunpack.c.h.b16 %v565
    %v1913 = vunpack.c.l.b16 %v566
    %v1914 = vunpack.c.h.b16 %v566
    %v1915 = vunpack.c.l.b16 %v567
    %v1916 = vunpack.c.h.b16 %v567
    %v1917 = vunpack.c.l.b16 %v568
    %v1918 = vunpack.c.h.b16 %v568
    %v1919 = vunpack.c.l.b16 %v569
    %v1920 = vunpack.c.h.b16 %v569
    %v1921 = vunpack.c.l.b16 %v570
    %v1922 = vunpack.c.h.b16 %v570
    %v1923 = vunpack.c.l.b16 %v571
    %v1924 = vunpack.c.h.b16 %v571
    %v1925 = vunpack.c.l.b16 %v572
    %v1926 = vunpack.c.h.b16 %v572
    %v1927 = vunpack.c.l.b16 %v573
    %v1928 = vunpack.c.h.b16 %v573
    %v1929 = vunpack.c.l.b16 %v574
    %v1930 = vunpack.c.h.b16 %v574
    %v1931 = vunpack.c.l.b16 %v575
    %v1932 = vunpack.c.h.b16 %v575
    %v1933 = vunpack.c.l.b16 %v576
    %v1934 = vunpack.c.h.b16 %v576
    %v1935 = vunpack.c.l.b16 %v577
    %v1936 = vunpack.c.h.b16 %v577
    %v1937 = vunpack.c.l.b16 %v578
    %v1938 = vunpack.c.h.b16 %v578
    %v1939 = vunpack.c.l.b16 %v579
    %v1940 = vunpack.c.h.b16 %v579
    %v1941 = vunpack.c.l.b16 %v580
    %v1942 = vunpack.c.h.b16 %v580
    %v1943 = vunpack.c.l.b16 %v581
    %v1944 = vunpack.c.h.b16 %v581
    %v1945 = vunpack.c.l.b16 %v582
    %v1946 = vunpack.c.h.b16 %v582
    %v1947 = vunpack.c.l.b16 %v583
    %v1948 = vunpack.c.h.b16 %v583
    %v1949 = vunpack.c.l.b16 %v584
    %v1950 = vunpack.c.h.b16 %v584
    %v1951 = vunpack.c.l.b16 %v585
    %v1952 = vunpack.c.h.b16 %v585
    %v1953 = vunpack.c.l.b16 %v586
    %v1954 = vunpack.c.h.b16 %v586
    %v1955 = vunpack.c.l.b16 %v587
    %v1956 = vunpack.c.h.b16 %v587
    %v1957 = vunpack.c.l.b16 %v588
    %v1958 = vunpack.c.h.b16 %v588
    %v1959 = vunpack.c.l.b16 %v589
    %v1960 = vunpack.c.h.b16 %v589
    %v1961 = vunpack.c.l.b16 %v590
    %v1962 = vunpack.c.h.b16 %v590
    %v1963 = vunpack.c.l.b16 %v591
    %v1964 = vunpack.c.h.b16 %v591
    %v1965 = vunpack.c.l.b16 %v592
    %v1966 = vunpack.c.h.b16 %v592
    %v1967 = vunpack.c.l.b16 %v593
    %v1968 = vunpack.c.h.b16 %v593
    %v1969 = vunpack.c.l.b16 %v594
    %v1970 = vunpack.c.h.b16 %v594
    %v1971 = vunpack.c.l.b16 %v595
    %v1972 = vunpack.c.h.b16 %v595
    %v1973 = vunpack.c.l.b16 %v596
    %v1974 = vunpack.c.h.b16 %v596
    %v1975 = vunpack.c.l.b16 %v597
    %v1976 = vunpack.c.h.b16 %v597
    %v1977 = vunpack.c.l.b16 %v598
    %v1978 = vunpack.c.h.b16 %v598
    %v1979 = vunpack.c.l.b16 %v599
    %v1980 = vunpack.c.h.b16 %v599
    %v1981 = vunpack.c.l.b16 %v600
    %v1982 = vunpack.c.h.b16 %v600
    %v1983 = vunpack.c.l.b16 %v601
    %v1984 = vunpack.c.h.b16 %v601
    %v1985 = vunpack.c.l.b16 %v602
    %v1986 = vunpack.c.h.b16 %v602
    %v1987 = vunpack.c.l.b16 %v603
    %v1988 = vunpack.c.h.b16 %v603
    %v1989 = vunpack.c.l.b16 %v604
    %v1990 = vunpack.c.h.b16 %v604
    %v1991 = vpack.c.b16 %v1103, %v1095
    %v1992 = vpack.c.b16 %v1104, %v1096
    %v1993 = vpack.c.b16 %v1105, %v1097
    %v1994 = vpack.c.b16 %v1106, %v1098
    %v1995 = vpack.c.b16 %v1107, %v1099
    %v1996 = vpack.c.b16 %v1108, %v1100
    %v1997 = vpack.c.b16 %v1109, %v1101
    %v1998 = vpack.c.b16 %v1110, %v1102
    %v1999 = vpack.c.b16 %v1119, %v1111
    %v2000 = vpack.c.b16 %v1120, %v1112
    %v2001 = vpack.c.b16 %v1121, %v1113
    %v2002 = vpack.c.b16 %v1122, %v1114
    %v2003 = vpack.c.b16 %v1123, %v1115
    %v2004 = vpack.c.b16 %v1124, %v1116
    %v2005 = vpack.c.b16 %v1125, %v1117
    %v2006 = vpack.c.b16 %v1126, %v1118
    %v2007 = vpack.c.b16 %v1135, %v1127
    %v2008 = vpack.c.b16 %v1136, %v1128
    %v2009 = vpack.c.b16 %v1137, %v1129
    %v2010 = vpack.c.b16 %v1138, %v1130
    %v2011 = vpack.c.b16 %v1139, %v1131
    %v2012 = vpack.c.b16 %v1140, %v1132
    %v2013 = vpack.c.b16 %v1141, %v1133
    %v2014 = vpack.c.b16 %v1142, %v1134
    %v2015 = vpack.c.b16 %v1151, %v1143
    %v2016 = vpack.c.b16 %v1152, %v1144
    %v2017 = vpack.c.b16 %v1153, %v1145
    %v2018 = vpack.c.b16 %v1154, %v1146
    %v2019 = vpack.c.b16 %v1155, %v1147
    %v2020 = vpack.c.b16 %v1156, %v1148
    %v2021 = vpack.c.b16 %v1157, %v1149
    %v2022 = vpack.c.b16 %v1158, %v1150
    %v2023 = vpack.c.b16 %v1167, %v1159
    %v2024 = vpack.c.b16 %v1168, %v1160
    %v2025 = vpack.c.b16 %v1169, %v1161
    %v2026 = vpack.c.b16 %v1170, %v1162
    %v2027 = vpack.c.b16 %v1171, %v1163
    %v2028 = vpack.c.b16 %v1172, %v1164
    %v2029 = vpack.c.b16 %v1173, %v1165
    %v2030 = vpack.c.b16 %v1174, %v1166
    %v2031 = vpack.c.b16 %v1183, %v1175
    %v2032 = vpack.c.b16 %v1184, %v1176
    %v2033 = vpack.c.b16 %v1185, %v1177
    %v2034 = vpack.c.b16 %v1186, %v1178
    %v2035 = vpack.c.b16 %v1187, %v1179
    %v2036 = vpack.c.b16 %v1188, %v1180
    %v2037 = vpack.c.b16 %v1189, %v1181
    %v2038 = vpack.c.b16 %v1190, %v1182
    %v2039 = vpack.c.b16 %v1199, %v1191
    %v2040 = vpack.c.b16 %v1200, %v1192
    %v2041 = vpack.c.b16 %v1201, %v1193
    %v2042 = vpack.c.b16 %v1202, %v1194
    %v2043 = vpack.c.b16 %v1203, %v1195
    %v2044 = vpack.c.b16 %v1204, %v1196
    %v2045 = vpack.c.b16 %v1205, %v1197
    %v2046 = vpack.c.b16 %v1206, %v1198
    %v2047 = vpack.c.b16 %v1215, %v1207
    %v2048 = vpack.c.b16 %v1216, %v1208
    %v2049 = vpack.c.b16 %v1217, %v1209
    %v2050 = vpack.c.b16 %v1218, %v1210
    %v2051 = vpack.c.b16 %v1219, %v1211
    %v2052 = vpack.c.b16 %v1220, %v1212
    %v2053 = vpack.c.b16 %v1221, %v1213
    %v2054 = vpack.c.b16 %v1222, %v1214
    %v2055 = vpack.c.b16 %v1231, %v1223
    %v2056 = vpack.c.b16 %v1232, %v1224
    %v2057 = vpack.c.b16 %v1233, %v1225
    %v2058 = vpack.c.b16 %v1234, %v1226
    %v2059 = vpack.c.b16 %v1235, %v1227
    %v2060 = vpack.c.b16 %v1236, %v1228
    %v2061 = vpack.c.b16 %v1237, %v1229
    %v2062 = vpack.c.b16 %v1238, %v1230
    %v2063 = vpack.c.b16 %v1247, %v1239
    %v2064 = vpack.c.b16 %v1248, %v1240
    %v2065 = vpack.c.b16 %v1249, %v1241
    %v2066 = vpack.c.b16 %v1250, %v1242
    %v2067 = vpack.c.b16 %v1251, %v1243
    %v2068 = vpack.c.b16 %v1252, %v1244
    %v2069 = vpack.c.b16 %v1253, %v1245
    %v2070 = vpack.c.b16 %v1254, %v1246
    %v2071 = vpack.c.b16 %v1263, %v1255
    %v2072 = vpack.c.b16 %v1264, %v1256
    %v2073 = vpack.c.b16 %v1265, %v1257
    %v2074 = vpack.c.b16 %v1266, %v1258
    %v2075 = vpack.c.b16 %v1267, %v1259
    %v2076 = vpack.c.b16 %v1268, %v1260
    %v2077 = vpack.c.b16 %v1269, %v1261
    %v2078 = vpack.c.b16 %v1270, %v1262
    %v2079 = vpack.c.b16 %v1279, %v1271
    %v2080 = vpack.c.b16 %v1280, %v1272
    %v2081 = vpack.c.b16 %v1281, %v1273
    %v2082 = vpack.c.b16 %v1282, %v1274
    %v2083 = vpack.c.b16 %v1283, %v1275
    %v2084 = vpack.c.b16 %v1284, %v1276
    %v2085 = vpack.c.b16 %v1285, %v1277
    %v2086 = vpack.c.b16 %v1286, %v1278
    %v2087 = vpack.c.b16 %v1295, %v1287
    %v2088 = vpack.c.b16 %v1296, %v1288
    %v2089 = vpack.c.b16 %v1297, %v1289
    %v2090 = vpack.c.b16 %v1298, %v1290
    %v2091 = vpack.c.b16 %v1299, %v1291
    %v2092 = vpack.c.b16 %v1300, %v1292
    %v2093 = vpack.c.b16 %v1301, %v1293
    %v2094 = vpack.c.b16 %v1302, %v1294
    %v2095 = vpack.c.b16 %v1311, %v1303
    %v2096 = vpack.c.b16 %v1312, %v1304
    %v2097 = vpack.c.b16 %v1313, %v1305
    %v2098 = vpack.c.b16 %v1314, %v1306
    %v2099 = vpack.c.b16 %v1315, %v1307
    %v2100 = vpack.c.b16 %v1316, %v1308
    %v2101 = vpack.c.b16 %v1317, %v1309
    %v2102 = vpack.c.b16 %v1318, %v1310
    %v2103 = vpack.c.b16 %v1327, %v1319
    %v2104 = vpack.c.b16 %v1328, %v1320
    %v2105 = vpack.c.b16 %v1329, %v1321
    %v2106 = vpack.c.b16 %v1330, %v1322
    %v2107 = vpack.c.b16 %v1331, %v1323
    %v2108 = vpack.c.b16 %v1332, %v1324
    %v2109 = vpack.c.b16 %v1333, %v1325
    %v2110 = vpack.c.b16 %v1334, %v1326
    %v2111 = vpack.c.b16 %v1343, %v1335
    %v2112 = vpack.c.b16 %v1344, %v1336
    %v2113 = vpack.c.b16 %v1345, %v1337
    %v2114 = vpack.c.b16 %v1346, %v1338
    %v2115 = vpack.c.b16 %v1347, %v1339
    %v2116 = vpack.c.b16 %v1348, %v1340
    %v2117 = vpack.c.b16 %v1349, %v1341
    %v2118 = vpack.c.b16 %v1350, %v1342
    %v2119 = vpack.c.b16 %v1359, %v1351
    %v2120 = vpack.c.b16 %v1360, %v1352
    %v2121 = vpack.c.b16 %v1361, %v1353
    %v2122 = vpack.c.b16 %v1362, %v1354
    %v2123 = vpack.c.b16 %v1363, %v1355
    %v2124 = vpack.c.b16 %v1364, %v1356
    %v2125 = vpack.c.b16 %v1365, %v1357
    %v2126 = vpack.c.b16 %v1366, %v1358
    %v2127 = vpack.c.b16 %v1375, %v1367
    %v2128 = vpack.c.b16 %v1376, %v1368
    %v2129 = vpack.c.b16 %v1377, %v1369
    %v2130 = vpack.c.b16 %v1378, %v1370
    %v2131 = vpack.c.b16 %v1379, %v1371
    %v2132 = vpack.c.b16 %v1380, %v1372
    %v2133 = vpack.c.b16 %v1381, %v1373
    %v2134 = vpack.c.b16 %v1382, %v1374
    %v2135 = vpack.c.b16 %v1391, %v1383
    %v2136 = vpack.c.b16 %v1392, %v1384
    %v2137 = vpack.c.b16 %v1393, %v1385
    %v2138 = vpack.c.b16 %v1394, %v1386
    %v2139 = vpack.c.b16 %v1395, %v1387
    %v2140 = vpack.c.b16 %v1396, %v1388
    %v2141 = vpack.c.b16 %v1397, %v1389
    %v2142 = vpack.c.b16 %v1398, %v1390
    %v2143 = vpack.c.b16 %v1407, %v1399
    %v2144 = vpack.c.b16 %v1408, %v1400
    %v2145 = vpack.c.b16 %v1409, %v1401
    %v2146 = vpack.c.b16 %v1410, %v1402
    %v2147 = vpack.c.b16 %v1411, %v1403
    %v2148 = vpack.c.b16 %v1412, %v1404
    %v2149 = vpack.c.b16 %v1413, %v1405
    %v2150 = vpack.c.b16 %v1414, %v1406
    %v2151 = vpack.c.b16 %v1423, %v1415
    %v2152 = vpack.c.b16 %v1424, %v1416
    %v2153 = vpack.c.b16 %v1425, %v1417
    %v2154 = vpack.c.b16 %v1426, %v1418
    %v2155 = vpack.c.b16 %v1427, %v1419
    %v2156 = vpack.c.b16 %v1428, %v1420
    %v2157 = vpack.c.b16 %v1429, %v1421
    %v2158 = vpack.c.b16 %v1430, %v1422
    %v2159 = vpack.c.b16 %v1439, %v1431
    %v2160 = vpack.c.b16 %v1440, %v1432
    %v2161 = vpack.c.b16 %v1441, %v1433
    %v2162 = vpack.c.b16 %v1442, %v1434
    %v2163 = vpack.c.b16 %v1443, %v1435
    %v2164 = vpack.c.b16 %v1444, %v1436
    %v2165 = vpack.c.b16 %v1445, %v1437
    %v2166 = vpack.c.b16 %v1446, %v1438
    %v2167 = vpack.c.b16 %v1455, %v1447
    %v2168 = vpack.c.b16 %v1456, %v1448
    %v2169 = vpack.c.b16 %v1457, %v1449
    %v2170 = vpack.c.b16 %v1458, %v1450
    %v2171 = vpack.c.b16 %v1459, %v1451
    %v2172 = vpack.c.b16 %v1460, %v1452
    %v2173 = vpack.c.b16 %v1461, %v1453
    %v2174 = vpack.c.b16 %v1462, %v1454
    %v2175 = vpack.c.b16 %v1471, %v1463
    %v2176 = vpack.c.b16 %v1472, %v1464
    %v2177 = vpack.c.b16 %v1473, %v1465
    %v2178 = vpack.c.b16 %v1474, %v1466
    %v2179 = vpack.c.b16 %v1475, %v1467
    %v2180 = vpack.c.b16 %v1476, %v1468
    %v2181 = vpack.c.b16 %v1477, %v1469
    %v2182 = vpack.c.b16 %v1478, %v1470
    %v2183 = vpack.c.b16 %v1487, %v1479
    %v2184 = vpack.c.b16 %v1488, %v1480
    %v2185 = vpack.c.b16 %v1489, %v1481
    %v2186 = vpack.c.b16 %v1490, %v1482
    %v2187 = vpack.c.b16 %v1491, %v1483
    %v2188 = vpack.c.b16 %v1492, %v1484
    %v2189 = vpack.c.b16 %v1493, %v1485
    %v2190 = vpack.c.b16 %v1494, %v1486
    %v2191 = vpack.c.b16 %v1503, %v1495
    %v2192 = vpack.c.b16 %v1504, %v1496
    %v2193 = vpack.c.b16 %v1505, %v1497
    %v2194 = vpack.c.b16 %v1506, %v1498
    %v2195 = vpack.c.b16 %v1507, %v1499
    %v2196 = vpack.c.b16 %v1508, %v1500
    %v2197 = vpack.c.b16 %v1509, %v1501
    %v2198 = vpack.c.b16 %v1510, %v1502
    %v2199 = vpack.c.b16 %v1519, %v1511
    %v2200 = vpack.c.b16 %v1520, %v1512
    %v2201 = vpack.c.b16 %v1521, %v1513
    %v2202 = vpack.c.b16 %v1522, %v1514
    %v2203 = vpack.c.b16 %v1523, %v1515
    %v2204 = vpack.c.b16 %v1524, %v1516
    %v2205 = vpack.c.b16 %v1525, %v1517
    %v2206 = vpack.c.b16 %v1526, %v1518
    %v2207 = vpack.c.b16 %v1535, %v1527
    %v2208 = vpack.c.b16 %v1536, %v1528
    %v2209 = vpack.c.b16 %v1537, %v1529
    %v2210 = vpack.c.b16 %v1538, %v1530
    %v2211 = vpack.c.b16 %v1539, %v1531
    %v2212 = vpack.c.b16 %v1540, %v1532
    %v2213 = vpack.c.b16 %v1541, %v1533
    %v2214 = vpack.c.b16 %v1542, %v1534
    %v2215 = vpack.c.b16 %v1551, %v1543
    %v2216 = vpack.c.b16 %v1552, %v1544
    %v2217 = vpack.c.b16 %v1553, %v1545
    %v2218 = vpack.c.b16 %v1554, %v1546
    %v2219 = vpack.c.b16 %v1555, %v1547
    %v2220 = vpack.c.b16 %v1556, %v1548
    %v2221 = vpack.c.b16 %v1557, %v1549
    %v2222 = vpack.c.b16 %v1558, %v1550
    %v2223 = vpack.c.b16 %v1567, %v1559
    %v2224 = vpack.c.b16 %v1568, %v1560
    %v2225 = vpack.c.b16 %v1569, %v1561
    %v2226 = vpack.c.b16 %v1570, %v1562
    %v2227 = vpack.c.b16 %v1571, %v1563
    %v2228 = vpack.c.b16 %v1572, %v1564
    %v2229 = vpack.c.b16 %v1573, %v1565
    %v2230 = vpack.c.b16 %v1574, %v1566
    %v2231 = vpack.c.b16 %v1583, %v1575
    %v2232 = vpack.c.b16 %v1584, %v1576
    %v2233 = vpack.c.b16 %v1585, %v1577
    %v2234 = vpack.c.b16 %v1586, %v1578
    %v2235 = vpack.c.b16 %v1587, %v1579
    %v2236 = vpack.c.b16 %v1588, %v1580
    %v2237 = vpack.c.b16 %v1589, %v1581
    %v2238 = vpack.c.b16 %v1590, %v1582
    %v2239 = vpack.c.b16 %v1599, %v1591
    %v2240 = vpack.c.b16 %v1600, %v1592
    %v2241 = vpack.c.b16 %v1601, %v1593
    %v2242 = vpack.c.b16 %v1602, %v1594
    %v2243 = vpack.c.b16 %v1603, %v1595
    %v2244 = vpack.c.b16 %v1604, %v1596
    %v2245 = vpack.c.b16 %v1605, %v1597
    %v2246 = vpack.c.b16 %v1606, %v1598
    %v2247 = vpack.c.b16 %v1615, %v1607
    %v2248 = vpack.c.b16 %v1616, %v1608
    %v2249 = vpack.c.b16 %v1617, %v1609
    %v2250 = vpack.c.b16 %v1618, %v1610
    %v2251 = vpack.c.b16 %v1619, %v1611
    %v2252 = vpack.c.b16 %v1620, %v1612
    %v2253 = vpack.c.b16 %v1621, %v1613
    %v2254 = vpack.c.b16 %v1622, %v1614
    %v2255 = vpack.c.b16 %v1631, %v1623
    %v2256 = vpack.c.b16 %v1632, %v1624
    %v2257 = vpack.c.b16 %v1633, %v1625
    %v2258 = vpack.c.b16 %v1634, %v1626
    %v2259 = vpack.c.b16 %v1635, %v1627
    %v2260 = vpack.c.b16 %v1636, %v1628
    %v2261 = vpack.c.b16 %v1637, %v1629
    %v2262 = vpack.c.b16 %v1638, %v1630
    %v2263 = vpack.c.b16 %v1647, %v1639
    %v2264 = vpack.c.b16 %v1648, %v1640
    %v2265 = vpack.c.b16 %v1649, %v1641
    %v2266 = vpack.c.b16 %v1650, %v1642
    %v2267 = vpack.c.b16 %v1651, %v1643
    %v2268 = vpack.c.b16 %v1652, %v1644
    %v2269 = vpack.c.b16 %v1653, %v1645
    %v2270 = vpack.c.b16 %v1654, %v1646
    %v2271 = vpack.c.b16 %v1663, %v1655
    %v2272 = vpack.c.b16 %v1664, %v1656
    %v2273 = vpack.c.b16 %v1665, %v1657
    %v2274 = vpack.c.b16 %v1666, %v1658
    %v2275 = vpack.c.b16 %v1667, %v1659
    %v2276 = vpack.c.b16 %v1668, %v1660
    %v2277 = vpack.c.b16 %v1669, %v1661
    %v2278 = vpack.c.b16 %v1670, %v1662
    %v2279 = vpack.c.b16 %v1679, %v1671
    %v2280 = vpack.c.b16 %v1680, %v1672
    %v2281 = vpack.c.b16 %v1681, %v1673
    %v2282 = vpack.c.b16 %v1682, %v1674
    %v2283 = vpack.c.b16 %v1683, %v1675
    %v2284 = vpack.c.b16 %v1684, %v1676
    %v2285 = vpack.c.b16 %v1685, %v1677
    %v2286 = vpack.c.b16 %v1686, %v1678
    %v2287 = vpack.c.b16 %v1695, %v1687
    %v2288 = vpack.c.b16 %v1696, %v1688
    %v2289 = vpack.c.b16 %v1697, %v1689
    %v2290 = vpack.c.b16 %v1698, %v1690
    %v2291 = vpack.c.b16 %v1699, %v1691
    %v2292 = vpack.c.b16 %v1700, %v1692
    %v2293 = vpack.c.b16 %v1701, %v1693
    %v2294 = vpack.c.b16 %v1702, %v1694
    %v2295 = vpack.c.b16 %v1711, %v1703
    %v2296 = vpack.c.b16 %v1712, %v1704
    %v2297 = vpack.c.b16 %v1713, %v1705
    %v2298 = vpack.c.b16 %v1714, %v1706
    %v2299 = vpack.c.b16 %v1715, %v1707
    %v2300 = vpack.c.b16 %v1716, %v1708
    %v2301 = vpack.c.b16 %v1717, %v1709
    %v2302 = vpack.c.b16 %v1718, %v1710
    %v2303 = vpack.c.b16 %v1727, %v1719
    %v2304 = vpack.c.b16 %v1728, %v1720
    %v2305 = vpack.c.b16 %v1729, %v1721
    %v2306 = vpack.c.b16 %v1730, %v1722
    %v2307 = vpack.c.b16 %v1731, %v1723
    %v2308 = vpack.c.b16 %v1732, %v1724
    %v2309 = vpack.c.b16 %v1733, %v1725
    %v2310 = vpack.c.b16 %v1734, %v1726
    %v2311 = vpack.c.b16 %v1743, %v1735
    %v2312 = vpack.c.b16 %v1744, %v1736
    %v2313 = vpack.c.b16 %v1745, %v1737
    %v2314 = vpack.c.b16 %v1746, %v1738
    %v2315 = vpack.c.b16 %v1747, %v1739
    %v2316 = vpack.c.b16 %v1748, %v1740
    %v2317 = vpack.c.b16 %v1749, %v1741
    %v2318 = vpack.c.b16 %v1750, %v1742
    %v2319 = vpack.c.b16 %v1759, %v1751
    %v2320 = vpack.c.b16 %v1760, %v1752
    %v2321 = vpack.c.b16 %v1761, %v1753
    %v2322 = vpack.c.b16 %v1762, %v1754
    %v2323 = vpack.c.b16 %v1763, %v1755
    %v2324 = vpack.c.b16 %v1764, %v1756
    %v2325 = vpack.c.b16 %v1765, %v1757
    %v2326 = vpack.c.b16 %v1766, %v1758
    %v2327 = vpack.c.b16 %v1775, %v1767
    %v2328 = vpack.c.b16 %v1776, %v1768
    %v2329 = vpack.c.b16 %v1777, %v1769
    %v2330 = vpack.c.b16 %v1778, %v1770
    %v2331 = vpack.c.b16 %v1779, %v1771
    %v2332 = vpack.c.b16 %v1780, %v1772
    %v2333 = vpack.c.b16 %v1781, %v1773
    %v2334 = vpack.c.b16 %v1782, %v1774
    %v2335 = vpack.c.b16 %v1791, %v1783
    %v2336 = vpack.c.b16 %v1792, %v1784
    %v2337 = vpack.c.b16 %v1793, %v1785
    %v2338 = vpack.c.b16 %v1794, %v1786
    %v2339 = vpack.c.b16 %v1795, %v1787
    %v2340 = vpack.c.b16 %v1796, %v1788
    %v2341 = vpack.c.b16 %v1797, %v1789
    %v2342 = vpack.c.b16 %v1798, %v1790
    %v2343 = vpack.c.b16 %v1807, %v1799
    %v2344 = vpack.c.b16 %v1808, %v1800
    %v2345 = vpack.c.b16 %v1809, %v1801
    %v2346 = vpack.c.b16 %v1810, %v1802
    %v2347 = vpack.c.b16 %v1811, %v1803
    %v2348 = vpack.c.b16 %v1812, %v1804
    %v2349 = vpack.c.b16 %v1813, %v1805
    %v2350 = vpack.c.b16 %v1814, %v1806
    %v2351 = vpack.c.b16 %v1823, %v1815
    %v2352 = vpack.c.b16 %v1824, %v1816
    %v2353 = vpack.c.b16 %v1825, %v1817
    %v2354 = vpack.c.b16 %v1826, %v1818
    %v2355 = vpack.c.b16 %v1827, %v1819
    %v2356 = vpack.c.b16 %v1828, %v1820
    %v2357 = vpack.c.b16 %v1829, %v1821
    %v2358 = vpack.c.b16 %v1830, %v1822
    %v2359 = vpack.c.b16 %v1839, %v1831
    %v2360 = vpack.c.b16 %v1840, %v1832
    %v2361 = vpack.c.b16 %v1841, %v1833
    %v2362 = vpack.c.b16 %v1842, %v1834
    %v2363 = vpack.c.b16 %v1843, %v1835
    %v2364 = vpack.c.b16 %v1844, %v1836
    %v2365 = vpack.c.b16 %v1845, %v1837
    %v2366 = vpack.c.b16 %v1846, %v1838
    %v2367 = vpack.c.b16 %v1855, %v1847
    %v2368 = vpack.c.b16 %v1856, %v1848
    %v2369 = vpack.c.b16 %v1857, %v1849
    %v2370 = vpack.c.b16 %v1858, %v1850
    %v2371 = vpack.c.b16 %v1859, %v1851
    %v2372 = vpack.c.b16 %v1860, %v1852
    %v2373 = vpack.c.b16 %v1861, %v1853
    %v2374 = vpack.c.b16 %v1862, %v1854
    %v2375 = vpack.c.b16 %v1871, %v1863
    %v2376 = vpack.c.b16 %v1872, %v1864
    %v2377 = vpack.c.b16 %v1873, %v1865
    %v2378 = vpack.c.b16 %v1874, %v1866
    %v2379 = vpack.c.b16 %v1875, %v1867
    %v2380 = vpack.c.b16 %v1876, %v1868
    %v2381 = vpack.c.b16 %v1877, %v1869
    %v2382 = vpack.c.b16 %v1878, %v1870
    %v2383 = vpack.c.b16 %v1887, %v1879
    %v2384 = vpack.c.b16 %v1888, %v1880
    %v2385 = vpack.c.b16 %v1889, %v1881
    %v2386 = vpack.c.b16 %v1890, %v1882
    %v2387 = vpack.c.b16 %v1891, %v1883
    %v2388 = vpack.c.b16 %v1892, %v1884
    %v2389 = vpack.c.b16 %v1893, %v1885
    %v2390 = vpack.c.b16 %v1894, %v1886
    %v2391 = vpack.c.b16 %v1903, %v1895
    %v2392 = vpack.c.b16 %v1904, %v1896
    %v2393 = vpack.c.b16 %v1905, %v1897
    %v2394 = vpack.c.b16 %v1906, %v1898
    %v2395 = vpack.c.b16 %v1907, %v1899
    %v2396 = vpack.c.b16 %v1908, %v1900
    %v2397 = vpack.c.b16 %v1909, %v1901
    %v2398 = vpack.c.b16 %v1910, %v1902
    %v2399 = vpack.c.b16 %v1919, %v1911
    %v2400 = vpack.c.b16 %v1920, %v1912
    %v2401 = vpack.c.b16 %v1921, %v1913
    %v2402 = vpack.c.b16 %v1922, %v1914
    %v2403 = vpack.c.b16 %v1923, %v1915
    %v2404 = vpack.c.b16 %v1924, %v1916
    %v2405 = vpack.c.b16 %v1925, %v1917
    %v2406 = vpack.c.b16 %v1926, %v1918
    %v2407 = vpack.c.b16 %v1935, %v1927
    %v2408 = vpack.c.b16 %v1936, %v1928
    %v2409 = vpack.c.b16 %v1937, %v1929
    %v2410 = vpack.c.b16 %v1938, %v1930
    %v2411 = vpack.c.b16 %v1939, %v1931
    %v2412 = vpack.c.b16 %v1940, %v1932
    %v2413 = vpack.c.b16 %v1941, %v1933
    %v2414 = vpack.c.b16 %v1942, %v1934
    %v2415 = vpack.c.b16 %v1951, %v1943
    %v2416 = vpack.c.b16 %v1952, %v1944
    %v2417 = vpack.c.b16 %v1953, %v1945
    %v2418 = vpack.c.b16 %v1954, %v1946
    %v2419 = vpack.c.b16 %v1955, %v1947
    %v2420 = vpack.c.b16 %v1956, %v1948
    %v2421 = vpack.c.b16 %v1957, %v1949
    %v2422 = vpack.c.b16 %v1958, %v1950
    %v2423 = vpack.c.b16 %v1967, %v1959
    %v2424 = vpack.c.b16 %v1968, %v1960
    %v2425 = vpack.c.b16 %v1969, %v1961
    %v2426 = vpack.c.b16 %v1970, %v1962
    %v2427 = vpack.c.b16 %v1971, %v1963
    %v2428 = vpack.c.b16 %v1972, %v1964
    %v2429 = vpack.c.b16 %v1973, %v1965
    %v2430 = vpack.c.b16 %v1974, %v1966
    %v2431 = vpack.c.b16 %v1983, %v1975
    %v2432 = vpack.c.b16 %v1984, %v1976
    %v2433 = vpack.c.b16 %v1985, %v1977
    %v2434 = vpack.c.b16 %v1986, %v1978
    %v2435 = vpack.c.b16 %v1987, %v1979
    %v2436 = vpack.c.b16 %v1988, %v1980
    %v2437 = vpack.c.b16 %v1989, %v1981
    %v2438 = vpack.c.b16 %v1990, %v1982
    %2887 = vmatprep.subr.bf16.mxu0 %v2048
    %2888 = vmatpush1.bf16.msra.mxu0 %v2047
    %2889 = vmatprep.subr.bf16.mxu0 %v2040
    %2890 = vmatpush1.bf16.msra.mxu0 %v2039
    %2891 = vmatprep.subr.bf16.mxu0 %v2032
    %2892 = vmatpush1.bf16.msra.mxu0 %v2031
    %2893 = vmatprep.subr.bf16.mxu0 %v2024
    %2894 = vmatpush1.bf16.msra.mxu0 %v2023
    %2895 = vmatprep.subr.bf16.mxu0 %v2016
    %2896 = vmatpush1.bf16.msra.mxu0 %v2015
    %2897 = vmatprep.subr.bf16.mxu0 %v2008
    %2898 = vmatpush1.bf16.msra.mxu0 %v2007
    %2899 = vmatprep.subr.bf16.mxu0 %v2000
    %2900 = vmatpush1.bf16.msra.mxu0 %v1999
    %2901 = vmatprep.subr.bf16.mxu0 %v1992
    %2902 = vmatpush1.bf16.msra.mxu0 %v1991
    %2903 = vmatprep.subr.bf16.mxu0 %v2112
    %2904 = vmatpush2.bf16.msra.mxu0 %v2111
    %2905 = vmatprep.subr.bf16.mxu0 %v2104
    %2906 = vmatpush2.bf16.msra.mxu0 %v2103
    %2907 = vmatprep.subr.bf16.mxu0 %v2096
    %2908 = vmatpush2.bf16.msra.mxu0 %v2095
    %2909 = vmatprep.subr.bf16.mxu0 %v2088
    %2910 = vmatpush2.bf16.msra.mxu0 %v2087
    %2911 = vmatprep.subr.bf16.mxu0 %v2080
    %2912 = vmatpush2.bf16.msra.mxu0 %v2079
    %2913 = vmatprep.subr.bf16.mxu0 %v2072
    %2914 = vmatpush2.bf16.msra.mxu0 %v2071
    %2915 = vmatprep.subr.bf16.mxu0 %v2064
    %2916 = vmatpush2.bf16.msra.mxu0 %v2063
    %2917 = vmatprep.subr.bf16.mxu0 %v2056
    %2918 = vmatpush2.bf16.msra.mxu0 %v2055
    %2919 = vmatprep.mubr.bf16.mxu0 %v151
    %2920 = vmatmul.mubr.bf16.gmra.mxu0 %v150
    %v2921 = vpop.f32.mrf.mxu0
    %v2922 = vadd.f32 %v610, %v2921
    %v2923 = vpop.f32.mrf.mxu0
    %v2924 = vadd.f32 %v614, %v2923
    %v2925 = vpop.f32.mrf.mxu0
    %v2926 = vadd.f32 %v610, %v2925
    %v2927 = vpop.f32.mrf.mxu0
    %v2928 = vadd.f32 %v614, %v2927
    %2929 = vdwg.mxu0
    %2930 = vmatprep.subr.bf16.mxu0 %v2176
    %2931 = vmatpush1.bf16.msra.mxu0 %v2175
    %2932 = vmatprep.subr.bf16.mxu0 %v2168
    %2933 = vmatpush1.bf16.msra.mxu0 %v2167
    %2934 = vmatprep.subr.bf16.mxu0 %v2160
    %2935 = vmatpush1.bf16.msra.mxu0 %v2159
    %2936 = vmatprep.subr.bf16.mxu0 %v2152
    %2937 = vmatpush1.bf16.msra.mxu0 %v2151
    %2938 = vmatprep.subr.bf16.mxu0 %v2144
    %2939 = vmatpush1.bf16.msra.mxu0 %v2143
    %2940 = vmatprep.subr.bf16.mxu0 %v2136
    %2941 = vmatpush1.bf16.msra.mxu0 %v2135
    %2942 = vmatprep.subr.bf16.mxu0 %v2128
    %2943 = vmatpush1.bf16.msra.mxu0 %v2127
    %2944 = vmatprep.subr.bf16.mxu0 %v2120
    %2945 = vmatpush1.bf16.msra.mxu0 %v2119
    %2946 = vmatprep.subr.bf16.mxu0 %v2240
    %2947 = vmatpush2.bf16.msra.mxu0 %v2239
    %2948 = vmatprep.subr.bf16.mxu0 %v2232
    %2949 = vmatpush2.bf16.msra.mxu0 %v2231
    %2950 = vmatprep.subr.bf16.mxu0 %v2224
    %2951 = vmatpush2.bf16.msra.mxu0 %v2223
    %2952 = vmatprep.subr.bf16.mxu0 %v2216
    %2953 = vmatpush2.bf16.msra.mxu0 %v2215
    %2954 = vmatprep.subr.bf16.mxu0 %v2208
    %2955 = vmatpush2.bf16.msra.mxu0 %v2207
    %2956 = vmatprep.subr.bf16.mxu0 %v2200
    %2957 = vmatpush2.bf16.msra.mxu0 %v2199
    %2958 = vmatprep.subr.bf16.mxu0 %v2192
    %2959 = vmatpush2.bf16.msra.mxu0 %v2191
    %2960 = vmatprep.subr.bf16.mxu0 %v2184
    %2961 = vmatpush2.bf16.msra.mxu0 %v2183
    %2962 = vmatprep.mubr.bf16.mxu0 %v153
    %2963 = vmatmul.mubr.bf16.gmra.mxu0 %v152
    %v2964 = vpop.f32.mrf.mxu0
    %v2965 = vadd.f32 %v2922, %v2964
    %v2966 = vpop.f32.mrf.mxu0
    %v2967 = vadd.f32 %v2924, %v2966
    %v2968 = vpop.f32.mrf.mxu0
    %v2969 = vadd.f32 %v2926, %v2968
    %v2970 = vpop.f32.mrf.mxu0
    %v2971 = vadd.f32 %v2928, %v2970
    %2972 = vdwg.mxu0
    %2973 = vmatprep.subr.bf16.mxu0 %v2304
    %2974 = vmatpush1.bf16.msra.mxu0 %v2303
    %2975 = vmatprep.subr.bf16.mxu0 %v2296
    %2976 = vmatpush1.bf16.msra.mxu0 %v2295
    %2977 = vmatprep.subr.bf16.mxu0 %v2288
    %2978 = vmatpush1.bf16.msra.mxu0 %v2287
    %2979 = vmatprep.subr.bf16.mxu0 %v2280
    %2980 = vmatpush1.bf16.msra.mxu0 %v2279
    %2981 = vmatprep.subr.bf16.mxu0 %v2272
    %2982 = vmatpush1.bf16.msra.mxu0 %v2271
    %2983 = vmatprep.subr.bf16.mxu0 %v2264
    %2984 = vmatpush1.bf16.msra.mxu0 %v2263
    %2985 = vmatprep.subr.bf16.mxu0 %v2256
    %2986 = vmatpush1.bf16.msra.mxu0 %v2255
    %2987 = vmatprep.subr.bf16.mxu0 %v2248
    %2988 = vmatpush1.bf16.msra.mxu0 %v2247
    %2989 = vmatprep.subr.bf16.mxu0 %v2368
    %2990 = vmatpush2.bf16.msra.mxu0 %v2367
    %2991 = vmatprep.subr.bf16.mxu0 %v2360
    %2992 = vmatpush2.bf16.msra.mxu0 %v2359
    %2993 = vmatprep.subr.bf16.mxu0 %v2352
    %2994 = vmatpush2.bf16.msra.mxu0 %v2351
    %2995 = vmatprep.subr.bf16.mxu0 %v2344
    %2996 = vmatpush2.bf16.msra.mxu0 %v2343
    %2997 = vmatprep.subr.bf16.mxu0 %v2336
    %2998 = vmatpush2.bf16.msra.mxu0 %v2335
    %2999 = vmatprep.subr.bf16.mxu0 %v2328
    %3000 = vmatpush2.bf16.msra.mxu0 %v2327
    %3001 = vmatprep.subr.bf16.mxu0 %v2320
    %3002 = vmatpush2.bf16.msra.mxu0 %v2319
    %3003 = vmatprep.subr.bf16.mxu0 %v2312
    %3004 = vmatpush2.bf16.msra.mxu0 %v2311
    %3005 = vmatprep.mubr.bf16.mxu0 %v155
    %3006 = vmatmul.mubr.bf16.gmra.mxu0 %v154
    %v3007 = vpop.f32.mrf.mxu0
    %v3008 = vadd.f32 %v2965, %v3007
    %v3009 = vpop.f32.mrf.mxu0
    %v3010 = vadd.f32 %v2967, %v3009
    %v3011 = vpop.f32.mrf.mxu0
    %v3012 = vadd.f32 %v2969, %v3011
    %v3013 = vpop.f32.mrf.mxu0
    %v3014 = vadd.f32 %v2971, %v3013
    %3015 = vdwg.mxu0
    %3016 = vmatprep.subr.bf16.mxu0 %v2432
    %3017 = vmatpush1.bf16.msra.mxu0 %v2431
    %3018 = vmatprep.subr.bf16.mxu0 %v2424
    %3019 = vmatpush1.bf16.msra.mxu0 %v2423
    %3020 = vmatprep.subr.bf16.mxu0 %v2416
    %3021 = vmatpush1.bf16.msra.mxu0 %v2415
    %3022 = vmatprep.subr.bf16.mxu0 %v2408
    %3023 = vmatpush1.bf16.msra.mxu0 %v2407
    %3024 = vmatprep.subr.bf16.mxu0 %v2400
    %3025 = vmatpush1.bf16.msra.mxu0 %v2399
    %3026 = vmatprep.subr.bf16.mxu0 %v2392
    %3027 = vmatpush1.bf16.msra.mxu0 %v2391
    %3028 = vmatprep.subr.bf16.mxu0 %v2384
    %3029 = vmatpush1.bf16.msra.mxu0 %v2383
    %3030 = vmatprep.subr.bf16.mxu0 %v2376
    %3031 = vmatpush1.bf16.msra.mxu0 %v2375
    %3032 = vmatprep.subr.bf16.mxu0 0
    %3033 = vmatpush2.bf16.msra.mxu0 0
    %3034 = vmatprep.subr.bf16.mxu0 0
    %3035 = vmatpush2.bf16.msra.mxu0 0
    %3036 = vmatprep.subr.bf16.mxu0 0
    %3037 = vmatpush2.bf16.msra.mxu0 0
    %3038 = vmatprep.subr.bf16.mxu0 0
    %3039 = vmatpush2.bf16.msra.mxu0 0
    %3040 = vmatprep.subr.bf16.mxu0 0
    %3041 = vmatpush2.bf16.msra.mxu0 0
    %3042 = vmatprep.subr.bf16.mxu0 0
    %3043 = vmatpush2.bf16.msra.mxu0 0
    %3044 = vmatprep.subr.bf16.mxu0 0
    %3045 = vmatpush2.bf16.msra.mxu0 0
    %3046 = vmatprep.subr.bf16.mxu0 0
    %3047 = vmatpush2.bf16.msra.mxu0 0
    %3048 = vmatprep.mubr.bf16.mxu0 0
    %3049 = vmatmul.mubr.bf16.gmra.mxu0 %v156
    %v3050 = vpop.f32.mrf.mxu0
    %v3051 = vadd.f32 %v3008, %v3050
    %v3052 = vpop.f32.mrf.mxu0
    %v3053 = vadd.f32 %v3010, %v3052
    %v3054 = vpop.f32.mrf.mxu0
    %v3055 = vadd.f32 %v3012, %v3054
    %v3056 = vpop.f32.mrf.mxu0
    %v3057 = vadd.f32 %v3014, %v3056
    %3058 = vdwg.mxu0
    %3059 = vmatprep.subr.bf16.mxu0 %v2050
    %3060 = vmatpush1.bf16.msra.mxu0 %v2049
    %3061 = vmatprep.subr.bf16.mxu0 %v2042
    %3062 = vmatpush1.bf16.msra.mxu0 %v2041
    %3063 = vmatprep.subr.bf16.mxu0 %v2034
    %3064 = vmatpush1.bf16.msra.mxu0 %v2033
    %3065 = vmatprep.subr.bf16.mxu0 %v2026
    %3066 = vmatpush1.bf16.msra.mxu0 %v2025
    %3067 = vmatprep.subr.bf16.mxu0 %v2018
    %3068 = vmatpush1.bf16.msra.mxu0 %v2017
    %3069 = vmatprep.subr.bf16.mxu0 %v2010
    %3070 = vmatpush1.bf16.msra.mxu0 %v2009
    %3071 = vmatprep.subr.bf16.mxu0 %v2002
    %3072 = vmatpush1.bf16.msra.mxu0 %v2001
    %3073 = vmatprep.subr.bf16.mxu0 %v1994
    %3074 = vmatpush1.bf16.msra.mxu0 %v1993
    %3075 = vmatprep.subr.bf16.mxu0 %v2114
    %3076 = vmatpush2.bf16.msra.mxu0 %v2113
    %3077 = vmatprep.subr.bf16.mxu0 %v2106
    %3078 = vmatpush2.bf16.msra.mxu0 %v2105
    %3079 = vmatprep.subr.bf16.mxu0 %v2098
    %3080 = vmatpush2.bf16.msra.mxu0 %v2097
    %3081 = vmatprep.subr.bf16.mxu0 %v2090
    %3082 = vmatpush2.bf16.msra.mxu0 %v2089
    %3083 = vmatprep.subr.bf16.mxu0 %v2082
    %3084 = vmatpush2.bf16.msra.mxu0 %v2081
    %3085 = vmatprep.subr.bf16.mxu0 %v2074
    %3086 = vmatpush2.bf16.msra.mxu0 %v2073
    %3087 = vmatprep.subr.bf16.mxu0 %v2066
    %3088 = vmatpush2.bf16.msra.mxu0 %v2065
    %3089 = vmatprep.subr.bf16.mxu0 %v2058
    %3090 = vmatpush2.bf16.msra.mxu0 %v2057
    %3091 = vmatprep.mubr.bf16.mxu0 %v151
    %3092 = vmatmul.mubr.bf16.gmra.mxu0 %v150
    %v3093 = vpop.f32.mrf.mxu0
    %v3094 = vadd.f32 %v618, %v3093
    %v3095 = vpop.f32.mrf.mxu0
    %v3096 = vadd.f32 %v622, %v3095
    %v3097 = vpop.f32.mrf.mxu0
    %v3098 = vadd.f32 %v618, %v3097
    %v3099 = vpop.f32.mrf.mxu0
    %v3100 = vadd.f32 %v622, %v3099
    %3101 = vdwg.mxu0
    %3102 = vmatprep.subr.bf16.mxu0 %v2178
    %3103 = vmatpush1.bf16.msra.mxu0 %v2177
    %3104 = vmatprep.subr.bf16.mxu0 %v2170
    %3105 = vmatpush1.bf16.msra.mxu0 %v2169
    %3106 = vmatprep.subr.bf16.mxu0 %v2162
    %3107 = vmatpush1.bf16.msra.mxu0 %v2161
    %3108 = vmatprep.subr.bf16.mxu0 %v2154
    %3109 = vmatpush1.bf16.msra.mxu0 %v2153
    %3110 = vmatprep.subr.bf16.mxu0 %v2146
    %3111 = vmatpush1.bf16.msra.mxu0 %v2145
    %3112 = vmatprep.subr.bf16.mxu0 %v2138
    %3113 = vmatpush1.bf16.msra.mxu0 %v2137
    %3114 = vmatprep.subr.bf16.mxu0 %v2130
    %3115 = vmatpush1.bf16.msra.mxu0 %v2129
    %3116 = vmatprep.subr.bf16.mxu0 %v2122
    %3117 = vmatpush1.bf16.msra.mxu0 %v2121
    %3118 = vmatprep.subr.bf16.mxu0 %v2242
    %3119 = vmatpush2.bf16.msra.mxu0 %v2241
    %3120 = vmatprep.subr.bf16.mxu0 %v2234
    %3121 = vmatpush2.bf16.msra.mxu0 %v2233
    %3122 = vmatprep.subr.bf16.mxu0 %v2226
    %3123 = vmatpush2.bf16.msra.mxu0 %v2225
    %3124 = vmatprep.subr.bf16.mxu0 %v2218
    %3125 = vmatpush2.bf16.msra.mxu0 %v2217
    %3126 = vmatprep.subr.bf16.mxu0 %v2210
    %3127 = vmatpush2.bf16.msra.mxu0 %v2209
    %3128 = vmatprep.subr.bf16.mxu0 %v2202
    %3129 = vmatpush2.bf16.msra.mxu0 %v2201
    %3130 = vmatprep.subr.bf16.mxu0 %v2194
    %3131 = vmatpush2.bf16.msra.mxu0 %v2193
    %3132 = vmatprep.subr.bf16.mxu0 %v2186
    %3133 = vmatpush2.bf16.msra.mxu0 %v2185
    %3134 = vmatprep.mubr.bf16.mxu0 %v153
    %3135 = vmatmul.mubr.bf16.gmra.mxu0 %v152
    %v3136 = vpop.f32.mrf.mxu0
    %v3137 = vadd.f32 %v3094, %v3136
    %v3138 = vpop.f32.mrf.mxu0
    %v3139 = vadd.f32 %v3096, %v3138
    %v3140 = vpop.f32.mrf.mxu0
    %v3141 = vadd.f32 %v3098, %v3140
    %v3142 = vpop.f32.mrf.mxu0
    %v3143 = vadd.f32 %v3100, %v3142
    %3144 = vdwg.mxu0
    %3145 = vmatprep.subr.bf16.mxu0 %v2306
    %3146 = vmatpush1.bf16.msra.mxu0 %v2305
    %3147 = vmatprep.subr.bf16.mxu0 %v2298
    %3148 = vmatpush1.bf16.msra.mxu0 %v2297
    %3149 = vmatprep.subr.bf16.mxu0 %v2290
    %3150 = vmatpush1.bf16.msra.mxu0 %v2289
    %3151 = vmatprep.subr.bf16.mxu0 %v2282
    %3152 = vmatpush1.bf16.msra.mxu0 %v2281
    %3153 = vmatprep.subr.bf16.mxu0 %v2274
    %3154 = vmatpush1.bf16.msra.mxu0 %v2273
    %3155 = vmatprep.subr.bf16.mxu0 %v2266
    %3156 = vmatpush1.bf16.msra.mxu0 %v2265
    %3157 = vmatprep.subr.bf16.mxu0 %v2258
    %3158 = vmatpush1.bf16.msra.mxu0 %v2257
    %3159 = vmatprep.subr.bf16.mxu0 %v2250
    %3160 = vmatpush1.bf16.msra.mxu0 %v2249
    %3161 = vmatprep.subr.bf16.mxu0 %v2370
    %3162 = vmatpush2.bf16.msra.mxu0 %v2369
    %3163 = vmatprep.subr.bf16.mxu0 %v2362
    %3164 = vmatpush2.bf16.msra.mxu0 %v2361
    %3165 = vmatprep.subr.bf16.mxu0 %v2354
    %3166 = vmatpush2.bf16.msra.mxu0 %v2353
    %3167 = vmatprep.subr.bf16.mxu0 %v2346
    %3168 = vmatpush2.bf16.msra.mxu0 %v2345
    %3169 = vmatprep.subr.bf16.mxu0 %v2338
    %3170 = vmatpush2.bf16.msra.mxu0 %v2337
    %3171 = vmatprep.subr.bf16.mxu0 %v2330
    %3172 = vmatpush2.bf16.msra.mxu0 %v2329
    %3173 = vmatprep.subr.bf16.mxu0 %v2322
    %3174 = vmatpush2.bf16.msra.mxu0 %v2321
    %3175 = vmatprep.subr.bf16.mxu0 %v2314
    %3176 = vmatpush2.bf16.msra.mxu0 %v2313
    %3177 = vmatprep.mubr.bf16.mxu0 %v155
    %3178 = vmatmul.mubr.bf16.gmra.mxu0 %v154
    %v3179 = vpop.f32.mrf.mxu0
    %v3180 = vadd.f32 %v3137, %v3179
    %v3181 = vpop.f32.mrf.mxu0
    %v3182 = vadd.f32 %v3139, %v3181
    %v3183 = vpop.f32.mrf.mxu0
    %v3184 = vadd.f32 %v3141, %v3183
    %v3185 = vpop.f32.mrf.mxu0
    %v3186 = vadd.f32 %v3143, %v3185
    %3187 = vdwg.mxu0
    %3188 = vmatprep.subr.bf16.mxu0 %v2434
    %3189 = vmatpush1.bf16.msra.mxu0 %v2433
    %3190 = vmatprep.subr.bf16.mxu0 %v2426
    %3191 = vmatpush1.bf16.msra.mxu0 %v2425
    %3192 = vmatprep.subr.bf16.mxu0 %v2418
    %3193 = vmatpush1.bf16.msra.mxu0 %v2417
    %3194 = vmatprep.subr.bf16.mxu0 %v2410
    %3195 = vmatpush1.bf16.msra.mxu0 %v2409
    %3196 = vmatprep.subr.bf16.mxu0 %v2402
    %3197 = vmatpush1.bf16.msra.mxu0 %v2401
    %3198 = vmatprep.subr.bf16.mxu0 %v2394
    %3199 = vmatpush1.bf16.msra.mxu0 %v2393
    %3200 = vmatprep.subr.bf16.mxu0 %v2386
    %3201 = vmatpush1.bf16.msra.mxu0 %v2385
    %3202 = vmatprep.subr.bf16.mxu0 %v2378
    %3203 = vmatpush1.bf16.msra.mxu0 %v2377
    %3204 = vmatprep.subr.bf16.mxu0 0
    %3205 = vmatpush2.bf16.msra.mxu0 0
    %3206 = vmatprep.subr.bf16.mxu0 0
    %3207 = vmatpush2.bf16.msra.mxu0 0
    %3208 = vmatprep.subr.bf16.mxu0 0
    %3209 = vmatpush2.bf16.msra.mxu0 0
    %3210 = vmatprep.subr.bf16.mxu0 0
    %3211 = vmatpush2.bf16.msra.mxu0 0
    %3212 = vmatprep.subr.bf16.mxu0 0
    %3213 = vmatpush2.bf16.msra.mxu0 0
    %3214 = vmatprep.subr.bf16.mxu0 0
    %3215 = vmatpush2.bf16.msra.mxu0 0
    %3216 = vmatprep.subr.bf16.mxu0 0
    %3217 = vmatpush2.bf16.msra.mxu0 0
    %3218 = vmatprep.subr.bf16.mxu0 0
    %3219 = vmatpush2.bf16.msra.mxu0 0
    %3220 = vmatprep.mubr.bf16.mxu0 0
    %3221 = vmatmul.mubr.bf16.gmra.mxu0 %v156
    %v3222 = vpop.f32.mrf.mxu0
    %v3223 = vadd.f32 %v3180, %v3222
    %v3224 = vpop.f32.mrf.mxu0
    %v3225 = vadd.f32 %v3182, %v3224
    %v3226 = vpop.f32.mrf.mxu0
    %v3227 = vadd.f32 %v3184, %v3226
    %v3228 = vpop.f32.mrf.mxu0
    %v3229 = vadd.f32 %v3186, %v3228
    %3230 = vdwg.mxu0
    %3231 = vmatprep.subr.bf16.mxu0 %v2052
    %3232 = vmatpush1.bf16.msra.mxu0 %v2051
    %3233 = vmatprep.subr.bf16.mxu0 %v2044
    %3234 = vmatpush1.bf16.msra.mxu0 %v2043
    %3235 = vmatprep.subr.bf16.mxu0 %v2036
    %3236 = vmatpush1.bf16.msra.mxu0 %v2035
    %3237 = vmatprep.subr.bf16.mxu0 %v2028
    %3238 = vmatpush1.bf16.msra.mxu0 %v2027
    %3239 = vmatprep.subr.bf16.mxu0 %v2020
    %3240 = vmatpush1.bf16.msra.mxu0 %v2019
    %3241 = vmatprep.subr.bf16.mxu0 %v2012
    %3242 = vmatpush1.bf16.msra.mxu0 %v2011
    %3243 = vmatprep.subr.bf16.mxu0 %v2004
    %3244 = vmatpush1.bf16.msra.mxu0 %v2003
    %3245 = vmatprep.subr.bf16.mxu0 %v1996
    %3246 = vmatpush1.bf16.msra.mxu0 %v1995
    %3247 = vmatprep.subr.bf16.mxu0 %v2116
    %3248 = vmatpush2.bf16.msra.mxu0 %v2115
    %3249 = vmatprep.subr.bf16.mxu0 %v2108
    %3250 = vmatpush2.bf16.msra.mxu0 %v2107
    %3251 = vmatprep.subr.bf16.mxu0 %v2100
    %3252 = vmatpush2.bf16.msra.mxu0 %v2099
    %3253 = vmatprep.subr.bf16.mxu0 %v2092
    %3254 = vmatpush2.bf16.msra.mxu0 %v2091
    %3255 = vmatprep.subr.bf16.mxu0 %v2084
    %3256 = vmatpush2.bf16.msra.mxu0 %v2083
    %3257 = vmatprep.subr.bf16.mxu0 %v2076
    %3258 = vmatpush2.bf16.msra.mxu0 %v2075
    %3259 = vmatprep.subr.bf16.mxu0 %v2068
    %3260 = vmatpush2.bf16.msra.mxu0 %v2067
    %3261 = vmatprep.subr.bf16.mxu0 %v2060
    %3262 = vmatpush2.bf16.msra.mxu0 %v2059
    %3263 = vmatprep.mubr.bf16.mxu0 %v151
    %3264 = vmatmul.mubr.bf16.gmra.mxu0 %v150
    %v3265 = vpop.f32.mrf.mxu0
    %v3266 = vadd.f32 %v626, %v3265
    %v3267 = vpop.f32.mrf.mxu0
    %v3268 = vadd.f32 %v630, %v3267
    %v3269 = vpop.f32.mrf.mxu0
    %v3270 = vadd.f32 %v626, %v3269
    %v3271 = vpop.f32.mrf.mxu0
    %v3272 = vadd.f32 %v630, %v3271
    %3273 = vdwg.mxu0
    %3274 = vmatprep.subr.bf16.mxu0 %v2180
    %3275 = vmatpush1.bf16.msra.mxu0 %v2179
    %3276 = vmatprep.subr.bf16.mxu0 %v2172
    %3277 = vmatpush1.bf16.msra.mxu0 %v2171
    %3278 = vmatprep.subr.bf16.mxu0 %v2164
    %3279 = vmatpush1.bf16.msra.mxu0 %v2163
    %3280 = vmatprep.subr.bf16.mxu0 %v2156
    %3281 = vmatpush1.bf16.msra.mxu0 %v2155
    %3282 = vmatprep.subr.bf16.mxu0 %v2148
    %3283 = vmatpush1.bf16.msra.mxu0 %v2147
    %3284 = vmatprep.subr.bf16.mxu0 %v2140
    %3285 = vmatpush1.bf16.msra.mxu0 %v2139
    %3286 = vmatprep.subr.bf16.mxu0 %v2132
    %3287 = vmatpush1.bf16.msra.mxu0 %v2131
    %3288 = vmatprep.subr.bf16.mxu0 %v2124
    %3289 = vmatpush1.bf16.msra.mxu0 %v2123
    %3290 = vmatprep.subr.bf16.mxu0 %v2244
    %3291 = vmatpush2.bf16.msra.mxu0 %v2243
    %3292 = vmatprep.subr.bf16.mxu0 %v2236
    %3293 = vmatpush2.bf16.msra.mxu0 %v2235
    %3294 = vmatprep.subr.bf16.mxu0 %v2228
    %3295 = vmatpush2.bf16.msra.mxu0 %v2227
    %3296 = vmatprep.subr.bf16.mxu0 %v2220
    %3297 = vmatpush2.bf16.msra.mxu0 %v2219
    %3298 = vmatprep.subr.bf16.mxu0 %v2212
    %3299 = vmatpush2.bf16.msra.mxu0 %v2211
    %3300 = vmatprep.subr.bf16.mxu0 %v2204
    %3301 = vmatpush2.bf16.msra.mxu0 %v2203
    %3302 = vmatprep.subr.bf16.mxu0 %v2196
    %3303 = vmatpush2.bf16.msra.mxu0 %v2195
    %3304 = vmatprep.subr.bf16.mxu0 %v2188
    %3305 = vmatpush2.bf16.msra.mxu0 %v2187
    %3306 = vmatprep.mubr.bf16.mxu0 %v153
    %3307 = vmatmul.mubr.bf16.gmra.mxu0 %v152
    %v3308 = vpop.f32.mrf.mxu0
    %v3309 = vadd.f32 %v3266, %v3308
    %v3310 = vpop.f32.mrf.mxu0
    %v3311 = vadd.f32 %v3268, %v3310
    %v3312 = vpop.f32.mrf.mxu0
    %v3313 = vadd.f32 %v3270, %v3312
    %v3314 = vpop.f32.mrf.mxu0
    %v3315 = vadd.f32 %v3272, %v3314
    %3316 = vdwg.mxu0
    %3317 = vmatprep.subr.bf16.mxu0 %v2308
    %3318 = vmatpush1.bf16.msra.mxu0 %v2307
    %3319 = vmatprep.subr.bf16.mxu0 %v2300
    %3320 = vmatpush1.bf16.msra.mxu0 %v2299
    %3321 = vmatprep.subr.bf16.mxu0 %v2292
    %3322 = vmatpush1.bf16.msra.mxu0 %v2291
    %3323 = vmatprep.subr.bf16.mxu0 %v2284
    %3324 = vmatpush1.bf16.msra.mxu0 %v2283
    %3325 = vmatprep.subr.bf16.mxu0 %v2276
    %3326 = vmatpush1.bf16.msra.mxu0 %v2275
    %3327 = vmatprep.subr.bf16.mxu0 %v2268
    %3328 = vmatpush1.bf16.msra.mxu0 %v2267
    %3329 = vmatprep.subr.bf16.mxu0 %v2260
    %3330 = vmatpush1.bf16.msra.mxu0 %v2259
    %3331 = vmatprep.subr.bf16.mxu0 %v2252
    %3332 = vmatpush1.bf16.msra.mxu0 %v2251
    %3333 = vmatprep.subr.bf16.mxu0 %v2372
    %3334 = vmatpush2.bf16.msra.mxu0 %v2371
    %3335 = vmatprep.subr.bf16.mxu0 %v2364
    %3336 = vmatpush2.bf16.msra.mxu0 %v2363
    %3337 = vmatprep.subr.bf16.mxu0 %v2356
    %3338 = vmatpush2.bf16.msra.mxu0 %v2355
    %3339 = vmatprep.subr.bf16.mxu0 %v2348
    %3340 = vmatpush2.bf16.msra.mxu0 %v2347
    %3341 = vmatprep.subr.bf16.mxu0 %v2340
    %3342 = vmatpush2.bf16.msra.mxu0 %v2339
    %3343 = vmatprep.subr.bf16.mxu0 %v2332
    %3344 = vmatpush2.bf16.msra.mxu0 %v2331
    %3345 = vmatprep.subr.bf16.mxu0 %v2324
    %3346 = vmatpush2.bf16.msra.mxu0 %v2323
    %3347 = vmatprep.subr.bf16.mxu0 %v2316
    %3348 = vmatpush2.bf16.msra.mxu0 %v2315
    %3349 = vmatprep.mubr.bf16.mxu0 %v155
    %3350 = vmatmul.mubr.bf16.gmra.mxu0 %v154
    %v3351 = vpop.f32.mrf.mxu0
    %v3352 = vadd.f32 %v3309, %v3351
    %v3353 = vpop.f32.mrf.mxu0
    %v3354 = vadd.f32 %v3311, %v3353
    %v3355 = vpop.f32.mrf.mxu0
    %v3356 = vadd.f32 %v3313, %v3355
    %v3357 = vpop.f32.mrf.mxu0
    %v3358 = vadd.f32 %v3315, %v3357
    %3359 = vdwg.mxu0
    %3360 = vmatprep.subr.bf16.mxu0 %v2436
    %3361 = vmatpush1.bf16.msra.mxu0 %v2435
    %3362 = vmatprep.subr.bf16.mxu0 %v2428
    %3363 = vmatpush1.bf16.msra.mxu0 %v2427
    %3364 = vmatprep.subr.bf16.mxu0 %v2420
    %3365 = vmatpush1.bf16.msra.mxu0 %v2419
    %3366 = vmatprep.subr.bf16.mxu0 %v2412
    %3367 = vmatpush1.bf16.msra.mxu0 %v2411
    %3368 = vmatprep.subr.bf16.mxu0 %v2404
    %3369 = vmatpush1.bf16.msra.mxu0 %v2403
    %3370 = vmatprep.subr.bf16.mxu0 %v2396
    %3371 = vmatpush1.bf16.msra.mxu0 %v2395
    %3372 = vmatprep.subr.bf16.mxu0 %v2388
    %3373 = vmatpush1.bf16.msra.mxu0 %v2387
    %3374 = vmatprep.subr.bf16.mxu0 %v2380
    %3375 = vmatpush1.bf16.msra.mxu0 %v2379
    %3376 = vmatprep.subr.bf16.mxu0 0
    %3377 = vmatpush2.bf16.msra.mxu0 0
    %3378 = vmatprep.subr.bf16.mxu0 0
    %3379 = vmatpush2.bf16.msra.mxu0 0
    %3380 = vmatprep.subr.bf16.mxu0 0
    %3381 = vmatpush2.bf16.msra.mxu0 0
    %3382 = vmatprep.subr.bf16.mxu0 0
    %3383 = vmatpush2.bf16.msra.mxu0 0
    %3384 = vmatprep.subr.bf16.mxu0 0
    %3385 = vmatpush2.bf16.msra.mxu0 0
    %3386 = vmatprep.subr.bf16.mxu0 0
    %3387 = vmatpush2.bf16.msra.mxu0 0
    %3388 = vmatprep.subr.bf16.mxu0 0
    %3389 = vmatpush2.bf16.msra.mxu0 0
    %3390 = vmatprep.subr.bf16.mxu0 0
    %3391 = vmatpush2.bf16.msra.mxu0 0
    %3392 = vmatprep.mubr.bf16.mxu0 0
    %3393 = vmatmul.mubr.bf16.gmra.mxu0 %v156
    %v3394 = vpop.f32.mrf.mxu0
    %v3395 = vadd.f32 %v3352, %v3394
    %v3396 = vpop.f32.mrf.mxu0
    %v3397 = vadd.f32 %v3354, %v3396
    %v3398 = vpop.f32.mrf.mxu0
    %v3399 = vadd.f32 %v3356, %v3398
    %v3400 = vpop.f32.mrf.mxu0
    %v3401 = vadd.f32 %v3358, %v3400
    %3402 = vdwg.mxu0
    %3403 = vmatprep.subr.bf16.mxu0 %v2054
    %3404 = vmatpush1.bf16.msra.mxu0 %v2053
    %3405 = vmatprep.subr.bf16.mxu0 %v2046
    %3406 = vmatpush1.bf16.msra.mxu0 %v2045
    %3407 = vmatprep.subr.bf16.mxu0 %v2038
    %3408 = vmatpush1.bf16.msra.mxu0 %v2037
    %3409 = vmatprep.subr.bf16.mxu0 %v2030
    %3410 = vmatpush1.bf16.msra.mxu0 %v2029
    %3411 = vmatprep.subr.bf16.mxu0 %v2022
    %3412 = vmatpush1.bf16.msra.mxu0 %v2021
    %3413 = vmatprep.subr.bf16.mxu0 %v2014
    %3414 = vmatpush1.bf16.msra.mxu0 %v2013
    %3415 = vmatprep.subr.bf16.mxu0 %v2006
    %3416 = vmatpush1.bf16.msra.mxu0 %v2005
    %3417 = vmatprep.subr.bf16.mxu0 %v1998
    %3418 = vmatpush1.bf16.msra.mxu0 %v1997
    %3419 = vmatprep.subr.bf16.mxu0 %v2118
    %3420 = vmatpush2.bf16.msra.mxu0 %v2117
    %3421 = vmatprep.subr.bf16.mxu0 %v2110
    %3422 = vmatpush2.bf16.msra.mxu0 %v2109
    %3423 = vmatprep.subr.bf16.mxu0 %v2102
    %3424 = vmatpush2.bf16.msra.mxu0 %v2101
    %3425 = vmatprep.subr.bf16.mxu0 %v2094
    %3426 = vmatpush2.bf16.msra.mxu0 %v2093
    %3427 = vmatprep.subr.bf16.mxu0 %v2086
    %3428 = vmatpush2.bf16.msra.mxu0 %v2085
    %3429 = vmatprep.subr.bf16.mxu0 %v2078
    %3430 = vmatpush2.bf16.msra.mxu0 %v2077
    %3431 = vmatprep.subr.bf16.mxu0 %v2070
    %3432 = vmatpush2.bf16.msra.mxu0 %v2069
    %3433 = vmatprep.subr.bf16.mxu0 %v2062
    %3434 = vmatpush2.bf16.msra.mxu0 %v2061
    %3435 = vmatprep.mubr.bf16.mxu0 %v151
    %3436 = vmatmul.mubr.bf16.gmra.mxu0 %v150
    %v3437 = vpop.f32.mrf.mxu0
    %v3438 = vadd.f32 %v634, %v3437
    %v3439 = vpop.f32.mrf.mxu0
    %v3440 = vadd.f32 %v638, %v3439
    %v3441 = vpop.f32.mrf.mxu0
    %v3442 = vadd.f32 %v634, %v3441
    %v3443 = vpop.f32.mrf.mxu0
    %v3444 = vadd.f32 %v638, %v3443
    %3445 = vdwg.mxu0
    %3446 = vmatprep.subr.bf16.mxu0 %v2182
    %3447 = vmatpush1.bf16.msra.mxu0 %v2181
    %3448 = vmatprep.subr.bf16.mxu0 %v2174
    %3449 = vmatpush1.bf16.msra.mxu0 %v2173
    %3450 = vmatprep.subr.bf16.mxu0 %v2166
    %3451 = vmatpush1.bf16.msra.mxu0 %v2165
    %3452 = vmatprep.subr.bf16.mxu0 %v2158
    %3453 = vmatpush1.bf16.msra.mxu0 %v2157
    %3454 = vmatprep.subr.bf16.mxu0 %v2150
    %3455 = vmatpush1.bf16.msra.mxu0 %v2149
    %3456 = vmatprep.subr.bf16.mxu0 %v2142
    %3457 = vmatpush1.bf16.msra.mxu0 %v2141
    %3458 = vmatprep.subr.bf16.mxu0 %v2134
    %3459 = vmatpush1.bf16.msra.mxu0 %v2133
    %3460 = vmatprep.subr.bf16.mxu0 %v2126
    %3461 = vmatpush1.bf16.msra.mxu0 %v2125
    %3462 = vmatprep.subr.bf16.mxu0 %v2246
    %3463 = vmatpush2.bf16.msra.mxu0 %v2245
    %3464 = vmatprep.subr.bf16.mxu0 %v2238
    %3465 = vmatpush2.bf16.msra.mxu0 %v2237
    %3466 = vmatprep.subr.bf16.mxu0 %v2230
    %3467 = vmatpush2.bf16.msra.mxu0 %v2229
    %3468 = vmatprep.subr.bf16.mxu0 %v2222
    %3469 = vmatpush2.bf16.msra.mxu0 %v2221
    %3470 = vmatprep.subr.bf16.mxu0 %v2214
    %3471 = vmatpush2.bf16.msra.mxu0 %v2213
    %3472 = vmatprep.subr.bf16.mxu0 %v2206
    %3473 = vmatpush2.bf16.msra.mxu0 %v2205
    %3474 = vmatprep.subr.bf16.mxu0 %v2198
    %3475 = vmatpush2.bf16.msra.mxu0 %v2197
    %3476 = vmatprep.subr.bf16.mxu0 %v2190
    %3477 = vmatpush2.bf16.msra.mxu0 %v2189
    %3478 = vmatprep.mubr.bf16.mxu0 %v153
    %3479 = vmatmul.mubr.bf16.gmra.mxu0 %v152
    %v3480 = vpop.f32.mrf.mxu0
    %v3481 = vadd.f32 %v3438, %v3480
    %v3482 = vpop.f32.mrf.mxu0
    %v3483 = vadd.f32 %v3440, %v3482
    %v3484 = vpop.f32.mrf.mxu0
    %v3485 = vadd.f32 %v3442, %v3484
    %v3486 = vpop.f32.mrf.mxu0
    %v3487 = vadd.f32 %v3444, %v3486
    %3488 = vdwg.mxu0
    %3489 = vmatprep.subr.bf16.mxu0 %v2310
    %3490 = vmatpush1.bf16.msra.mxu0 %v2309
    %3491 = vmatprep.subr.bf16.mxu0 %v2302
    %3492 = vmatpush1.bf16.msra.mxu0 %v2301
    %3493 = vmatprep.subr.bf16.mxu0 %v2294
    %3494 = vmatpush1.bf16.msra.mxu0 %v2293
    %3495 = vmatprep.subr.bf16.mxu0 %v2286
    %3496 = vmatpush1.bf16.msra.mxu0 %v2285
    %3497 = vmatprep.subr.bf16.mxu0 %v2278
    %3498 = vmatpush1.bf16.msra.mxu0 %v2277
    %3499 = vmatprep.subr.bf16.mxu0 %v2270
    %3500 = vmatpush1.bf16.msra.mxu0 %v2269
    %3501 = vmatprep.subr.bf16.mxu0 %v2262
    %3502 = vmatpush1.bf16.msra.mxu0 %v2261
    %3503 = vmatprep.subr.bf16.mxu0 %v2254
    %3504 = vmatpush1.bf16.msra.mxu0 %v2253
    %3505 = vmatprep.subr.bf16.mxu0 %v2374
    %3506 = vmatpush2.bf16.msra.mxu0 %v2373
    %3507 = vmatprep.subr.bf16.mxu0 %v2366
    %3508 = vmatpush2.bf16.msra.mxu0 %v2365
    %3509 = vmatprep.subr.bf16.mxu0 %v2358
    %3510 = vmatpush2.bf16.msra.mxu0 %v2357
    %3511 = vmatprep.subr.bf16.mxu0 %v2350
    %3512 = vmatpush2.bf16.msra.mxu0 %v2349
    %3513 = vmatprep.subr.bf16.mxu0 %v2342
    %3514 = vmatpush2.bf16.msra.mxu0 %v2341
    %3515 = vmatprep.subr.bf16.mxu0 %v2334
    %3516 = vmatpush2.bf16.msra.mxu0 %v2333
    %3517 = vmatprep.subr.bf16.mxu0 %v2326
    %3518 = vmatpush2.bf16.msra.mxu0 %v2325
    %3519 = vmatprep.subr.bf16.mxu0 %v2318
    %3520 = vmatpush2.bf16.msra.mxu0 %v2317
    %3521 = vmatprep.mubr.bf16.mxu0 %v155
    %3522 = vmatmul.mubr.bf16.gmra.mxu0 %v154
    %v3523 = vpop.f32.mrf.mxu0
    %v3524 = vadd.f32 %v3481, %v3523
    %v3525 = vpop.f32.mrf.mxu0
    %v3526 = vadd.f32 %v3483, %v3525
    %v3527 = vpop.f32.mrf.mxu0
    %v3528 = vadd.f32 %v3485, %v3527
    %v3529 = vpop.f32.mrf.mxu0
    %v3530 = vadd.f32 %v3487, %v3529
    %3531 = vdwg.mxu0
    %3532 = vmatprep.subr.bf16.mxu0 %v2438
    %3533 = vmatpush1.bf16.msra.mxu0 %v2437
    %3534 = vmatprep.subr.bf16.mxu0 %v2430
    %3535 = vmatpush1.bf16.msra.mxu0 %v2429
    %3536 = vmatprep.subr.bf16.mxu0 %v2422
    %3537 = vmatpush1.bf16.msra.mxu0 %v2421
    %3538 = vmatprep.subr.bf16.mxu0 %v2414
    %3539 = vmatpush1.bf16.msra.mxu0 %v2413
    %3540 = vmatprep.subr.bf16.mxu0 %v2406
    %3541 = vmatpush1.bf16.msra.mxu0 %v2405
    %3542 = vmatprep.subr.bf16.mxu0 %v2398
    %3543 = vmatpush1.bf16.msra.mxu0 %v2397
    %3544 = vmatprep.subr.bf16.mxu0 %v2390
    %3545 = vmatpush1.bf16.msra.mxu0 %v2389
    %3546 = vmatprep.subr.bf16.mxu0 %v2382
    %3547 = vmatpush1.bf16.msra.mxu0 %v2381
    %3548 = vmatprep.subr.bf16.mxu0 0
    %3549 = vmatpush2.bf16.msra.mxu0 0
    %3550 = vmatprep.subr.bf16.mxu0 0
    %3551 = vmatpush2.bf16.msra.mxu0 0
    %3552 = vmatprep.subr.bf16.mxu0 0
    %3553 = vmatpush2.bf16.msra.mxu0 0
    %3554 = vmatprep.subr.bf16.mxu0 0
    %3555 = vmatpush2.bf16.msra.mxu0 0
    %3556 = vmatprep.subr.bf16.mxu0 0
    %3557 = vmatpush2.bf16.msra.mxu0 0
    %3558 = vmatprep.subr.bf16.mxu0 0
    %3559 = vmatpush2.bf16.msra.mxu0 0
    %3560 = vmatprep.subr.bf16.mxu0 0
    %3561 = vmatpush2.bf16.msra.mxu0 0
    %3562 = vmatprep.subr.bf16.mxu0 0
    %3563 = vmatpush2.bf16.msra.mxu0 0
    %3564 = vmatprep.mubr.bf16.mxu0 0
    %3565 = vmatmul.mubr.bf16.gmra.mxu0 %v156
    %v3566 = vpop.f32.mrf.mxu0
    %v3567 = vadd.f32 %v3524, %v3566
    %v3568 = vpop.f32.mrf.mxu0
    %v3569 = vadd.f32 %v3526, %v3568
    %v3570 = vpop.f32.mrf.mxu0
    %v3571 = vadd.f32 %v3528, %v3570
    %v3572 = vpop.f32.mrf.mxu0
    %v3573 = vadd.f32 %v3530, %v3572
    %3574 = vdwg.mxu0
    %vm3575 = vcmp.gt.f32.partialorder %v3051, 0.0
    %vm3576 = vcmp.gt.f32.partialorder %v3053, 0.0
    %vm3577 = vcmp.gt.f32.partialorder %v3223, 0.0
    %vm3578 = vcmp.gt.f32.partialorder %v3225, 0.0
    %vm3579 = vcmp.gt.f32.partialorder %v3395, 0.0
    %vm3580 = vcmp.gt.f32.partialorder %v3397, 0.0
    %vm3581 = vcmp.gt.f32.partialorder %v3567, 0.0
    %vm3582 = vcmp.gt.f32.partialorder %v3569, 0.0
    %vm3583 = vcmp.gt.f32.partialorder %v3055, 0.0
    %vm3584 = vcmp.gt.f32.partialorder %v3057, 0.0
    %vm3585 = vcmp.gt.f32.partialorder %v3227, 0.0
    %vm3586 = vcmp.gt.f32.partialorder %v3229, 0.0
    %vm3587 = vcmp.gt.f32.partialorder %v3399, 0.0
    %vm3588 = vcmp.gt.f32.partialorder %v3401, 0.0
    %vm3589 = vcmp.gt.f32.partialorder %v3571, 0.0
    %vm3590 = vcmp.gt.f32.partialorder %v3573, 0.0
    %v3591 = vmul.f32 %v3051, 0.2
    %v3592 = vmul.f32 %v3053, 0.2
    %v3593 = vmul.f32 %v3223, 0.2
    %v3594 = vmul.f32 %v3225, 0.2
    %v3595 = vmul.f32 %v3395, 0.2
    %v3596 = vmul.f32 %v3397, 0.2
    %v3597 = vmul.f32 %v3567, 0.2
    %v3598 = vmul.f32 %v3569, 0.2
    %v3599 = vmul.f32 %v3055, 0.2
    %v3600 = vmul.f32 %v3057, 0.2
    %v3601 = vmul.f32 %v3227, 0.2
    %v3602 = vmul.f32 %v3229, 0.2
    %v3603 = vmul.f32 %v3399, 0.2
    %v3604 = vmul.f32 %v3401, 0.2
    %v3605 = vmul.f32 %v3571, 0.2
    %v3606 = vmul.f32 %v3573, 0.2
    %v3607 = vsel %vm3575, %v3051, %v3591
    %v3608 = vsel %vm3576, %v3053, %v3592
    %v3609 = vsel %vm3577, %v3223, %v3593
    %v3610 = vsel %vm3578, %v3225, %v3594
    %v3611 = vsel %vm3579, %v3395, %v3595
    %v3612 = vsel %vm3580, %v3397, %v3596
    %v3613 = vsel %vm3581, %v3567, %v3597
    %v3614 = vsel %vm3582, %v3569, %v3598
    %v3615 = vsel %vm3583, %v3055, %v3599
    %v3616 = vsel %vm3584, %v3057, %v3600
    %v3617 = vsel %vm3585, %v3227, %v3601
    %v3618 = vsel %vm3586, %v3229, %v3602
    %v3619 = vsel %vm3587, %v3399, %v3603
    %v3620 = vsel %vm3588, %v3401, %v3604
    %v3621 = vsel %vm3589, %v3571, %v3605
    %v3622 = vsel %vm3590, %v3573, %v3606
    %v3623 = vpack.c.bf16 %v3615, %v3607
    %v3624 = vpack.c.bf16 %v3616, %v3608
    %v3625 = vpack.c.bf16 %v3617, %v3609
    %v3626 = vpack.c.bf16 %v3618, %v3610
    %v3627 = vpack.c.bf16 %v3619, %v3611
    %v3628 = vpack.c.bf16 %v3620, %v3612
    %v3629 = vpack.c.bf16 %v3621, %v3613
    %v3630 = vpack.c.bf16 %v3622, %v3614
    %v3631 = vld [vmem:[#allocation8] sm:$0xff]
    %v3632 = vld [vmem:[#allocation8 + $0x8] sm:$0xff]
    %v3633 = vld [vmem:[#allocation8 + $0x10] sm:$0xff]
    %v3634 = vld [vmem:[#allocation8 + $0x18] sm:$0xff]
    %v3635 = vld [vmem:[#allocation8 + $0x20] sm:$0xff]
    %v3636 = vld [vmem:[#allocation8 + $0x28] sm:$0xff]
    %v3637 = vld [vmem:[#allocation8 + $0x30] sm:$0xff]
    %v3638 = vld [vmem:[#allocation8 + $0x38] sm:$0xff]
    %v3639 = vld [vmem:[#allocation8 + $0x40] sm:$0xff]
    %v3640 = vld [vmem:[#allocation8 + $0x48] sm:$0xff]
    %v3641 = vld [vmem:[#allocation8 + $0x50] sm:$0xff]
    %v3642 = vld [vmem:[#allocation8 + $0x58] sm:$0xff]
    %v3643 = vld [vmem:[#allocation8 + $0x60] sm:$0xff]
    %v3644 = vld [vmem:[#allocation8 + $0x68] sm:$0xff]
    %v3645 = vld [vmem:[#allocation8 + $0x70] sm:$0xff]
    %v3646 = vld [vmem:[#allocation8 + $0x78] sm:$0xff]
    %v3647 = vld [vmem:[#allocation8 + $0x80] sm:$0xff]
    %v3648 = vld [vmem:[#allocation8 + $0x88] sm:$0xff]
    %v3649 = vld [vmem:[#allocation8 + $0x90] sm:$0xff]
    %v3650 = vld [vmem:[#allocation8 + $0x98] sm:$0xff]
    %v3651 = vld [vmem:[#allocation8 + $0xa0] sm:$0xff]
    %v3652 = vld [vmem:[#allocation8 + $0xa8] sm:$0xff]
    %v3653 = vld [vmem:[#allocation8 + $0xb0] sm:$0xff]
    %v3654 = vld [vmem:[#allocation8 + $0xb8] sm:$0xff]
    %v3655 = vld [vmem:[#allocation8 + $0xc0] sm:$0xff]
    %v3656 = vld [vmem:[#allocation8 + $0xc8] sm:$0xff]
    %v3657 = vld [vmem:[#allocation8 + $0xd0] sm:$0xff]
    %v3658 = vld [vmem:[#allocation8 + $0xd8] sm:$0xff]
    %v3659 = vld [vmem:[#allocation8 + $0xe0] sm:$0xff]
    %v3660 = vld [vmem:[#allocation8 + $0xe8] sm:$0xff]
    %v3661 = vld [vmem:[#allocation8 + $0xf0] sm:$0xff]
    %v3662 = vld [vmem:[#allocation8 + $0xf8] sm:$0xff]
    %v3663 = vld [vmem:[#allocation8 + $0x100] sm:$0xff]
    %v3664 = vld [vmem:[#allocation8 + $0x108] sm:$0xff]
    %v3665 = vld [vmem:[#allocation8 + $0x110] sm:$0xff]
    %v3666 = vld [vmem:[#allocation8 + $0x118] sm:$0xff]
    %v3667 = vld [vmem:[#allocation8 + $0x120] sm:$0xff]
    %v3668 = vld [vmem:[#allocation8 + $0x128] sm:$0xff]
    %v3669 = vld [vmem:[#allocation8 + $0x130] sm:$0xff]
    %v3670 = vld [vmem:[#allocation8 + $0x138] sm:$0xff]
    %v3671 = vld [vmem:[#allocation8 + $0x140] sm:$0xff]
    %v3672 = vld [vmem:[#allocation8 + $0x148] sm:$0xff]
    %v3673 = vld [vmem:[#allocation8 + $0x150] sm:$0xff]
    %v3674 = vld [vmem:[#allocation8 + $0x158] sm:$0xff]
    %v3675 = vld [vmem:[#allocation8 + $0x160] sm:$0xff]
    %v3676 = vld [vmem:[#allocation8 + $0x168] sm:$0xff]
    %v3677 = vld [vmem:[#allocation8 + $0x170] sm:$0xff]
    %v3678 = vld [vmem:[#allocation8 + $0x178] sm:$0xff]
    %v3679 = vld [vmem:[#allocation8 + $0x180] sm:$0xff]
    %v3680 = vld [vmem:[#allocation8 + $0x188] sm:$0xff]
    %v3681 = vld [vmem:[#allocation8 + $0x190] sm:$0xff]
    %v3682 = vld [vmem:[#allocation8 + $0x198] sm:$0xff]
    %v3683 = vld [vmem:[#allocation8 + $0x1a0] sm:$0xff]
    %v3684 = vld [vmem:[#allocation8 + $0x1a8] sm:$0xff]
    %v3685 = vld [vmem:[#allocation8 + $0x1b0] sm:$0xff]
    %v3686 = vld [vmem:[#allocation8 + $0x1b8] sm:$0xff]
    %v3687 = vld [vmem:[#allocation8 + $0x1c0] sm:$0xff]
    %v3688 = vld [vmem:[#allocation8 + $0x1c8] sm:$0xff]
    %v3689 = vld [vmem:[#allocation8 + $0x1d0] sm:$0xff]
    %v3690 = vld [vmem:[#allocation8 + $0x1d8] sm:$0xff]
    %v3691 = vld [vmem:[#allocation8 + $0x1e0] sm:$0xff]
    %v3692 = vld [vmem:[#allocation8 + $0x1e8] sm:$0xff]
    %v3693 = vld [vmem:[#allocation8 + $0x1f0] sm:$0xff]
    %v3694 = vld [vmem:[#allocation8 + $0x1f8] sm:$0xff]
    %v3695 = vld [vmem:[#allocation8 + $0x200] sm:$0xff]
    %v3696 = vld [vmem:[#allocation8 + $0x208] sm:$0xff]
    %v3697 = vld [vmem:[#allocation8 + $0x210] sm:$0xff]
    %v3698 = vld [vmem:[#allocation8 + $0x218] sm:$0xff]
    %v3699 = vld [vmem:[#allocation8 + $0x220] sm:$0xff]
    %v3700 = vld [vmem:[#allocation8 + $0x228] sm:$0xff]
    %v3701 = vld [vmem:[#allocation8 + $0x230] sm:$0xff]
    %v3702 = vld [vmem:[#allocation8 + $0x238] sm:$0xff]
    %v3703 = vld [vmem:[#allocation8 + $0x240] sm:$0xff]
    %v3704 = vld [vmem:[#allocation8 + $0x248] sm:$0xff]
    %v3705 = vld [vmem:[#allocation8 + $0x250] sm:$0xff]
    %v3706 = vld [vmem:[#allocation8 + $0x258] sm:$0xff]
    %v3707 = vld [vmem:[#allocation8 + $0x260] sm:$0xff]
    %v3708 = vld [vmem:[#allocation8 + $0x268] sm:$0xff]
    %v3709 = vld [vmem:[#allocation8 + $0x270] sm:$0xff]
    %v3710 = vld [vmem:[#allocation8 + $0x278] sm:$0xff]
    %v3711 = vld [vmem:[#allocation8 + $0x280] sm:$0xff]
    %v3712 = vld [vmem:[#allocation8 + $0x288] sm:$0xff]
    %v3713 = vld [vmem:[#allocation8 + $0x290] sm:$0xff]
    %v3714 = vld [vmem:[#allocation8 + $0x298] sm:$0xff]
    %v3715 = vld [vmem:[#allocation8 + $0x2a0] sm:$0xff]
    %v3716 = vld [vmem:[#allocation8 + $0x2a8] sm:$0xff]
    %v3717 = vld [vmem:[#allocation8 + $0x2b0] sm:$0xff]
    %v3718 = vld [vmem:[#allocation8 + $0x2b8] sm:$0xff]
    %v3719 = vld [vmem:[#allocation8 + $0x2c0] sm:$0xff]
    %v3720 = vld [vmem:[#allocation8 + $0x2c8] sm:$0xff]
    %v3721 = vld [vmem:[#allocation8 + $0x2d0] sm:$0xff]
    %v3722 = vld [vmem:[#allocation8 + $0x2d8] sm:$0xff]
    %v3723 = vld [vmem:[#allocation8 + $0x2e0] sm:$0xff]
    %v3724 = vld [vmem:[#allocation8 + $0x2e8] sm:$0xff]
    %v3725 = vld [vmem:[#allocation8 + $0x2f0] sm:$0xff]
    %v3726 = vld [vmem:[#allocation8 + $0x2f8] sm:$0xff]
    %v3727 = vld [vmem:[#allocation8 + $0x300] sm:$0xff]
    %v3728 = vld [vmem:[#allocation8 + $0x308] sm:$0xff]
    %v3729 = vld [vmem:[#allocation8 + $0x310] sm:$0xff]
    %v3730 = vld [vmem:[#allocation8 + $0x318] sm:$0xff]
    %v3731 = vld [vmem:[#allocation8 + $0x320] sm:$0xff]
    %v3732 = vld [vmem:[#allocation8 + $0x328] sm:$0xff]
    %v3733 = vld [vmem:[#allocation8 + $0x330] sm:$0xff]
    %v3734 = vld [vmem:[#allocation8 + $0x338] sm:$0xff]
    %v3735 = vld [vmem:[#allocation8 + $0x340] sm:$0xff]
    %v3736 = vld [vmem:[#allocation8 + $0x348] sm:$0xff]
    %v3737 = vld [vmem:[#allocation8 + $0x350] sm:$0xff]
    %v3738 = vld [vmem:[#allocation8 + $0x358] sm:$0xff]
    %v3739 = vld [vmem:[#allocation8 + $0x360] sm:$0xff]
    %v3740 = vld [vmem:[#allocation8 + $0x368] sm:$0xff]
    %v3741 = vld [vmem:[#allocation8 + $0x370] sm:$0xff]
    %v3742 = vld [vmem:[#allocation8 + $0x378] sm:$0xff]
    %v3743 = vld [vmem:[#allocation8 + $0x380] sm:$0xff]
    %v3744 = vld [vmem:[#allocation8 + $0x388] sm:$0xff]
    %v3745 = vld [vmem:[#allocation8 + $0x390] sm:$0xff]
    %v3746 = vld [vmem:[#allocation8 + $0x398] sm:$0xff]
    %v3747 = vld [vmem:[#allocation8 + $0x3a0] sm:$0xff]
    %v3748 = vld [vmem:[#allocation8 + $0x3a8] sm:$0xff]
    %v3749 = vld [vmem:[#allocation8 + $0x3b0] sm:$0xff]
    %v3750 = vld [vmem:[#allocation8 + $0x3b8] sm:$0xff]
    %v3751 = vld [vmem:[#allocation8 + $0x3c0] sm:$0xff]
    %v3752 = vld [vmem:[#allocation8 + $0x3c8] sm:$0xff]
    %v3753 = vld [vmem:[#allocation8 + $0x3d0] sm:$0xff]
    %v3754 = vld [vmem:[#allocation8 + $0x3d8] sm:$0xff]
    %v3755 = vld [vmem:[#allocation8 + $0x3e0] sm:$0xff]
    %v3756 = vld [vmem:[#allocation8 + $0x3e8] sm:$0xff]
    %v3757 = vld [vmem:[#allocation8 + $0x3f0] sm:$0xff]
    %v3758 = vld [vmem:[#allocation8 + $0x3f8] sm:$0xff]
    %v3759 = vld [vmem:[#allocation8 + $0x400] sm:$0xff]
    %v3760 = vld [vmem:[#allocation8 + $0x408] sm:$0xff]
    %v3761 = vld [vmem:[#allocation8 + $0x410] sm:$0xff]
    %v3762 = vld [vmem:[#allocation8 + $0x418] sm:$0xff]
    %v3763 = vld [vmem:[#allocation8 + $0x420] sm:$0xff]
    %v3764 = vld [vmem:[#allocation8 + $0x428] sm:$0xff]
    %v3765 = vld [vmem:[#allocation8 + $0x430] sm:$0xff]
    %v3766 = vld [vmem:[#allocation8 + $0x438] sm:$0xff]
    %v3767 = vld [vmem:[#allocation8 + $0x440] sm:$0xff]
    %v3768 = vld [vmem:[#allocation8 + $0x448] sm:$0xff]
    %v3769 = vld [vmem:[#allocation8 + $0x450] sm:$0xff]
    %v3770 = vld [vmem:[#allocation8 + $0x458] sm:$0xff]
    %v3771 = vld [vmem:[#allocation8 + $0x460] sm:$0xff]
    %v3772 = vld [vmem:[#allocation8 + $0x468] sm:$0xff]
    %v3773 = vld [vmem:[#allocation8 + $0x470] sm:$0xff]
    %v3774 = vld [vmem:[#allocation8 + $0x478] sm:$0xff]
    %v3775 = vld [vmem:[#allocation8 + $0x480] sm:$0xff]
    %v3776 = vld [vmem:[#allocation8 + $0x488] sm:$0xff]
    %v3777 = vld [vmem:[#allocation8 + $0x490] sm:$0xff]
    %v3778 = vld [vmem:[#allocation8 + $0x498] sm:$0xff]
    %v3779 = vld [vmem:[#allocation8 + $0x4a0] sm:$0xff]
    %v3780 = vld [vmem:[#allocation8 + $0x4a8] sm:$0xff]
    %v3781 = vld [vmem:[#allocation8 + $0x4b0] sm:$0xff]
    %v3782 = vld [vmem:[#allocation8 + $0x4b8] sm:$0xff]
    %v3783 = vld [vmem:[#allocation8 + $0x4c0] sm:$0xff]
    %v3784 = vld [vmem:[#allocation8 + $0x4c8] sm:$0xff]
    %v3785 = vld [vmem:[#allocation8 + $0x4d0] sm:$0xff]
    %v3786 = vld [vmem:[#allocation8 + $0x4d8] sm:$0xff]
    %v3787 = vld [vmem:[#allocation8 + $0x4e0] sm:$0xff]
    %v3788 = vld [vmem:[#allocation8 + $0x4e8] sm:$0xff]
    %v3789 = vld [vmem:[#allocation8 + $0x4f0] sm:$0xff]
    %v3790 = vld [vmem:[#allocation8 + $0x4f8] sm:$0xff]
    %v3791 = vld [vmem:[#allocation8 + $0x500] sm:$0xff]
    %v3792 = vld [vmem:[#allocation8 + $0x508] sm:$0xff]
    %v3793 = vld [vmem:[#allocation8 + $0x510] sm:$0xff]
    %v3794 = vld [vmem:[#allocation8 + $0x518] sm:$0xff]
    %v3795 = vld [vmem:[#allocation8 + $0x520] sm:$0xff]
    %v3796 = vld [vmem:[#allocation8 + $0x528] sm:$0xff]
    %v3797 = vld [vmem:[#allocation8 + $0x530] sm:$0xff]
    %v3798 = vld [vmem:[#allocation8 + $0x538] sm:$0xff]
    %v3799 = vld [vmem:[#allocation8 + $0x540] sm:$0xff]
    %v3800 = vld [vmem:[#allocation8 + $0x548] sm:$0xff]
    %v3801 = vld [vmem:[#allocation8 + $0x550] sm:$0xff]
    %v3802 = vld [vmem:[#allocation8 + $0x558] sm:$0xff]
    %v3803 = vld [vmem:[#allocation8 + $0x560] sm:$0xff]
    %v3804 = vld [vmem:[#allocation8 + $0x568] sm:$0xff]
    %v3805 = vld [vmem:[#allocation8 + $0x570] sm:$0xff]
    %v3806 = vld [vmem:[#allocation8 + $0x578] sm:$0xff]
    %v3807 = vld [vmem:[#allocation8 + $0x580] sm:$0xff]
    %v3808 = vld [vmem:[#allocation8 + $0x588] sm:$0xff]
    %v3809 = vld [vmem:[#allocation8 + $0x590] sm:$0xff]
    %v3810 = vld [vmem:[#allocation8 + $0x598] sm:$0xff]
    %v3811 = vld [vmem:[#allocation8 + $0x5a0] sm:$0xff]
    %v3812 = vld [vmem:[#allocation8 + $0x5a8] sm:$0xff]
    %v3813 = vld [vmem:[#allocation8 + $0x5b0] sm:$0xff]
    %v3814 = vld [vmem:[#allocation8 + $0x5b8] sm:$0xff]
    %v3815 = vld [vmem:[#allocation8 + $0x5c0] sm:$0xff]
    %v3816 = vld [vmem:[#allocation8 + $0x5c8] sm:$0xff]
    %v3817 = vld [vmem:[#allocation8 + $0x5d0] sm:$0xff]
    %v3818 = vld [vmem:[#allocation8 + $0x5d8] sm:$0xff]
    %v3819 = vld [vmem:[#allocation8 + $0x5e0] sm:$0xff]
    %v3820 = vld [vmem:[#allocation8 + $0x5e8] sm:$0xff]
    %v3821 = vld [vmem:[#allocation8 + $0x5f0] sm:$0xff]
    %v3822 = vld [vmem:[#allocation8 + $0x5f8] sm:$0xff]
    %v3823 = vld [vmem:[#allocation8 + $0x600] sm:$0xff]
    %v3824 = vld [vmem:[#allocation8 + $0x608] sm:$0xff]
    %v3825 = vld [vmem:[#allocation8 + $0x610] sm:$0xff]
    %v3826 = vld [vmem:[#allocation8 + $0x618] sm:$0xff]
    %v3827 = vld [vmem:[#allocation8 + $0x620] sm:$0xff]
    %v3828 = vld [vmem:[#allocation8 + $0x628] sm:$0xff]
    %v3829 = vld [vmem:[#allocation8 + $0x630] sm:$0xff]
    %v3830 = vld [vmem:[#allocation8 + $0x638] sm:$0xff]
    %v3831 = vld [vmem:[#allocation8 + $0x640] sm:$0xff]
    %v3832 = vld [vmem:[#allocation8 + $0x648] sm:$0xff]
    %v3833 = vld [vmem:[#allocation8 + $0x650] sm:$0xff]
    %v3834 = vld [vmem:[#allocation8 + $0x658] sm:$0xff]
    %v3835 = vld [vmem:[#allocation8 + $0x660] sm:$0xff]
    %v3836 = vld [vmem:[#allocation8 + $0x668] sm:$0xff]
    %v3837 = vld [vmem:[#allocation8 + $0x670] sm:$0xff]
    %v3838 = vld [vmem:[#allocation8 + $0x678] sm:$0xff]
    %v3839 = vld [vmem:[#allocation8 + $0x680] sm:$0xff]
    %v3840 = vld [vmem:[#allocation8 + $0x688] sm:$0xff]
    %v3841 = vld [vmem:[#allocation8 + $0x690] sm:$0xff]
    %v3842 = vld [vmem:[#allocation8 + $0x698] sm:$0xff]
    %v3843 = vld [vmem:[#allocation8 + $0x6a0] sm:$0xff]
    %v3844 = vld [vmem:[#allocation8 + $0x6a8] sm:$0xff]
    %v3845 = vld [vmem:[#allocation8 + $0x6b0] sm:$0xff]
    %v3846 = vld [vmem:[#allocation8 + $0x6b8] sm:$0xff]
    %v3847 = vld [vmem:[#allocation8 + $0x6c0] sm:$0xff]
    %v3848 = vld [vmem:[#allocation8 + $0x6c8] sm:$0xff]
    %v3849 = vld [vmem:[#allocation8 + $0x6d0] sm:$0xff]
    %v3850 = vld [vmem:[#allocation8 + $0x6d8] sm:$0xff]
    %v3851 = vld [vmem:[#allocation8 + $0x6e0] sm:$0xff]
    %v3852 = vld [vmem:[#allocation8 + $0x6e8] sm:$0xff]
    %v3853 = vld [vmem:[#allocation8 + $0x6f0] sm:$0xff]
    %v3854 = vld [vmem:[#allocation8 + $0x6f8] sm:$0xff]
    %v3855 = vld [vmem:[#allocation8 + $0x700] sm:$0xff]
    %v3856 = vld [vmem:[#allocation8 + $0x708] sm:$0xff]
    %v3857 = vld [vmem:[#allocation8 + $0x710] sm:$0xff]
    %v3858 = vld [vmem:[#allocation8 + $0x718] sm:$0xff]
    %v3859 = vld [vmem:[#allocation8 + $0x720] sm:$0xff]
    %v3860 = vld [vmem:[#allocation8 + $0x728] sm:$0xff]
    %v3861 = vld [vmem:[#allocation8 + $0x730] sm:$0xff]
    %v3862 = vld [vmem:[#allocation8 + $0x738] sm:$0xff]
    %v3863 = vld [vmem:[#allocation8 + $0x740] sm:$0xff]
    %v3864 = vld [vmem:[#allocation8 + $0x748] sm:$0xff]
    %v3865 = vld [vmem:[#allocation8 + $0x750] sm:$0xff]
    %v3866 = vld [vmem:[#allocation8 + $0x758] sm:$0xff]
    %v3867 = vld [vmem:[#allocation8 + $0x760] sm:$0xff]
    %v3868 = vld [vmem:[#allocation8 + $0x768] sm:$0xff]
    %v3869 = vld [vmem:[#allocation8 + $0x770] sm:$0xff]
    %v3870 = vld [vmem:[#allocation8 + $0x778] sm:$0xff]
    %v3871 = vld [vmem:[#allocation8 + $0x780] sm:$0xff]
    %v3872 = vld [vmem:[#allocation8 + $0x788] sm:$0xff]
    %v3873 = vld [vmem:[#allocation8 + $0x790] sm:$0xff]
    %v3874 = vld [vmem:[#allocation8 + $0x798] sm:$0xff]
    %v3875 = vld [vmem:[#allocation8 + $0x7a0] sm:$0xff]
    %v3876 = vld [vmem:[#allocation8 + $0x7a8] sm:$0xff]
    %v3877 = vld [vmem:[#allocation8 + $0x7b0] sm:$0xff]
    %v3878 = vld [vmem:[#allocation8 + $0x7b8] sm:$0xff]
    %v3879 = vld [vmem:[#allocation8 + $0x7c0] sm:$0xff]
    %v3880 = vld [vmem:[#allocation8 + $0x7c8] sm:$0xff]
    %v3881 = vld [vmem:[#allocation8 + $0x7d0] sm:$0xff]
    %v3882 = vld [vmem:[#allocation8 + $0x7d8] sm:$0xff]
    %v3883 = vld [vmem:[#allocation8 + $0x7e0] sm:$0xff]
    %v3884 = vld [vmem:[#allocation8 + $0x7e8] sm:$0xff]
    %v3885 = vld [vmem:[#allocation8 + $0x7f0] sm:$0xff]
    %v3886 = vld [vmem:[#allocation8 + $0x7f8] sm:$0xff]
    %v3887 = vld [vmem:[#allocation10] sm:$0xf]
    %v3889 = vlaneseq
    %v3890 = vshrl.u32 %v3889, 7
    %v3891 = vsub.s32 0, %v3890
    %v3892 = vrot.slane %v3887, %v3891
    %v3893 = vlaneseq
    %v3894 = vshrl.u32 %v3893, 7
    %v3895 = vsub.s32 1, %v3894
    %v3896 = vrot.slane %v3887, %v3895
    %v3897 = vlaneseq
    %v3898 = vshrl.u32 %v3897, 7
    %v3899 = vsub.s32 2, %v3898
    %v3900 = vrot.slane %v3887, %v3899
    %v3901 = vlaneseq
    %v3902 = vshrl.u32 %v3901, 7
    %v3903 = vsub.s32 3, %v3902
    %v3904 = vrot.slane %v3887, %v3903
    %v4165 = vunpack.c.l.b16 %v3631
    %v4166 = vunpack.c.h.b16 %v3631
    %v4167 = vunpack.c.l.b16 %v3632
    %v4168 = vunpack.c.h.b16 %v3632
    %v4169 = vunpack.c.l.b16 %v3633
    %v4170 = vunpack.c.h.b16 %v3633
    %v4171 = vunpack.c.l.b16 %v3634
    %v4172 = vunpack.c.h.b16 %v3634
    %v4173 = vunpack.c.l.b16 %v3635
    %v4174 = vunpack.c.h.b16 %v3635
    %v4175 = vunpack.c.l.b16 %v3636
    %v4176 = vunpack.c.h.b16 %v3636
    %v4177 = vunpack.c.l.b16 %v3637
    %v4178 = vunpack.c.h.b16 %v3637
    %v4179 = vunpack.c.l.b16 %v3638
    %v4180 = vunpack.c.h.b16 %v3638
    %v4181 = vunpack.c.l.b16 %v3639
    %v4182 = vunpack.c.h.b16 %v3639
    %v4183 = vunpack.c.l.b16 %v3640
    %v4184 = vunpack.c.h.b16 %v3640
    %v4185 = vunpack.c.l.b16 %v3641
    %v4186 = vunpack.c.h.b16 %v3641
    %v4187 = vunpack.c.l.b16 %v3642
    %v4188 = vunpack.c.h.b16 %v3642
    %v4189 = vunpack.c.l.b16 %v3643
    %v4190 = vunpack.c.h.b16 %v3643
    %v4191 = vunpack.c.l.b16 %v3644
    %v4192 = vunpack.c.h.b16 %v3644
    %v4193 = vunpack.c.l.b16 %v3645
    %v4194 = vunpack.c.h.b16 %v3645
    %v4195 = vunpack.c.l.b16 %v3646
    %v4196 = vunpack.c.h.b16 %v3646
    %v4197 = vunpack.c.l.b16 %v3647
    %v4198 = vunpack.c.h.b16 %v3647
    %v4199 = vunpack.c.l.b16 %v3648
    %v4200 = vunpack.c.h.b16 %v3648
    %v4201 = vunpack.c.l.b16 %v3649
    %v4202 = vunpack.c.h.b16 %v3649
    %v4203 = vunpack.c.l.b16 %v3650
    %v4204 = vunpack.c.h.b16 %v3650
    %v4205 = vunpack.c.l.b16 %v3651
    %v4206 = vunpack.c.h.b16 %v3651
    %v4207 = vunpack.c.l.b16 %v3652
    %v4208 = vunpack.c.h.b16 %v3652
    %v4209 = vunpack.c.l.b16 %v3653
    %v4210 = vunpack.c.h.b16 %v3653
    %v4211 = vunpack.c.l.b16 %v3654
    %v4212 = vunpack.c.h.b16 %v3654
    %v4213 = vunpack.c.l.b16 %v3655
    %v4214 = vunpack.c.h.b16 %v3655
    %v4215 = vunpack.c.l.b16 %v3656
    %v4216 = vunpack.c.h.b16 %v3656
    %v4217 = vunpack.c.l.b16 %v3657
    %v4218 = vunpack.c.h.b16 %v3657
    %v4219 = vunpack.c.l.b16 %v3658
    %v4220 = vunpack.c.h.b16 %v3658
    %v4221 = vunpack.c.l.b16 %v3659
    %v4222 = vunpack.c.h.b16 %v3659
    %v4223 = vunpack.c.l.b16 %v3660
    %v4224 = vunpack.c.h.b16 %v3660
    %v4225 = vunpack.c.l.b16 %v3661
    %v4226 = vunpack.c.h.b16 %v3661
    %v4227 = vunpack.c.l.b16 %v3662
    %v4228 = vunpack.c.h.b16 %v3662
    %v4229 = vunpack.c.l.b16 %v3663
    %v4230 = vunpack.c.h.b16 %v3663
    %v4231 = vunpack.c.l.b16 %v3664
    %v4232 = vunpack.c.h.b16 %v3664
    %v4233 = vunpack.c.l.b16 %v3665
    %v4234 = vunpack.c.h.b16 %v3665
    %v4235 = vunpack.c.l.b16 %v3666
    %v4236 = vunpack.c.h.b16 %v3666
    %v4237 = vunpack.c.l.b16 %v3667
    %v4238 = vunpack.c.h.b16 %v3667
    %v4239 = vunpack.c.l.b16 %v3668
    %v4240 = vunpack.c.h.b16 %v3668
    %v4241 = vunpack.c.l.b16 %v3669
    %v4242 = vunpack.c.h.b16 %v3669
    %v4243 = vunpack.c.l.b16 %v3670
    %v4244 = vunpack.c.h.b16 %v3670
    %v4245 = vunpack.c.l.b16 %v3671
    %v4246 = vunpack.c.h.b16 %v3671
    %v4247 = vunpack.c.l.b16 %v3672
    %v4248 = vunpack.c.h.b16 %v3672
    %v4249 = vunpack.c.l.b16 %v3673
    %v4250 = vunpack.c.h.b16 %v3673
    %v4251 = vunpack.c.l.b16 %v3674
    %v4252 = vunpack.c.h.b16 %v3674
    %v4253 = vunpack.c.l.b16 %v3675
    %v4254 = vunpack.c.h.b16 %v3675
    %v4255 = vunpack.c.l.b16 %v3676
    %v4256 = vunpack.c.h.b16 %v3676
    %v4257 = vunpack.c.l.b16 %v3677
    %v4258 = vunpack.c.h.b16 %v3677
    %v4259 = vunpack.c.l.b16 %v3678
    %v4260 = vunpack.c.h.b16 %v3678
    %v4261 = vunpack.c.l.b16 %v3679
    %v4262 = vunpack.c.h.b16 %v3679
    %v4263 = vunpack.c.l.b16 %v3680
    %v4264 = vunpack.c.h.b16 %v3680
    %v4265 = vunpack.c.l.b16 %v3681
    %v4266 = vunpack.c.h.b16 %v3681
    %v4267 = vunpack.c.l.b16 %v3682
    %v4268 = vunpack.c.h.b16 %v3682
    %v4269 = vunpack.c.l.b16 %v3683
    %v4270 = vunpack.c.h.b16 %v3683
    %v4271 = vunpack.c.l.b16 %v3684
    %v4272 = vunpack.c.h.b16 %v3684
    %v4273 = vunpack.c.l.b16 %v3685
    %v4274 = vunpack.c.h.b16 %v3685
    %v4275 = vunpack.c.l.b16 %v3686
    %v4276 = vunpack.c.h.b16 %v3686
    %v4277 = vunpack.c.l.b16 %v3687
    %v4278 = vunpack.c.h.b16 %v3687
    %v4279 = vunpack.c.l.b16 %v3688
    %v4280 = vunpack.c.h.b16 %v3688
    %v4281 = vunpack.c.l.b16 %v3689
    %v4282 = vunpack.c.h.b16 %v3689
    %v4283 = vunpack.c.l.b16 %v3690
    %v4284 = vunpack.c.h.b16 %v3690
    %v4285 = vunpack.c.l.b16 %v3691
    %v4286 = vunpack.c.h.b16 %v3691
    %v4287 = vunpack.c.l.b16 %v3692
    %v4288 = vunpack.c.h.b16 %v3692
    %v4289 = vunpack.c.l.b16 %v3693
    %v4290 = vunpack.c.h.b16 %v3693
    %v4291 = vunpack.c.l.b16 %v3694
    %v4292 = vunpack.c.h.b16 %v3694
    %v4293 = vunpack.c.l.b16 %v3695
    %v4294 = vunpack.c.h.b16 %v3695
    %v4295 = vunpack.c.l.b16 %v3696
    %v4296 = vunpack.c.h.b16 %v3696
    %v4297 = vunpack.c.l.b16 %v3697
    %v4298 = vunpack.c.h.b16 %v3697
    %v4299 = vunpack.c.l.b16 %v3698
    %v4300 = vunpack.c.h.b16 %v3698
    %v4301 = vunpack.c.l.b16 %v3699
    %v4302 = vunpack.c.h.b16 %v3699
    %v4303 = vunpack.c.l.b16 %v3700
    %v4304 = vunpack.c.h.b16 %v3700
    %v4305 = vunpack.c.l.b16 %v3701
    %v4306 = vunpack.c.h.b16 %v3701
    %v4307 = vunpack.c.l.b16 %v3702
    %v4308 = vunpack.c.h.b16 %v3702
    %v4309 = vunpack.c.l.b16 %v3703
    %v4310 = vunpack.c.h.b16 %v3703
    %v4311 = vunpack.c.l.b16 %v3704
    %v4312 = vunpack.c.h.b16 %v3704
    %v4313 = vunpack.c.l.b16 %v3705
    %v4314 = vunpack.c.h.b16 %v3705
    %v4315 = vunpack.c.l.b16 %v3706
    %v4316 = vunpack.c.h.b16 %v3706
    %v4317 = vunpack.c.l.b16 %v3707
    %v4318 = vunpack.c.h.b16 %v3707
    %v4319 = vunpack.c.l.b16 %v3708
    %v4320 = vunpack.c.h.b16 %v3708
    %v4321 = vunpack.c.l.b16 %v3709
    %v4322 = vunpack.c.h.b16 %v3709
    %v4323 = vunpack.c.l.b16 %v3710
    %v4324 = vunpack.c.h.b16 %v3710
    %v4325 = vunpack.c.l.b16 %v3711
    %v4326 = vunpack.c.h.b16 %v3711
    %v4327 = vunpack.c.l.b16 %v3712
    %v4328 = vunpack.c.h.b16 %v3712
    %v4329 = vunpack.c.l.b16 %v3713
    %v4330 = vunpack.c.h.b16 %v3713
    %v4331 = vunpack.c.l.b16 %v3714
    %v4332 = vunpack.c.h.b16 %v3714
    %v4333 = vunpack.c.l.b16 %v3715
    %v4334 = vunpack.c.h.b16 %v3715
    %v4335 = vunpack.c.l.b16 %v3716
    %v4336 = vunpack.c.h.b16 %v3716
    %v4337 = vunpack.c.l.b16 %v3717
    %v4338 = vunpack.c.h.b16 %v3717
    %v4339 = vunpack.c.l.b16 %v3718
    %v4340 = vunpack.c.h.b16 %v3718
    %v4341 = vunpack.c.l.b16 %v3719
    %v4342 = vunpack.c.h.b16 %v3719
    %v4343 = vunpack.c.l.b16 %v3720
    %v4344 = vunpack.c.h.b16 %v3720
    %v4345 = vunpack.c.l.b16 %v3721
    %v4346 = vunpack.c.h.b16 %v3721
    %v4347 = vunpack.c.l.b16 %v3722
    %v4348 = vunpack.c.h.b16 %v3722
    %v4349 = vunpack.c.l.b16 %v3723
    %v4350 = vunpack.c.h.b16 %v3723
    %v4351 = vunpack.c.l.b16 %v3724
    %v4352 = vunpack.c.h.b16 %v3724
    %v4353 = vunpack.c.l.b16 %v3725
    %v4354 = vunpack.c.h.b16 %v3725
    %v4355 = vunpack.c.l.b16 %v3726
    %v4356 = vunpack.c.h.b16 %v3726
    %v4357 = vunpack.c.l.b16 %v3727
    %v4358 = vunpack.c.h.b16 %v3727
    %v4359 = vunpack.c.l.b16 %v3728
    %v4360 = vunpack.c.h.b16 %v3728
    %v4361 = vunpack.c.l.b16 %v3729
    %v4362 = vunpack.c.h.b16 %v3729
    %v4363 = vunpack.c.l.b16 %v3730
    %v4364 = vunpack.c.h.b16 %v3730
    %v4365 = vunpack.c.l.b16 %v3731
    %v4366 = vunpack.c.h.b16 %v3731
    %v4367 = vunpack.c.l.b16 %v3732
    %v4368 = vunpack.c.h.b16 %v3732
    %v4369 = vunpack.c.l.b16 %v3733
    %v4370 = vunpack.c.h.b16 %v3733
    %v4371 = vunpack.c.l.b16 %v3734
    %v4372 = vunpack.c.h.b16 %v3734
    %v4373 = vunpack.c.l.b16 %v3735
    %v4374 = vunpack.c.h.b16 %v3735
    %v4375 = vunpack.c.l.b16 %v3736
    %v4376 = vunpack.c.h.b16 %v3736
    %v4377 = vunpack.c.l.b16 %v3737
    %v4378 = vunpack.c.h.b16 %v3737
    %v4379 = vunpack.c.l.b16 %v3738
    %v4380 = vunpack.c.h.b16 %v3738
    %v4381 = vunpack.c.l.b16 %v3739
    %v4382 = vunpack.c.h.b16 %v3739
    %v4383 = vunpack.c.l.b16 %v3740
    %v4384 = vunpack.c.h.b16 %v3740
    %v4385 = vunpack.c.l.b16 %v3741
    %v4386 = vunpack.c.h.b16 %v3741
    %v4387 = vunpack.c.l.b16 %v3742
    %v4388 = vunpack.c.h.b16 %v3742
    %v4389 = vunpack.c.l.b16 %v3743
    %v4390 = vunpack.c.h.b16 %v3743
    %v4391 = vunpack.c.l.b16 %v3744
    %v4392 = vunpack.c.h.b16 %v3744
    %v4393 = vunpack.c.l.b16 %v3745
    %v4394 = vunpack.c.h.b16 %v3745
    %v4395 = vunpack.c.l.b16 %v3746
    %v4396 = vunpack.c.h.b16 %v3746
    %v4397 = vunpack.c.l.b16 %v3747
    %v4398 = vunpack.c.h.b16 %v3747
    %v4399 = vunpack.c.l.b16 %v3748
    %v4400 = vunpack.c.h.b16 %v3748
    %v4401 = vunpack.c.l.b16 %v3749
    %v4402 = vunpack.c.h.b16 %v3749
    %v4403 = vunpack.c.l.b16 %v3750
    %v4404 = vunpack.c.h.b16 %v3750
    %v4405 = vunpack.c.l.b16 %v3751
    %v4406 = vunpack.c.h.b16 %v3751
    %v4407 = vunpack.c.l.b16 %v3752
    %v4408 = vunpack.c.h.b16 %v3752
    %v4409 = vunpack.c.l.b16 %v3753
    %v4410 = vunpack.c.h.b16 %v3753
    %v4411 = vunpack.c.l.b16 %v3754
    %v4412 = vunpack.c.h.b16 %v3754
    %v4413 = vunpack.c.l.b16 %v3755
    %v4414 = vunpack.c.h.b16 %v3755
    %v4415 = vunpack.c.l.b16 %v3756
    %v4416 = vunpack.c.h.b16 %v3756
    %v4417 = vunpack.c.l.b16 %v3757
    %v4418 = vunpack.c.h.b16 %v3757
    %v4419 = vunpack.c.l.b16 %v3758
    %v4420 = vunpack.c.h.b16 %v3758
    %v4421 = vunpack.c.l.b16 %v3759
    %v4422 = vunpack.c.h.b16 %v3759
    %v4423 = vunpack.c.l.b16 %v3760
    %v4424 = vunpack.c.h.b16 %v3760
    %v4425 = vunpack.c.l.b16 %v3761
    %v4426 = vunpack.c.h.b16 %v3761
    %v4427 = vunpack.c.l.b16 %v3762
    %v4428 = vunpack.c.h.b16 %v3762
    %v4429 = vunpack.c.l.b16 %v3763
    %v4430 = vunpack.c.h.b16 %v3763
    %v4431 = vunpack.c.l.b16 %v3764
    %v4432 = vunpack.c.h.b16 %v3764
    %v4433 = vunpack.c.l.b16 %v3765
    %v4434 = vunpack.c.h.b16 %v3765
    %v4435 = vunpack.c.l.b16 %v3766
    %v4436 = vunpack.c.h.b16 %v3766
    %v4437 = vunpack.c.l.b16 %v3767
    %v4438 = vunpack.c.h.b16 %v3767
    %v4439 = vunpack.c.l.b16 %v3768
    %v4440 = vunpack.c.h.b16 %v3768
    %v4441 = vunpack.c.l.b16 %v3769
    %v4442 = vunpack.c.h.b16 %v3769
    %v4443 = vunpack.c.l.b16 %v3770
    %v4444 = vunpack.c.h.b16 %v3770
    %v4445 = vunpack.c.l.b16 %v3771
    %v4446 = vunpack.c.h.b16 %v3771
    %v4447 = vunpack.c.l.b16 %v3772
    %v4448 = vunpack.c.h.b16 %v3772
    %v4449 = vunpack.c.l.b16 %v3773
    %v4450 = vunpack.c.h.b16 %v3773
    %v4451 = vunpack.c.l.b16 %v3774
    %v4452 = vunpack.c.h.b16 %v3774
    %v4453 = vunpack.c.l.b16 %v3775
    %v4454 = vunpack.c.h.b16 %v3775
    %v4455 = vunpack.c.l.b16 %v3776
    %v4456 = vunpack.c.h.b16 %v3776
    %v4457 = vunpack.c.l.b16 %v3777
    %v4458 = vunpack.c.h.b16 %v3777
    %v4459 = vunpack.c.l.b16 %v3778
    %v4460 = vunpack.c.h.b16 %v3778
    %v4461 = vunpack.c.l.b16 %v3779
    %v4462 = vunpack.c.h.b16 %v3779
    %v4463 = vunpack.c.l.b16 %v3780
    %v4464 = vunpack.c.h.b16 %v3780
    %v4465 = vunpack.c.l.b16 %v3781
    %v4466 = vunpack.c.h.b16 %v3781
    %v4467 = vunpack.c.l.b16 %v3782
    %v4468 = vunpack.c.h.b16 %v3782
    %v4469 = vunpack.c.l.b16 %v3783
    %v4470 = vunpack.c.h.b16 %v3783
    %v4471 = vunpack.c.l.b16 %v3784
    %v4472 = vunpack.c.h.b16 %v3784
    %v4473 = vunpack.c.l.b16 %v3785
    %v4474 = vunpack.c.h.b16 %v3785
    %v4475 = vunpack.c.l.b16 %v3786
    %v4476 = vunpack.c.h.b16 %v3786
    %v4477 = vunpack.c.l.b16 %v3787
    %v4478 = vunpack.c.h.b16 %v3787
    %v4479 = vunpack.c.l.b16 %v3788
    %v4480 = vunpack.c.h.b16 %v3788
    %v4481 = vunpack.c.l.b16 %v3789
    %v4482 = vunpack.c.h.b16 %v3789
    %v4483 = vunpack.c.l.b16 %v3790
    %v4484 = vunpack.c.h.b16 %v3790
    %v4485 = vunpack.c.l.b16 %v3791
    %v4486 = vunpack.c.h.b16 %v3791
    %v4487 = vunpack.c.l.b16 %v3792
    %v4488 = vunpack.c.h.b16 %v3792
    %v4489 = vunpack.c.l.b16 %v3793
    %v4490 = vunpack.c.h.b16 %v3793
    %v4491 = vunpack.c.l.b16 %v3794
    %v4492 = vunpack.c.h.b16 %v3794
    %v4493 = vunpack.c.l.b16 %v3795
    %v4494 = vunpack.c.h.b16 %v3795
    %v4495 = vunpack.c.l.b16 %v3796
    %v4496 = vunpack.c.h.b16 %v3796
    %v4497 = vunpack.c.l.b16 %v3797
    %v4498 = vunpack.c.h.b16 %v3797
    %v4499 = vunpack.c.l.b16 %v3798
    %v4500 = vunpack.c.h.b16 %v3798
    %v4501 = vunpack.c.l.b16 %v3799
    %v4502 = vunpack.c.h.b16 %v3799
    %v4503 = vunpack.c.l.b16 %v3800
    %v4504 = vunpack.c.h.b16 %v3800
    %v4505 = vunpack.c.l.b16 %v3801
    %v4506 = vunpack.c.h.b16 %v3801
    %v4507 = vunpack.c.l.b16 %v3802
    %v4508 = vunpack.c.h.b16 %v3802
    %v4509 = vunpack.c.l.b16 %v3803
    %v4510 = vunpack.c.h.b16 %v3803
    %v4511 = vunpack.c.l.b16 %v3804
    %v4512 = vunpack.c.h.b16 %v3804
    %v4513 = vunpack.c.l.b16 %v3805
    %v4514 = vunpack.c.h.b16 %v3805
    %v4515 = vunpack.c.l.b16 %v3806
    %v4516 = vunpack.c.h.b16 %v3806
    %v4517 = vunpack.c.l.b16 %v3807
    %v4518 = vunpack.c.h.b16 %v3807
    %v4519 = vunpack.c.l.b16 %v3808
    %v4520 = vunpack.c.h.b16 %v3808
    %v4521 = vunpack.c.l.b16 %v3809
    %v4522 = vunpack.c.h.b16 %v3809
    %v4523 = vunpack.c.l.b16 %v3810
    %v4524 = vunpack.c.h.b16 %v3810
    %v4525 = vunpack.c.l.b16 %v3811
    %v4526 = vunpack.c.h.b16 %v3811
    %v4527 = vunpack.c.l.b16 %v3812
    %v4528 = vunpack.c.h.b16 %v3812
    %v4529 = vunpack.c.l.b16 %v3813
    %v4530 = vunpack.c.h.b16 %v3813
    %v4531 = vunpack.c.l.b16 %v3814
    %v4532 = vunpack.c.h.b16 %v3814
    %v4533 = vunpack.c.l.b16 %v3815
    %v4534 = vunpack.c.h.b16 %v3815
    %v4535 = vunpack.c.l.b16 %v3816
    %v4536 = vunpack.c.h.b16 %v3816
    %v4537 = vunpack.c.l.b16 %v3817
    %v4538 = vunpack.c.h.b16 %v3817
    %v4539 = vunpack.c.l.b16 %v3818
    %v4540 = vunpack.c.h.b16 %v3818
    %v4541 = vunpack.c.l.b16 %v3819
    %v4542 = vunpack.c.h.b16 %v3819
    %v4543 = vunpack.c.l.b16 %v3820
    %v4544 = vunpack.c.h.b16 %v3820
    %v4545 = vunpack.c.l.b16 %v3821
    %v4546 = vunpack.c.h.b16 %v3821
    %v4547 = vunpack.c.l.b16 %v3822
    %v4548 = vunpack.c.h.b16 %v3822
    %v4549 = vunpack.c.l.b16 %v3823
    %v4550 = vunpack.c.h.b16 %v3823
    %v4551 = vunpack.c.l.b16 %v3824
    %v4552 = vunpack.c.h.b16 %v3824
    %v4553 = vunpack.c.l.b16 %v3825
    %v4554 = vunpack.c.h.b16 %v3825
    %v4555 = vunpack.c.l.b16 %v3826
    %v4556 = vunpack.c.h.b16 %v3826
    %v4557 = vunpack.c.l.b16 %v3827
    %v4558 = vunpack.c.h.b16 %v3827
    %v4559 = vunpack.c.l.b16 %v3828
    %v4560 = vunpack.c.h.b16 %v3828
    %v4561 = vunpack.c.l.b16 %v3829
    %v4562 = vunpack.c.h.b16 %v3829
    %v4563 = vunpack.c.l.b16 %v3830
    %v4564 = vunpack.c.h.b16 %v3830
    %v4565 = vunpack.c.l.b16 %v3831
    %v4566 = vunpack.c.h.b16 %v3831
    %v4567 = vunpack.c.l.b16 %v3832
    %v4568 = vunpack.c.h.b16 %v3832
    %v4569 = vunpack.c.l.b16 %v3833
    %v4570 = vunpack.c.h.b16 %v3833
    %v4571 = vunpack.c.l.b16 %v3834
    %v4572 = vunpack.c.h.b16 %v3834
    %v4573 = vunpack.c.l.b16 %v3835
    %v4574 = vunpack.c.h.b16 %v3835
    %v4575 = vunpack.c.l.b16 %v3836
    %v4576 = vunpack.c.h.b16 %v3836
    %v4577 = vunpack.c.l.b16 %v3837
    %v4578 = vunpack.c.h.b16 %v3837
    %v4579 = vunpack.c.l.b16 %v3838
    %v4580 = vunpack.c.h.b16 %v3838
    %v4581 = vunpack.c.l.b16 %v3839
    %v4582 = vunpack.c.h.b16 %v3839
    %v4583 = vunpack.c.l.b16 %v3840
    %v4584 = vunpack.c.h.b16 %v3840
    %v4585 = vunpack.c.l.b16 %v3841
    %v4586 = vunpack.c.h.b16 %v3841
    %v4587 = vunpack.c.l.b16 %v3842
    %v4588 = vunpack.c.h.b16 %v3842
    %v4589 = vunpack.c.l.b16 %v3843
    %v4590 = vunpack.c.h.b16 %v3843
    %v4591 = vunpack.c.l.b16 %v3844
    %v4592 = vunpack.c.h.b16 %v3844
    %v4593 = vunpack.c.l.b16 %v3845
    %v4594 = vunpack.c.h.b16 %v3845
    %v4595 = vunpack.c.l.b16 %v3846
    %v4596 = vunpack.c.h.b16 %v3846
    %v4597 = vunpack.c.l.b16 %v3847
    %v4598 = vunpack.c.h.b16 %v3847
    %v4599 = vunpack.c.l.b16 %v3848
    %v4600 = vunpack.c.h.b16 %v3848
    %v4601 = vunpack.c.l.b16 %v3849
    %v4602 = vunpack.c.h.b16 %v3849
    %v4603 = vunpack.c.l.b16 %v3850
    %v4604 = vunpack.c.h.b16 %v3850
    %v4605 = vunpack.c.l.b16 %v3851
    %v4606 = vunpack.c.h.b16 %v3851
    %v4607 = vunpack.c.l.b16 %v3852
    %v4608 = vunpack.c.h.b16 %v3852
    %v4609 = vunpack.c.l.b16 %v3853
    %v4610 = vunpack.c.h.b16 %v3853
    %v4611 = vunpack.c.l.b16 %v3854
    %v4612 = vunpack.c.h.b16 %v3854
    %v4613 = vunpack.c.l.b16 %v3855
    %v4614 = vunpack.c.h.b16 %v3855
    %v4615 = vunpack.c.l.b16 %v3856
    %v4616 = vunpack.c.h.b16 %v3856
    %v4617 = vunpack.c.l.b16 %v3857
    %v4618 = vunpack.c.h.b16 %v3857
    %v4619 = vunpack.c.l.b16 %v3858
    %v4620 = vunpack.c.h.b16 %v3858
    %v4621 = vunpack.c.l.b16 %v3859
    %v4622 = vunpack.c.h.b16 %v3859
    %v4623 = vunpack.c.l.b16 %v3860
    %v4624 = vunpack.c.h.b16 %v3860
    %v4625 = vunpack.c.l.b16 %v3861
    %v4626 = vunpack.c.h.b16 %v3861
    %v4627 = vunpack.c.l.b16 %v3862
    %v4628 = vunpack.c.h.b16 %v3862
    %v4629 = vunpack.c.l.b16 %v3863
    %v4630 = vunpack.c.h.b16 %v3863
    %v4631 = vunpack.c.l.b16 %v3864
    %v4632 = vunpack.c.h.b16 %v3864
    %v4633 = vunpack.c.l.b16 %v3865
    %v4634 = vunpack.c.h.b16 %v3865
    %v4635 = vunpack.c.l.b16 %v3866
    %v4636 = vunpack.c.h.b16 %v3866
    %v4637 = vunpack.c.l.b16 %v3867
    %v4638 = vunpack.c.h.b16 %v3867
    %v4639 = vunpack.c.l.b16 %v3868
    %v4640 = vunpack.c.h.b16 %v3868
    %v4641 = vunpack.c.l.b16 %v3869
    %v4642 = vunpack.c.h.b16 %v3869
    %v4643 = vunpack.c.l.b16 %v3870
    %v4644 = vunpack.c.h.b16 %v3870
    %v4645 = vunpack.c.l.b16 %v3871
    %v4646 = vunpack.c.h.b16 %v3871
    %v4647 = vunpack.c.l.b16 %v3872
    %v4648 = vunpack.c.h.b16 %v3872
    %v4649 = vunpack.c.l.b16 %v3873
    %v4650 = vunpack.c.h.b16 %v3873
    %v4651 = vunpack.c.l.b16 %v3874
    %v4652 = vunpack.c.h.b16 %v3874
    %v4653 = vunpack.c.l.b16 %v3875
    %v4654 = vunpack.c.h.b16 %v3875
    %v4655 = vunpack.c.l.b16 %v3876
    %v4656 = vunpack.c.h.b16 %v3876
    %v4657 = vunpack.c.l.b16 %v3877
    %v4658 = vunpack.c.h.b16 %v3877
    %v4659 = vunpack.c.l.b16 %v3878
    %v4660 = vunpack.c.h.b16 %v3878
    %v4661 = vunpack.c.l.b16 %v3879
    %v4662 = vunpack.c.h.b16 %v3879
    %v4663 = vunpack.c.l.b16 %v3880
    %v4664 = vunpack.c.h.b16 %v3880
    %v4665 = vunpack.c.l.b16 %v3881
    %v4666 = vunpack.c.h.b16 %v3881
    %v4667 = vunpack.c.l.b16 %v3882
    %v4668 = vunpack.c.h.b16 %v3882
    %v4669 = vunpack.c.l.b16 %v3883
    %v4670 = vunpack.c.h.b16 %v3883
    %v4671 = vunpack.c.l.b16 %v3884
    %v4672 = vunpack.c.h.b16 %v3884
    %v4673 = vunpack.c.l.b16 %v3885
    %v4674 = vunpack.c.h.b16 %v3885
    %v4675 = vunpack.c.l.b16 %v3886
    %v4676 = vunpack.c.h.b16 %v3886
    %v4677 = vpack.c.b16 %v4169, %v4165
    %v4678 = vpack.c.b16 %v4170, %v4166
    %v4679 = vpack.c.b16 %v4171, %v4167
    %v4680 = vpack.c.b16 %v4172, %v4168
    %v4681 = vpack.c.b16 %v4177, %v4173
    %v4682 = vpack.c.b16 %v4178, %v4174
    %v4683 = vpack.c.b16 %v4179, %v4175
    %v4684 = vpack.c.b16 %v4180, %v4176
    %v4685 = vpack.c.b16 %v4185, %v4181
    %v4686 = vpack.c.b16 %v4186, %v4182
    %v4687 = vpack.c.b16 %v4187, %v4183
    %v4688 = vpack.c.b16 %v4188, %v4184
    %v4689 = vpack.c.b16 %v4193, %v4189
    %v4690 = vpack.c.b16 %v4194, %v4190
    %v4691 = vpack.c.b16 %v4195, %v4191
    %v4692 = vpack.c.b16 %v4196, %v4192
    %v4693 = vpack.c.b16 %v4201, %v4197
    %v4694 = vpack.c.b16 %v4202, %v4198
    %v4695 = vpack.c.b16 %v4203, %v4199
    %v4696 = vpack.c.b16 %v4204, %v4200
    %v4697 = vpack.c.b16 %v4209, %v4205
    %v4698 = vpack.c.b16 %v4210, %v4206
    %v4699 = vpack.c.b16 %v4211, %v4207
    %v4700 = vpack.c.b16 %v4212, %v4208
    %v4701 = vpack.c.b16 %v4217, %v4213
    %v4702 = vpack.c.b16 %v4218, %v4214
    %v4703 = vpack.c.b16 %v4219, %v4215
    %v4704 = vpack.c.b16 %v4220, %v4216
    %v4705 = vpack.c.b16 %v4225, %v4221
    %v4706 = vpack.c.b16 %v4226, %v4222
    %v4707 = vpack.c.b16 %v4227, %v4223
    %v4708 = vpack.c.b16 %v4228, %v4224
    %v4709 = vpack.c.b16 %v4233, %v4229
    %v4710 = vpack.c.b16 %v4234, %v4230
    %v4711 = vpack.c.b16 %v4235, %v4231
    %v4712 = vpack.c.b16 %v4236, %v4232
    %v4713 = vpack.c.b16 %v4241, %v4237
    %v4714 = vpack.c.b16 %v4242, %v4238
    %v4715 = vpack.c.b16 %v4243, %v4239
    %v4716 = vpack.c.b16 %v4244, %v4240
    %v4717 = vpack.c.b16 %v4249, %v4245
    %v4718 = vpack.c.b16 %v4250, %v4246
    %v4719 = vpack.c.b16 %v4251, %v4247
    %v4720 = vpack.c.b16 %v4252, %v4248
    %v4721 = vpack.c.b16 %v4257, %v4253
    %v4722 = vpack.c.b16 %v4258, %v4254
    %v4723 = vpack.c.b16 %v4259, %v4255
    %v4724 = vpack.c.b16 %v4260, %v4256
    %v4725 = vpack.c.b16 %v4265, %v4261
    %v4726 = vpack.c.b16 %v4266, %v4262
    %v4727 = vpack.c.b16 %v4267, %v4263
    %v4728 = vpack.c.b16 %v4268, %v4264
    %v4729 = vpack.c.b16 %v4273, %v4269
    %v4730 = vpack.c.b16 %v4274, %v4270
    %v4731 = vpack.c.b16 %v4275, %v4271
    %v4732 = vpack.c.b16 %v4276, %v4272
    %v4733 = vpack.c.b16 %v4281, %v4277
    %v4734 = vpack.c.b16 %v4282, %v4278
    %v4735 = vpack.c.b16 %v4283, %v4279
    %v4736 = vpack.c.b16 %v4284, %v4280
    %v4737 = vpack.c.b16 %v4289, %v4285
    %v4738 = vpack.c.b16 %v4290, %v4286
    %v4739 = vpack.c.b16 %v4291, %v4287
    %v4740 = vpack.c.b16 %v4292, %v4288
    %v4741 = vpack.c.b16 %v4297, %v4293
    %v4742 = vpack.c.b16 %v4298, %v4294
    %v4743 = vpack.c.b16 %v4299, %v4295
    %v4744 = vpack.c.b16 %v4300, %v4296
    %v4745 = vpack.c.b16 %v4305, %v4301
    %v4746 = vpack.c.b16 %v4306, %v4302
    %v4747 = vpack.c.b16 %v4307, %v4303
    %v4748 = vpack.c.b16 %v4308, %v4304
    %v4749 = vpack.c.b16 %v4313, %v4309
    %v4750 = vpack.c.b16 %v4314, %v4310
    %v4751 = vpack.c.b16 %v4315, %v4311
    %v4752 = vpack.c.b16 %v4316, %v4312
    %v4753 = vpack.c.b16 %v4321, %v4317
    %v4754 = vpack.c.b16 %v4322, %v4318
    %v4755 = vpack.c.b16 %v4323, %v4319
    %v4756 = vpack.c.b16 %v4324, %v4320
    %v4757 = vpack.c.b16 %v4329, %v4325
    %v4758 = vpack.c.b16 %v4330, %v4326
    %v4759 = vpack.c.b16 %v4331, %v4327
    %v4760 = vpack.c.b16 %v4332, %v4328
    %v4761 = vpack.c.b16 %v4337, %v4333
    %v4762 = vpack.c.b16 %v4338, %v4334
    %v4763 = vpack.c.b16 %v4339, %v4335
    %v4764 = vpack.c.b16 %v4340, %v4336
    %v4765 = vpack.c.b16 %v4345, %v4341
    %v4766 = vpack.c.b16 %v4346, %v4342
    %v4767 = vpack.c.b16 %v4347, %v4343
    %v4768 = vpack.c.b16 %v4348, %v4344
    %v4769 = vpack.c.b16 %v4353, %v4349
    %v4770 = vpack.c.b16 %v4354, %v4350
    %v4771 = vpack.c.b16 %v4355, %v4351
    %v4772 = vpack.c.b16 %v4356, %v4352
    %v4773 = vpack.c.b16 %v4361, %v4357
    %v4774 = vpack.c.b16 %v4362, %v4358
    %v4775 = vpack.c.b16 %v4363, %v4359
    %v4776 = vpack.c.b16 %v4364, %v4360
    %v4777 = vpack.c.b16 %v4369, %v4365
    %v4778 = vpack.c.b16 %v4370, %v4366
    %v4779 = vpack.c.b16 %v4371, %v4367
    %v4780 = vpack.c.b16 %v4372, %v4368
    %v4781 = vpack.c.b16 %v4377, %v4373
    %v4782 = vpack.c.b16 %v4378, %v4374
    %v4783 = vpack.c.b16 %v4379, %v4375
    %v4784 = vpack.c.b16 %v4380, %v4376
    %v4785 = vpack.c.b16 %v4385, %v4381
    %v4786 = vpack.c.b16 %v4386, %v4382
    %v4787 = vpack.c.b16 %v4387, %v4383
    %v4788 = vpack.c.b16 %v4388, %v4384
    %v4789 = vpack.c.b16 %v4393, %v4389
    %v4790 = vpack.c.b16 %v4394, %v4390
    %v4791 = vpack.c.b16 %v4395, %v4391
    %v4792 = vpack.c.b16 %v4396, %v4392
    %v4793 = vpack.c.b16 %v4401, %v4397
    %v4794 = vpack.c.b16 %v4402, %v4398
    %v4795 = vpack.c.b16 %v4403, %v4399
    %v4796 = vpack.c.b16 %v4404, %v4400
    %v4797 = vpack.c.b16 %v4409, %v4405
    %v4798 = vpack.c.b16 %v4410, %v4406
    %v4799 = vpack.c.b16 %v4411, %v4407
    %v4800 = vpack.c.b16 %v4412, %v4408
    %v4801 = vpack.c.b16 %v4417, %v4413
    %v4802 = vpack.c.b16 %v4418, %v4414
    %v4803 = vpack.c.b16 %v4419, %v4415
    %v4804 = vpack.c.b16 %v4420, %v4416
    %v4805 = vpack.c.b16 %v4425, %v4421
    %v4806 = vpack.c.b16 %v4426, %v4422
    %v4807 = vpack.c.b16 %v4427, %v4423
    %v4808 = vpack.c.b16 %v4428, %v4424
    %v4809 = vpack.c.b16 %v4433, %v4429
    %v4810 = vpack.c.b16 %v4434, %v4430
    %v4811 = vpack.c.b16 %v4435, %v4431
    %v4812 = vpack.c.b16 %v4436, %v4432
    %v4813 = vpack.c.b16 %v4441, %v4437
    %v4814 = vpack.c.b16 %v4442, %v4438
    %v4815 = vpack.c.b16 %v4443, %v4439
    %v4816 = vpack.c.b16 %v4444, %v4440
    %v4817 = vpack.c.b16 %v4449, %v4445
    %v4818 = vpack.c.b16 %v4450, %v4446
    %v4819 = vpack.c.b16 %v4451, %v4447
    %v4820 = vpack.c.b16 %v4452, %v4448
    %v4821 = vpack.c.b16 %v4457, %v4453
    %v4822 = vpack.c.b16 %v4458, %v4454
    %v4823 = vpack.c.b16 %v4459, %v4455
    %v4824 = vpack.c.b16 %v4460, %v4456
    %v4825 = vpack.c.b16 %v4465, %v4461
    %v4826 = vpack.c.b16 %v4466, %v4462
    %v4827 = vpack.c.b16 %v4467, %v4463
    %v4828 = vpack.c.b16 %v4468, %v4464
    %v4829 = vpack.c.b16 %v4473, %v4469
    %v4830 = vpack.c.b16 %v4474, %v4470
    %v4831 = vpack.c.b16 %v4475, %v4471
    %v4832 = vpack.c.b16 %v4476, %v4472
    %v4833 = vpack.c.b16 %v4481, %v4477
    %v4834 = vpack.c.b16 %v4482, %v4478
    %v4835 = vpack.c.b16 %v4483, %v4479
    %v4836 = vpack.c.b16 %v4484, %v4480
    %v4837 = vpack.c.b16 %v4489, %v4485
    %v4838 = vpack.c.b16 %v4490, %v4486
    %v4839 = vpack.c.b16 %v4491, %v4487
    %v4840 = vpack.c.b16 %v4492, %v4488
    %v4841 = vpack.c.b16 %v4497, %v4493
    %v4842 = vpack.c.b16 %v4498, %v4494
    %v4843 = vpack.c.b16 %v4499, %v4495
    %v4844 = vpack.c.b16 %v4500, %v4496
    %v4845 = vpack.c.b16 %v4505, %v4501
    %v4846 = vpack.c.b16 %v4506, %v4502
    %v4847 = vpack.c.b16 %v4507, %v4503
    %v4848 = vpack.c.b16 %v4508, %v4504
    %v4849 = vpack.c.b16 %v4513, %v4509
    %v4850 = vpack.c.b16 %v4514, %v4510
    %v4851 = vpack.c.b16 %v4515, %v4511
    %v4852 = vpack.c.b16 %v4516, %v4512
    %v4853 = vpack.c.b16 %v4521, %v4517
    %v4854 = vpack.c.b16 %v4522, %v4518
    %v4855 = vpack.c.b16 %v4523, %v4519
    %v4856 = vpack.c.b16 %v4524, %v4520
    %v4857 = vpack.c.b16 %v4529, %v4525
    %v4858 = vpack.c.b16 %v4530, %v4526
    %v4859 = vpack.c.b16 %v4531, %v4527
    %v4860 = vpack.c.b16 %v4532, %v4528
    %v4861 = vpack.c.b16 %v4537, %v4533
    %v4862 = vpack.c.b16 %v4538, %v4534
    %v4863 = vpack.c.b16 %v4539, %v4535
    %v4864 = vpack.c.b16 %v4540, %v4536
    %v4865 = vpack.c.b16 %v4545, %v4541
    %v4866 = vpack.c.b16 %v4546, %v4542
    %v4867 = vpack.c.b16 %v4547, %v4543
    %v4868 = vpack.c.b16 %v4548, %v4544
    %v4869 = vpack.c.b16 %v4553, %v4549
    %v4870 = vpack.c.b16 %v4554, %v4550
    %v4871 = vpack.c.b16 %v4555, %v4551
    %v4872 = vpack.c.b16 %v4556, %v4552
    %v4873 = vpack.c.b16 %v4561, %v4557
    %v4874 = vpack.c.b16 %v4562, %v4558
    %v4875 = vpack.c.b16 %v4563, %v4559
    %v4876 = vpack.c.b16 %v4564, %v4560
    %v4877 = vpack.c.b16 %v4569, %v4565
    %v4878 = vpack.c.b16 %v4570, %v4566
    %v4879 = vpack.c.b16 %v4571, %v4567
    %v4880 = vpack.c.b16 %v4572, %v4568
    %v4881 = vpack.c.b16 %v4577, %v4573
    %v4882 = vpack.c.b16 %v4578, %v4574
    %v4883 = vpack.c.b16 %v4579, %v4575
    %v4884 = vpack.c.b16 %v4580, %v4576
    %v4885 = vpack.c.b16 %v4585, %v4581
    %v4886 = vpack.c.b16 %v4586, %v4582
    %v4887 = vpack.c.b16 %v4587, %v4583
    %v4888 = vpack.c.b16 %v4588, %v4584
    %v4889 = vpack.c.b16 %v4593, %v4589
    %v4890 = vpack.c.b16 %v4594, %v4590
    %v4891 = vpack.c.b16 %v4595, %v4591
    %v4892 = vpack.c.b16 %v4596, %v4592
    %v4893 = vpack.c.b16 %v4601, %v4597
    %v4894 = vpack.c.b16 %v4602, %v4598
    %v4895 = vpack.c.b16 %v4603, %v4599
    %v4896 = vpack.c.b16 %v4604, %v4600
    %v4897 = vpack.c.b16 %v4609, %v4605
    %v4898 = vpack.c.b16 %v4610, %v4606
    %v4899 = vpack.c.b16 %v4611, %v4607
    %v4900 = vpack.c.b16 %v4612, %v4608
    %v4901 = vpack.c.b16 %v4617, %v4613
    %v4902 = vpack.c.b16 %v4618, %v4614
    %v4903 = vpack.c.b16 %v4619, %v4615
    %v4904 = vpack.c.b16 %v4620, %v4616
    %v4905 = vpack.c.b16 %v4625, %v4621
    %v4906 = vpack.c.b16 %v4626, %v4622
    %v4907 = vpack.c.b16 %v4627, %v4623
    %v4908 = vpack.c.b16 %v4628, %v4624
    %v4909 = vpack.c.b16 %v4633, %v4629
    %v4910 = vpack.c.b16 %v4634, %v4630
    %v4911 = vpack.c.b16 %v4635, %v4631
    %v4912 = vpack.c.b16 %v4636, %v4632
    %v4913 = vpack.c.b16 %v4641, %v4637
    %v4914 = vpack.c.b16 %v4642, %v4638
    %v4915 = vpack.c.b16 %v4643, %v4639
    %v4916 = vpack.c.b16 %v4644, %v4640
    %v4917 = vpack.c.b16 %v4649, %v4645
    %v4918 = vpack.c.b16 %v4650, %v4646
    %v4919 = vpack.c.b16 %v4651, %v4647
    %v4920 = vpack.c.b16 %v4652, %v4648
    %v4921 = vpack.c.b16 %v4657, %v4653
    %v4922 = vpack.c.b16 %v4658, %v4654
    %v4923 = vpack.c.b16 %v4659, %v4655
    %v4924 = vpack.c.b16 %v4660, %v4656
    %v4925 = vpack.c.b16 %v4665, %v4661
    %v4926 = vpack.c.b16 %v4666, %v4662
    %v4927 = vpack.c.b16 %v4667, %v4663
    %v4928 = vpack.c.b16 %v4668, %v4664
    %v4929 = vpack.c.b16 %v4673, %v4669
    %v4930 = vpack.c.b16 %v4674, %v4670
    %v4931 = vpack.c.b16 %v4675, %v4671
    %v4932 = vpack.c.b16 %v4676, %v4672
    %5189 = vmatprep.subr.bf16.mxu0 %v4706
    %5190 = vmatpush1.bf16.msra.mxu0 %v4705
    %5191 = vmatprep.subr.bf16.mxu0 %v4702
    %5192 = vmatpush1.bf16.msra.mxu0 %v4701
    %5193 = vmatprep.subr.bf16.mxu0 %v4698
    %5194 = vmatpush1.bf16.msra.mxu0 %v4697
    %5195 = vmatprep.subr.bf16.mxu0 %v4694
    %5196 = vmatpush1.bf16.msra.mxu0 %v4693
    %5197 = vmatprep.subr.bf16.mxu0 %v4690
    %5198 = vmatpush1.bf16.msra.mxu0 %v4689
    %5199 = vmatprep.subr.bf16.mxu0 %v4686
    %5200 = vmatpush1.bf16.msra.mxu0 %v4685
    %5201 = vmatprep.subr.bf16.mxu0 %v4682
    %5202 = vmatpush1.bf16.msra.mxu0 %v4681
    %5203 = vmatprep.subr.bf16.mxu0 %v4678
    %5204 = vmatpush1.bf16.msra.mxu0 %v4677
    %5205 = vmatprep.subr.bf16.mxu0 %v4738
    %5206 = vmatpush2.bf16.msra.mxu0 %v4737
    %5207 = vmatprep.subr.bf16.mxu0 %v4734
    %5208 = vmatpush2.bf16.msra.mxu0 %v4733
    %5209 = vmatprep.subr.bf16.mxu0 %v4730
    %5210 = vmatpush2.bf16.msra.mxu0 %v4729
    %5211 = vmatprep.subr.bf16.mxu0 %v4726
    %5212 = vmatpush2.bf16.msra.mxu0 %v4725
    %5213 = vmatprep.subr.bf16.mxu0 %v4722
    %5214 = vmatpush2.bf16.msra.mxu0 %v4721
    %5215 = vmatprep.subr.bf16.mxu0 %v4718
    %5216 = vmatpush2.bf16.msra.mxu0 %v4717
    %5217 = vmatprep.subr.bf16.mxu0 %v4714
    %5218 = vmatpush2.bf16.msra.mxu0 %v4713
    %5219 = vmatprep.subr.bf16.mxu0 %v4710
    %5220 = vmatpush2.bf16.msra.mxu0 %v4709
    %5221 = vmatprep.mubr.bf16.mxu0 %v3624
    %5222 = vmatmul.mubr.bf16.gmra.mxu0 %v3623
    %v5223 = vpop.f32.mrf.mxu0
    %v5224 = vadd.f32 %v3892, %v5223
    %v5225 = vpop.f32.mrf.mxu0
    %v5226 = vadd.f32 %v3896, %v5225
    %v5227 = vpop.f32.mrf.mxu0
    %v5228 = vadd.f32 %v3892, %v5227
    %v5229 = vpop.f32.mrf.mxu0
    %v5230 = vadd.f32 %v3896, %v5229
    %5231 = vdwg.mxu0
    %5232 = vmatprep.subr.bf16.mxu0 %v4770
    %5233 = vmatpush1.bf16.msra.mxu0 %v4769
    %5234 = vmatprep.subr.bf16.mxu0 %v4766
    %5235 = vmatpush1.bf16.msra.mxu0 %v4765
    %5236 = vmatprep.subr.bf16.mxu0 %v4762
    %5237 = vmatpush1.bf16.msra.mxu0 %v4761
    %5238 = vmatprep.subr.bf16.mxu0 %v4758
    %5239 = vmatpush1.bf16.msra.mxu0 %v4757
    %5240 = vmatprep.subr.bf16.mxu0 %v4754
    %5241 = vmatpush1.bf16.msra.mxu0 %v4753
    %5242 = vmatprep.subr.bf16.mxu0 %v4750
    %5243 = vmatpush1.bf16.msra.mxu0 %v4749
    %5244 = vmatprep.subr.bf16.mxu0 %v4746
    %5245 = vmatpush1.bf16.msra.mxu0 %v4745
    %5246 = vmatprep.subr.bf16.mxu0 %v4742
    %5247 = vmatpush1.bf16.msra.mxu0 %v4741
    %5248 = vmatprep.subr.bf16.mxu0 %v4802
    %5249 = vmatpush2.bf16.msra.mxu0 %v4801
    %5250 = vmatprep.subr.bf16.mxu0 %v4798
    %5251 = vmatpush2.bf16.msra.mxu0 %v4797
    %5252 = vmatprep.subr.bf16.mxu0 %v4794
    %5253 = vmatpush2.bf16.msra.mxu0 %v4793
    %5254 = vmatprep.subr.bf16.mxu0 %v4790
    %5255 = vmatpush2.bf16.msra.mxu0 %v4789
    %5256 = vmatprep.subr.bf16.mxu0 %v4786
    %5257 = vmatpush2.bf16.msra.mxu0 %v4785
    %5258 = vmatprep.subr.bf16.mxu0 %v4782
    %5259 = vmatpush2.bf16.msra.mxu0 %v4781
    %5260 = vmatprep.subr.bf16.mxu0 %v4778
    %5261 = vmatpush2.bf16.msra.mxu0 %v4777
    %5262 = vmatprep.subr.bf16.mxu0 %v4774
    %5263 = vmatpush2.bf16.msra.mxu0 %v4773
    %5264 = vmatprep.mubr.bf16.mxu0 %v3626
    %5265 = vmatmul.mubr.bf16.gmra.mxu0 %v3625
    %v5266 = vpop.f32.mrf.mxu0
    %v5267 = vadd.f32 %v5224, %v5266
    %v5268 = vpop.f32.mrf.mxu0
    %v5269 = vadd.f32 %v5226, %v5268
    %v5270 = vpop.f32.mrf.mxu0
    %v5271 = vadd.f32 %v5228, %v5270
    %v5272 = vpop.f32.mrf.mxu0
    %v5273 = vadd.f32 %v5230, %v5272
    %5274 = vdwg.mxu0
    %5275 = vmatprep.subr.bf16.mxu0 %v4834
    %5276 = vmatpush1.bf16.msra.mxu0 %v4833
    %5277 = vmatprep.subr.bf16.mxu0 %v4830
    %5278 = vmatpush1.bf16.msra.mxu0 %v4829
    %5279 = vmatprep.subr.bf16.mxu0 %v4826
    %5280 = vmatpush1.bf16.msra.mxu0 %v4825
    %5281 = vmatprep.subr.bf16.mxu0 %v4822
    %5282 = vmatpush1.bf16.msra.mxu0 %v4821
    %5283 = vmatprep.subr.bf16.mxu0 %v4818
    %5284 = vmatpush1.bf16.msra.mxu0 %v4817
    %5285 = vmatprep.subr.bf16.mxu0 %v4814
    %5286 = vmatpush1.bf16.msra.mxu0 %v4813
    %5287 = vmatprep.subr.bf16.mxu0 %v4810
    %5288 = vmatpush1.bf16.msra.mxu0 %v4809
    %5289 = vmatprep.subr.bf16.mxu0 %v4806
    %5290 = vmatpush1.bf16.msra.mxu0 %v4805
    %5291 = vmatprep.subr.bf16.mxu0 %v4866
    %5292 = vmatpush2.bf16.msra.mxu0 %v4865
    %5293 = vmatprep.subr.bf16.mxu0 %v4862
    %5294 = vmatpush2.bf16.msra.mxu0 %v4861
    %5295 = vmatprep.subr.bf16.mxu0 %v4858
    %5296 = vmatpush2.bf16.msra.mxu0 %v4857
    %5297 = vmatprep.subr.bf16.mxu0 %v4854
    %5298 = vmatpush2.bf16.msra.mxu0 %v4853
    %5299 = vmatprep.subr.bf16.mxu0 %v4850
    %5300 = vmatpush2.bf16.msra.mxu0 %v4849
    %5301 = vmatprep.subr.bf16.mxu0 %v4846
    %5302 = vmatpush2.bf16.msra.mxu0 %v4845
    %5303 = vmatprep.subr.bf16.mxu0 %v4842
    %5304 = vmatpush2.bf16.msra.mxu0 %v4841
    %5305 = vmatprep.subr.bf16.mxu0 %v4838
    %5306 = vmatpush2.bf16.msra.mxu0 %v4837
    %5307 = vmatprep.mubr.bf16.mxu0 %v3628
    %5308 = vmatmul.mubr.bf16.gmra.mxu0 %v3627
    %v5309 = vpop.f32.mrf.mxu0
    %v5310 = vadd.f32 %v5267, %v5309
    %v5311 = vpop.f32.mrf.mxu0
    %v5312 = vadd.f32 %v5269, %v5311
    %v5313 = vpop.f32.mrf.mxu0
    %v5314 = vadd.f32 %v5271, %v5313
    %v5315 = vpop.f32.mrf.mxu0
    %v5316 = vadd.f32 %v5273, %v5315
    %5317 = vdwg.mxu0
    %5318 = vmatprep.subr.bf16.mxu0 %v4898
    %5319 = vmatpush1.bf16.msra.mxu0 %v4897
    %5320 = vmatprep.subr.bf16.mxu0 %v4894
    %5321 = vmatpush1.bf16.msra.mxu0 %v4893
    %5322 = vmatprep.subr.bf16.mxu0 %v4890
    %5323 = vmatpush1.bf16.msra.mxu0 %v4889
    %5324 = vmatprep.subr.bf16.mxu0 %v4886
    %5325 = vmatpush1.bf16.msra.mxu0 %v4885
    %5326 = vmatprep.subr.bf16.mxu0 %v4882
    %5327 = vmatpush1.bf16.msra.mxu0 %v4881
    %5328 = vmatprep.subr.bf16.mxu0 %v4878
    %5329 = vmatpush1.bf16.msra.mxu0 %v4877
    %5330 = vmatprep.subr.bf16.mxu0 %v4874
    %5331 = vmatpush1.bf16.msra.mxu0 %v4873
    %5332 = vmatprep.subr.bf16.mxu0 %v4870
    %5333 = vmatpush1.bf16.msra.mxu0 %v4869
    %5334 = vmatprep.subr.bf16.mxu0 %v4930
    %5335 = vmatpush2.bf16.msra.mxu0 %v4929
    %5336 = vmatprep.subr.bf16.mxu0 %v4926
    %5337 = vmatpush2.bf16.msra.mxu0 %v4925
    %5338 = vmatprep.subr.bf16.mxu0 %v4922
    %5339 = vmatpush2.bf16.msra.mxu0 %v4921
    %5340 = vmatprep.subr.bf16.mxu0 %v4918
    %5341 = vmatpush2.bf16.msra.mxu0 %v4917
    %5342 = vmatprep.subr.bf16.mxu0 %v4914
    %5343 = vmatpush2.bf16.msra.mxu0 %v4913
    %5344 = vmatprep.subr.bf16.mxu0 %v4910
    %5345 = vmatpush2.bf16.msra.mxu0 %v4909
    %5346 = vmatprep.subr.bf16.mxu0 %v4906
    %5347 = vmatpush2.bf16.msra.mxu0 %v4905
    %5348 = vmatprep.subr.bf16.mxu0 %v4902
    %5349 = vmatpush2.bf16.msra.mxu0 %v4901
    %5350 = vmatprep.mubr.bf16.mxu0 %v3630
    %5351 = vmatmul.mubr.bf16.gmra.mxu0 %v3629
    %v5352 = vpop.f32.mrf.mxu0
    %v5353 = vadd.f32 %v5310, %v5352
    %v5354 = vpop.f32.mrf.mxu0
    %v5355 = vadd.f32 %v5312, %v5354
    %v5356 = vpop.f32.mrf.mxu0
    %v5357 = vadd.f32 %v5314, %v5356
    %v5358 = vpop.f32.mrf.mxu0
    %v5359 = vadd.f32 %v5316, %v5358
    %5360 = vdwg.mxu0
    %5361 = vmatprep.subr.bf16.mxu0 %v4708
    %5362 = vmatpush1.bf16.msra.mxu0 %v4707
    %5363 = vmatprep.subr.bf16.mxu0 %v4704
    %5364 = vmatpush1.bf16.msra.mxu0 %v4703
    %5365 = vmatprep.subr.bf16.mxu0 %v4700
    %5366 = vmatpush1.bf16.msra.mxu0 %v4699
    %5367 = vmatprep.subr.bf16.mxu0 %v4696
    %5368 = vmatpush1.bf16.msra.mxu0 %v4695
    %5369 = vmatprep.subr.bf16.mxu0 %v4692
    %5370 = vmatpush1.bf16.msra.mxu0 %v4691
    %5371 = vmatprep.subr.bf16.mxu0 %v4688
    %5372 = vmatpush1.bf16.msra.mxu0 %v4687
    %5373 = vmatprep.subr.bf16.mxu0 %v4684
    %5374 = vmatpush1.bf16.msra.mxu0 %v4683
    %5375 = vmatprep.subr.bf16.mxu0 %v4680
    %5376 = vmatpush1.bf16.msra.mxu0 %v4679
    %5377 = vmatprep.subr.bf16.mxu0 %v4740
    %5378 = vmatpush2.bf16.msra.mxu0 %v4739
    %5379 = vmatprep.subr.bf16.mxu0 %v4736
    %5380 = vmatpush2.bf16.msra.mxu0 %v4735
    %5381 = vmatprep.subr.bf16.mxu0 %v4732
    %5382 = vmatpush2.bf16.msra.mxu0 %v4731
    %5383 = vmatprep.subr.bf16.mxu0 %v4728
    %5384 = vmatpush2.bf16.msra.mxu0 %v4727
    %5385 = vmatprep.subr.bf16.mxu0 %v4724
    %5386 = vmatpush2.bf16.msra.mxu0 %v4723
    %5387 = vmatprep.subr.bf16.mxu0 %v4720
    %5388 = vmatpush2.bf16.msra.mxu0 %v4719
    %5389 = vmatprep.subr.bf16.mxu0 %v4716
    %5390 = vmatpush2.bf16.msra.mxu0 %v4715
    %5391 = vmatprep.subr.bf16.mxu0 %v4712
    %5392 = vmatpush2.bf16.msra.mxu0 %v4711
    %5393 = vmatprep.mubr.bf16.mxu0 %v3624
    %5394 = vmatmul.mubr.bf16.gmra.mxu0 %v3623
    %v5395 = vpop.f32.mrf.mxu0
    %v5396 = vadd.f32 %v3900, %v5395
    %v5397 = vpop.f32.mrf.mxu0
    %v5398 = vadd.f32 %v3904, %v5397
    %v5399 = vpop.f32.mrf.mxu0
    %v5400 = vadd.f32 %v3900, %v5399
    %v5401 = vpop.f32.mrf.mxu0
    %v5402 = vadd.f32 %v3904, %v5401
    %5403 = vdwg.mxu0
    %5404 = vmatprep.subr.bf16.mxu0 %v4772
    %5405 = vmatpush1.bf16.msra.mxu0 %v4771
    %5406 = vmatprep.subr.bf16.mxu0 %v4768
    %5407 = vmatpush1.bf16.msra.mxu0 %v4767
    %5408 = vmatprep.subr.bf16.mxu0 %v4764
    %5409 = vmatpush1.bf16.msra.mxu0 %v4763
    %5410 = vmatprep.subr.bf16.mxu0 %v4760
    %5411 = vmatpush1.bf16.msra.mxu0 %v4759
    %5412 = vmatprep.subr.bf16.mxu0 %v4756
    %5413 = vmatpush1.bf16.msra.mxu0 %v4755
    %5414 = vmatprep.subr.bf16.mxu0 %v4752
    %5415 = vmatpush1.bf16.msra.mxu0 %v4751
    %5416 = vmatprep.subr.bf16.mxu0 %v4748
    %5417 = vmatpush1.bf16.msra.mxu0 %v4747
    %5418 = vmatprep.subr.bf16.mxu0 %v4744
    %5419 = vmatpush1.bf16.msra.mxu0 %v4743
    %5420 = vmatprep.subr.bf16.mxu0 %v4804
    %5421 = vmatpush2.bf16.msra.mxu0 %v4803
    %5422 = vmatprep.subr.bf16.mxu0 %v4800
    %5423 = vmatpush2.bf16.msra.mxu0 %v4799
    %5424 = vmatprep.subr.bf16.mxu0 %v4796
    %5425 = vmatpush2.bf16.msra.mxu0 %v4795
    %5426 = vmatprep.subr.bf16.mxu0 %v4792
    %5427 = vmatpush2.bf16.msra.mxu0 %v4791
    %5428 = vmatprep.subr.bf16.mxu0 %v4788
    %5429 = vmatpush2.bf16.msra.mxu0 %v4787
    %5430 = vmatprep.subr.bf16.mxu0 %v4784
    %5431 = vmatpush2.bf16.msra.mxu0 %v4783
    %5432 = vmatprep.subr.bf16.mxu0 %v4780
    %5433 = vmatpush2.bf16.msra.mxu0 %v4779
    %5434 = vmatprep.subr.bf16.mxu0 %v4776
    %5435 = vmatpush2.bf16.msra.mxu0 %v4775
    %5436 = vmatprep.mubr.bf16.mxu0 %v3626
    %5437 = vmatmul.mubr.bf16.gmra.mxu0 %v3625
    %v5438 = vpop.f32.mrf.mxu0
    %v5439 = vadd.f32 %v5396, %v5438
    %v5440 = vpop.f32.mrf.mxu0
    %v5441 = vadd.f32 %v5398, %v5440
    %v5442 = vpop.f32.mrf.mxu0
    %v5443 = vadd.f32 %v5400, %v5442
    %v5444 = vpop.f32.mrf.mxu0
    %v5445 = vadd.f32 %v5402, %v5444
    %5446 = vdwg.mxu0
    %5447 = vmatprep.subr.bf16.mxu0 %v4836
    %5448 = vmatpush1.bf16.msra.mxu0 %v4835
    %5449 = vmatprep.subr.bf16.mxu0 %v4832
    %5450 = vmatpush1.bf16.msra.mxu0 %v4831
    %5451 = vmatprep.subr.bf16.mxu0 %v4828
    %5452 = vmatpush1.bf16.msra.mxu0 %v4827
    %5453 = vmatprep.subr.bf16.mxu0 %v4824
    %5454 = vmatpush1.bf16.msra.mxu0 %v4823
    %5455 = vmatprep.subr.bf16.mxu0 %v4820
    %5456 = vmatpush1.bf16.msra.mxu0 %v4819
    %5457 = vmatprep.subr.bf16.mxu0 %v4816
    %5458 = vmatpush1.bf16.msra.mxu0 %v4815
    %5459 = vmatprep.subr.bf16.mxu0 %v4812
    %5460 = vmatpush1.bf16.msra.mxu0 %v4811
    %5461 = vmatprep.subr.bf16.mxu0 %v4808
    %5462 = vmatpush1.bf16.msra.mxu0 %v4807
    %5463 = vmatprep.subr.bf16.mxu0 %v4868
    %5464 = vmatpush2.bf16.msra.mxu0 %v4867
    %5465 = vmatprep.subr.bf16.mxu0 %v4864
    %5466 = vmatpush2.bf16.msra.mxu0 %v4863
    %5467 = vmatprep.subr.bf16.mxu0 %v4860
    %5468 = vmatpush2.bf16.msra.mxu0 %v4859
    %5469 = vmatprep.subr.bf16.mxu0 %v4856
    %5470 = vmatpush2.bf16.msra.mxu0 %v4855
    %5471 = vmatprep.subr.bf16.mxu0 %v4852
    %5472 = vmatpush2.bf16.msra.mxu0 %v4851
    %5473 = vmatprep.subr.bf16.mxu0 %v4848
    %5474 = vmatpush2.bf16.msra.mxu0 %v4847
    %5475 = vmatprep.subr.bf16.mxu0 %v4844
    %5476 = vmatpush2.bf16.msra.mxu0 %v4843
    %5477 = vmatprep.subr.bf16.mxu0 %v4840
    %5478 = vmatpush2.bf16.msra.mxu0 %v4839
    %5479 = vmatprep.mubr.bf16.mxu0 %v3628
    %5480 = vmatmul.mubr.bf16.gmra.mxu0 %v3627
    %v5481 = vpop.f32.mrf.mxu0
    %v5482 = vadd.f32 %v5439, %v5481
    %v5483 = vpop.f32.mrf.mxu0
    %v5484 = vadd.f32 %v5441, %v5483
    %v5485 = vpop.f32.mrf.mxu0
    %v5486 = vadd.f32 %v5443, %v5485
    %v5487 = vpop.f32.mrf.mxu0
    %v5488 = vadd.f32 %v5445, %v5487
    %5489 = vdwg.mxu0
    %5490 = vmatprep.subr.bf16.mxu0 %v4900
    %5491 = vmatpush1.bf16.msra.mxu0 %v4899
    %5492 = vmatprep.subr.bf16.mxu0 %v4896
    %5493 = vmatpush1.bf16.msra.mxu0 %v4895
    %5494 = vmatprep.subr.bf16.mxu0 %v4892
    %5495 = vmatpush1.bf16.msra.mxu0 %v4891
    %5496 = vmatprep.subr.bf16.mxu0 %v4888
    %5497 = vmatpush1.bf16.msra.mxu0 %v4887
    %5498 = vmatprep.subr.bf16.mxu0 %v4884
    %5499 = vmatpush1.bf16.msra.mxu0 %v4883
    %5500 = vmatprep.subr.bf16.mxu0 %v4880
    %5501 = vmatpush1.bf16.msra.mxu0 %v4879
    %5502 = vmatprep.subr.bf16.mxu0 %v4876
    %5503 = vmatpush1.bf16.msra.mxu0 %v4875
    %5504 = vmatprep.subr.bf16.mxu0 %v4872
    %5505 = vmatpush1.bf16.msra.mxu0 %v4871
    %5506 = vmatprep.subr.bf16.mxu0 %v4932
    %5507 = vmatpush2.bf16.msra.mxu0 %v4931
    %5508 = vmatprep.subr.bf16.mxu0 %v4928
    %5509 = vmatpush2.bf16.msra.mxu0 %v4927
    %5510 = vmatprep.subr.bf16.mxu0 %v4924
    %5511 = vmatpush2.bf16.msra.mxu0 %v4923
    %5512 = vmatprep.subr.bf16.mxu0 %v4920
    %5513 = vmatpush2.bf16.msra.mxu0 %v4919
    %5514 = vmatprep.subr.bf16.mxu0 %v4916
    %5515 = vmatpush2.bf16.msra.mxu0 %v4915
    %5516 = vmatprep.subr.bf16.mxu0 %v4912
    %5517 = vmatpush2.bf16.msra.mxu0 %v4911
    %5518 = vmatprep.subr.bf16.mxu0 %v4908
    %5519 = vmatpush2.bf16.msra.mxu0 %v4907
    %5520 = vmatprep.subr.bf16.mxu0 %v4904
    %5521 = vmatpush2.bf16.msra.mxu0 %v4903
    %5522 = vmatprep.mubr.bf16.mxu0 %v3630
    %5523 = vmatmul.mubr.bf16.gmra.mxu0 %v3629
    %v5524 = vpop.f32.mrf.mxu0
    %v5525 = vadd.f32 %v5482, %v5524
    %v5526 = vpop.f32.mrf.mxu0
    %v5527 = vadd.f32 %v5484, %v5526
    %v5528 = vpop.f32.mrf.mxu0
    %v5529 = vadd.f32 %v5486, %v5528
    %v5530 = vpop.f32.mrf.mxu0
    %v5531 = vadd.f32 %v5488, %v5530
    %5532 = vdwg.mxu0
    %vm5533 = vcmp.gt.f32.partialorder %v5353, 0.0
    %vm5534 = vcmp.gt.f32.partialorder %v5355, 0.0
    %vm5535 = vcmp.gt.f32.partialorder %v5525, 0.0
    %vm5536 = vcmp.gt.f32.partialorder %v5527, 0.0
    %vm5537 = vcmp.gt.f32.partialorder %v5357, 0.0
    %vm5538 = vcmp.gt.f32.partialorder %v5359, 0.0
    %vm5539 = vcmp.gt.f32.partialorder %v5529, 0.0
    %vm5540 = vcmp.gt.f32.partialorder %v5531, 0.0
    %v5541 = vmul.f32 %v5353, 0.2
    %v5542 = vmul.f32 %v5355, 0.2
    %v5543 = vmul.f32 %v5525, 0.2
    %v5544 = vmul.f32 %v5527, 0.2
    %v5545 = vmul.f32 %v5357, 0.2
    %v5546 = vmul.f32 %v5359, 0.2
    %v5547 = vmul.f32 %v5529, 0.2
    %v5548 = vmul.f32 %v5531, 0.2
    %v5549 = vsel %vm5533, %v5353, %v5541
    %v5550 = vsel %vm5534, %v5355, %v5542
    %v5551 = vsel %vm5535, %v5525, %v5543
    %v5552 = vsel %vm5536, %v5527, %v5544
    %v5553 = vsel %vm5537, %v5357, %v5545
    %v5554 = vsel %vm5538, %v5359, %v5546
    %v5555 = vsel %vm5539, %v5529, %v5547
    %v5556 = vsel %vm5540, %v5531, %v5548
    %v5557 = vpack.c.bf16 %v5553, %v5549
    %v5558 = vpack.c.bf16 %v5554, %v5550
    %v5559 = vpack.c.bf16 %v5555, %v5551
    %v5560 = vpack.c.bf16 %v5556, %v5552
    %v5561 = vld [vmem:[#allocation11] sm:$0xff]
    %v5562 = vld [vmem:[#allocation11 + $0x8] sm:$0xff]
    %v5563 = vld [vmem:[#allocation11 + $0x10] sm:$0xff]
    %v5564 = vld [vmem:[#allocation11 + $0x18] sm:$0xff]
    %v5565 = vld [vmem:[#allocation11 + $0x20] sm:$0xff]
    %v5566 = vld [vmem:[#allocation11 + $0x28] sm:$0xff]
    %v5567 = vld [vmem:[#allocation11 + $0x30] sm:$0xff]
    %v5568 = vld [vmem:[#allocation11 + $0x38] sm:$0xff]
    %v5569 = vld [vmem:[#allocation11 + $0x40] sm:$0xff]
    %v5570 = vld [vmem:[#allocation11 + $0x48] sm:$0xff]
    %v5571 = vld [vmem:[#allocation11 + $0x50] sm:$0xff]
    %v5572 = vld [vmem:[#allocation11 + $0x58] sm:$0xff]
    %v5573 = vld [vmem:[#allocation11 + $0x60] sm:$0xff]
    %v5574 = vld [vmem:[#allocation11 + $0x68] sm:$0xff]
    %v5575 = vld [vmem:[#allocation11 + $0x70] sm:$0xff]
    %v5576 = vld [vmem:[#allocation11 + $0x78] sm:$0xff]
    %v5577 = vld [vmem:[#allocation11 + $0x80] sm:$0xff]
    %v5578 = vld [vmem:[#allocation11 + $0x88] sm:$0xff]
    %v5579 = vld [vmem:[#allocation11 + $0x90] sm:$0xff]
    %v5580 = vld [vmem:[#allocation11 + $0x98] sm:$0xff]
    %v5581 = vld [vmem:[#allocation11 + $0xa0] sm:$0xff]
    %v5582 = vld [vmem:[#allocation11 + $0xa8] sm:$0xff]
    %v5583 = vld [vmem:[#allocation11 + $0xb0] sm:$0xff]
    %v5584 = vld [vmem:[#allocation11 + $0xb8] sm:$0xff]
    %v5585 = vld [vmem:[#allocation11 + $0xc0] sm:$0xff]
    %v5586 = vld [vmem:[#allocation11 + $0xc8] sm:$0xff]
    %v5587 = vld [vmem:[#allocation11 + $0xd0] sm:$0xff]
    %v5588 = vld [vmem:[#allocation11 + $0xd8] sm:$0xff]
    %v5589 = vld [vmem:[#allocation11 + $0xe0] sm:$0xff]
    %v5590 = vld [vmem:[#allocation11 + $0xe8] sm:$0xff]
    %v5591 = vld [vmem:[#allocation11 + $0xf0] sm:$0xff]
    %v5592 = vld [vmem:[#allocation11 + $0xf8] sm:$0xff]
    %v5593 = vld [vmem:[#allocation11 + $0x100] sm:$0xff]
    %v5594 = vld [vmem:[#allocation11 + $0x108] sm:$0xff]
    %v5595 = vld [vmem:[#allocation11 + $0x110] sm:$0xff]
    %v5596 = vld [vmem:[#allocation11 + $0x118] sm:$0xff]
    %v5597 = vld [vmem:[#allocation11 + $0x120] sm:$0xff]
    %v5598 = vld [vmem:[#allocation11 + $0x128] sm:$0xff]
    %v5599 = vld [vmem:[#allocation11 + $0x130] sm:$0xff]
    %v5600 = vld [vmem:[#allocation11 + $0x138] sm:$0xff]
    %v5601 = vld [vmem:[#allocation11 + $0x140] sm:$0xff]
    %v5602 = vld [vmem:[#allocation11 + $0x148] sm:$0xff]
    %v5603 = vld [vmem:[#allocation11 + $0x150] sm:$0xff]
    %v5604 = vld [vmem:[#allocation11 + $0x158] sm:$0xff]
    %v5605 = vld [vmem:[#allocation11 + $0x160] sm:$0xff]
    %v5606 = vld [vmem:[#allocation11 + $0x168] sm:$0xff]
    %v5607 = vld [vmem:[#allocation11 + $0x170] sm:$0xff]
    %v5608 = vld [vmem:[#allocation11 + $0x178] sm:$0xff]
    %v5609 = vld [vmem:[#allocation11 + $0x180] sm:$0xff]
    %v5610 = vld [vmem:[#allocation11 + $0x188] sm:$0xff]
    %v5611 = vld [vmem:[#allocation11 + $0x190] sm:$0xff]
    %v5612 = vld [vmem:[#allocation11 + $0x198] sm:$0xff]
    %v5613 = vld [vmem:[#allocation11 + $0x1a0] sm:$0xff]
    %v5614 = vld [vmem:[#allocation11 + $0x1a8] sm:$0xff]
    %v5615 = vld [vmem:[#allocation11 + $0x1b0] sm:$0xff]
    %v5616 = vld [vmem:[#allocation11 + $0x1b8] sm:$0xff]
    %v5617 = vld [vmem:[#allocation11 + $0x1c0] sm:$0xff]
    %v5618 = vld [vmem:[#allocation11 + $0x1c8] sm:$0xff]
    %v5619 = vld [vmem:[#allocation11 + $0x1d0] sm:$0xff]
    %v5620 = vld [vmem:[#allocation11 + $0x1d8] sm:$0xff]
    %v5621 = vld [vmem:[#allocation11 + $0x1e0] sm:$0xff]
    %v5622 = vld [vmem:[#allocation11 + $0x1e8] sm:$0xff]
    %v5623 = vld [vmem:[#allocation11 + $0x1f0] sm:$0xff]
    %v5624 = vld [vmem:[#allocation11 + $0x1f8] sm:$0xff]
    %v5625 = vld [vmem:[#allocation13] sm:$0x3]
    %v5627 = vlaneseq
    %v5628 = vshrl.u32 %v5627, 7
    %v5629 = vsub.s32 0, %v5628
    %v5630 = vrot.slane %v5625, %v5629
    %v5631 = vlaneseq
    %v5632 = vshrl.u32 %v5631, 7
    %v5633 = vsub.s32 1, %v5632
    %v5634 = vrot.slane %v5625, %v5633
    %v5701 = vunpack.c.l.b16 %v5561
    %v5702 = vunpack.c.h.b16 %v5561
    %v5703 = vunpack.c.l.b16 %v5562
    %v5704 = vunpack.c.h.b16 %v5562
    %v5705 = vunpack.c.l.b16 %v5563
    %v5706 = vunpack.c.h.b16 %v5563
    %v5707 = vunpack.c.l.b16 %v5564
    %v5708 = vunpack.c.h.b16 %v5564
    %v5709 = vunpack.c.l.b16 %v5565
    %v5710 = vunpack.c.h.b16 %v5565
    %v5711 = vunpack.c.l.b16 %v5566
    %v5712 = vunpack.c.h.b16 %v5566
    %v5713 = vunpack.c.l.b16 %v5567
    %v5714 = vunpack.c.h.b16 %v5567
    %v5715 = vunpack.c.l.b16 %v5568
    %v5716 = vunpack.c.h.b16 %v5568
    %v5717 = vunpack.c.l.b16 %v5569
    %v5718 = vunpack.c.h.b16 %v5569
    %v5719 = vunpack.c.l.b16 %v5570
    %v5720 = vunpack.c.h.b16 %v5570
    %v5721 = vunpack.c.l.b16 %v5571
    %v5722 = vunpack.c.h.b16 %v5571
    %v5723 = vunpack.c.l.b16 %v5572
    %v5724 = vunpack.c.h.b16 %v5572
    %v5725 = vunpack.c.l.b16 %v5573
    %v5726 = vunpack.c.h.b16 %v5573
    %v5727 = vunpack.c.l.b16 %v5574
    %v5728 = vunpack.c.h.b16 %v5574
    %v5729 = vunpack.c.l.b16 %v5575
    %v5730 = vunpack.c.h.b16 %v5575
    %v5731 = vunpack.c.l.b16 %v5576
    %v5732 = vunpack.c.h.b16 %v5576
    %v5733 = vunpack.c.l.b16 %v5577
    %v5734 = vunpack.c.h.b16 %v5577
    %v5735 = vunpack.c.l.b16 %v5578
    %v5736 = vunpack.c.h.b16 %v5578
    %v5737 = vunpack.c.l.b16 %v5579
    %v5738 = vunpack.c.h.b16 %v5579
    %v5739 = vunpack.c.l.b16 %v5580
    %v5740 = vunpack.c.h.b16 %v5580
    %v5741 = vunpack.c.l.b16 %v5581
    %v5742 = vunpack.c.h.b16 %v5581
    %v5743 = vunpack.c.l.b16 %v5582
    %v5744 = vunpack.c.h.b16 %v5582
    %v5745 = vunpack.c.l.b16 %v5583
    %v5746 = vunpack.c.h.b16 %v5583
    %v5747 = vunpack.c.l.b16 %v5584
    %v5748 = vunpack.c.h.b16 %v5584
    %v5749 = vunpack.c.l.b16 %v5585
    %v5750 = vunpack.c.h.b16 %v5585
    %v5751 = vunpack.c.l.b16 %v5586
    %v5752 = vunpack.c.h.b16 %v5586
    %v5753 = vunpack.c.l.b16 %v5587
    %v5754 = vunpack.c.h.b16 %v5587
    %v5755 = vunpack.c.l.b16 %v5588
    %v5756 = vunpack.c.h.b16 %v5588
    %v5757 = vunpack.c.l.b16 %v5589
    %v5758 = vunpack.c.h.b16 %v5589
    %v5759 = vunpack.c.l.b16 %v5590
    %v5760 = vunpack.c.h.b16 %v5590
    %v5761 = vunpack.c.l.b16 %v5591
    %v5762 = vunpack.c.h.b16 %v5591
    %v5763 = vunpack.c.l.b16 %v5592
    %v5764 = vunpack.c.h.b16 %v5592
    %v5765 = vunpack.c.l.b16 %v5593
    %v5766 = vunpack.c.h.b16 %v5593
    %v5767 = vunpack.c.l.b16 %v5594
    %v5768 = vunpack.c.h.b16 %v5594
    %v5769 = vunpack.c.l.b16 %v5595
    %v5770 = vunpack.c.h.b16 %v5595
    %v5771 = vunpack.c.l.b16 %v5596
    %v5772 = vunpack.c.h.b16 %v5596
    %v5773 = vunpack.c.l.b16 %v5597
    %v5774 = vunpack.c.h.b16 %v5597
    %v5775 = vunpack.c.l.b16 %v5598
    %v5776 = vunpack.c.h.b16 %v5598
    %v5777 = vunpack.c.l.b16 %v5599
    %v5778 = vunpack.c.h.b16 %v5599
    %v5779 = vunpack.c.l.b16 %v5600
    %v5780 = vunpack.c.h.b16 %v5600
    %v5781 = vunpack.c.l.b16 %v5601
    %v5782 = vunpack.c.h.b16 %v5601
    %v5783 = vunpack.c.l.b16 %v5602
    %v5784 = vunpack.c.h.b16 %v5602
    %v5785 = vunpack.c.l.b16 %v5603
    %v5786 = vunpack.c.h.b16 %v5603
    %v5787 = vunpack.c.l.b16 %v5604
    %v5788 = vunpack.c.h.b16 %v5604
    %v5789 = vunpack.c.l.b16 %v5605
    %v5790 = vunpack.c.h.b16 %v5605
    %v5791 = vunpack.c.l.b16 %v5606
    %v5792 = vunpack.c.h.b16 %v5606
    %v5793 = vunpack.c.l.b16 %v5607
    %v5794 = vunpack.c.h.b16 %v5607
    %v5795 = vunpack.c.l.b16 %v5608
    %v5796 = vunpack.c.h.b16 %v5608
    %v5797 = vunpack.c.l.b16 %v5609
    %v5798 = vunpack.c.h.b16 %v5609
    %v5799 = vunpack.c.l.b16 %v5610
    %v5800 = vunpack.c.h.b16 %v5610
    %v5801 = vunpack.c.l.b16 %v5611
    %v5802 = vunpack.c.h.b16 %v5611
    %v5803 = vunpack.c.l.b16 %v5612
    %v5804 = vunpack.c.h.b16 %v5612
    %v5805 = vunpack.c.l.b16 %v5613
    %v5806 = vunpack.c.h.b16 %v5613
    %v5807 = vunpack.c.l.b16 %v5614
    %v5808 = vunpack.c.h.b16 %v5614
    %v5809 = vunpack.c.l.b16 %v5615
    %v5810 = vunpack.c.h.b16 %v5615
    %v5811 = vunpack.c.l.b16 %v5616
    %v5812 = vunpack.c.h.b16 %v5616
    %v5813 = vunpack.c.l.b16 %v5617
    %v5814 = vunpack.c.h.b16 %v5617
    %v5815 = vunpack.c.l.b16 %v5618
    %v5816 = vunpack.c.h.b16 %v5618
    %v5817 = vunpack.c.l.b16 %v5619
    %v5818 = vunpack.c.h.b16 %v5619
    %v5819 = vunpack.c.l.b16 %v5620
    %v5820 = vunpack.c.h.b16 %v5620
    %v5821 = vunpack.c.l.b16 %v5621
    %v5822 = vunpack.c.h.b16 %v5621
    %v5823 = vunpack.c.l.b16 %v5622
    %v5824 = vunpack.c.h.b16 %v5622
    %v5825 = vunpack.c.l.b16 %v5623
    %v5826 = vunpack.c.h.b16 %v5623
    %v5827 = vunpack.c.l.b16 %v5624
    %v5828 = vunpack.c.h.b16 %v5624
    %v5829 = vpack.c.b16 %v5703, %v5701
    %v5830 = vpack.c.b16 %v5704, %v5702
    %v5831 = vpack.c.b16 %v5707, %v5705
    %v5832 = vpack.c.b16 %v5708, %v5706
    %v5833 = vpack.c.b16 %v5711, %v5709
    %v5834 = vpack.c.b16 %v5712, %v5710
    %v5835 = vpack.c.b16 %v5715, %v5713
    %v5836 = vpack.c.b16 %v5716, %v5714
    %v5837 = vpack.c.b16 %v5719, %v5717
    %v5838 = vpack.c.b16 %v5720, %v5718
    %v5839 = vpack.c.b16 %v5723, %v5721
    %v5840 = vpack.c.b16 %v5724, %v5722
    %v5841 = vpack.c.b16 %v5727, %v5725
    %v5842 = vpack.c.b16 %v5728, %v5726
    %v5843 = vpack.c.b16 %v5731, %v5729
    %v5844 = vpack.c.b16 %v5732, %v5730
    %v5845 = vpack.c.b16 %v5735, %v5733
    %v5846 = vpack.c.b16 %v5736, %v5734
    %v5847 = vpack.c.b16 %v5739, %v5737
    %v5848 = vpack.c.b16 %v5740, %v5738
    %v5849 = vpack.c.b16 %v5743, %v5741
    %v5850 = vpack.c.b16 %v5744, %v5742
    %v5851 = vpack.c.b16 %v5747, %v5745
    %v5852 = vpack.c.b16 %v5748, %v5746
    %v5853 = vpack.c.b16 %v5751, %v5749
    %v5854 = vpack.c.b16 %v5752, %v5750
    %v5855 = vpack.c.b16 %v5755, %v5753
    %v5856 = vpack.c.b16 %v5756, %v5754
    %v5857 = vpack.c.b16 %v5759, %v5757
    %v5858 = vpack.c.b16 %v5760, %v5758
    %v5859 = vpack.c.b16 %v5763, %v5761
    %v5860 = vpack.c.b16 %v5764, %v5762
    %v5861 = vpack.c.b16 %v5767, %v5765
    %v5862 = vpack.c.b16 %v5768, %v5766
    %v5863 = vpack.c.b16 %v5771, %v5769
    %v5864 = vpack.c.b16 %v5772, %v5770
    %v5865 = vpack.c.b16 %v5775, %v5773
    %v5866 = vpack.c.b16 %v5776, %v5774
    %v5867 = vpack.c.b16 %v5779, %v5777
    %v5868 = vpack.c.b16 %v5780, %v5778
    %v5869 = vpack.c.b16 %v5783, %v5781
    %v5870 = vpack.c.b16 %v5784, %v5782
    %v5871 = vpack.c.b16 %v5787, %v5785
    %v5872 = vpack.c.b16 %v5788, %v5786
    %v5873 = vpack.c.b16 %v5791, %v5789
    %v5874 = vpack.c.b16 %v5792, %v5790
    %v5875 = vpack.c.b16 %v5795, %v5793
    %v5876 = vpack.c.b16 %v5796, %v5794
    %v5877 = vpack.c.b16 %v5799, %v5797
    %v5878 = vpack.c.b16 %v5800, %v5798
    %v5879 = vpack.c.b16 %v5803, %v5801
    %v5880 = vpack.c.b16 %v5804, %v5802
    %v5881 = vpack.c.b16 %v5807, %v5805
    %v5882 = vpack.c.b16 %v5808, %v5806
    %v5883 = vpack.c.b16 %v5811, %v5809
    %v5884 = vpack.c.b16 %v5812, %v5810
    %v5885 = vpack.c.b16 %v5815, %v5813
    %v5886 = vpack.c.b16 %v5816, %v5814
    %v5887 = vpack.c.b16 %v5819, %v5817
    %v5888 = vpack.c.b16 %v5820, %v5818
    %v5889 = vpack.c.b16 %v5823, %v5821
    %v5890 = vpack.c.b16 %v5824, %v5822
    %v5891 = vpack.c.b16 %v5827, %v5825
    %v5892 = vpack.c.b16 %v5828, %v5826
    %5957 = vmatprep.subr.bf16.mxu0 %v5844
    %5958 = vmatpush1.bf16.msra.mxu0 %v5843
    %5959 = vmatprep.subr.bf16.mxu0 %v5842
    %5960 = vmatpush1.bf16.msra.mxu0 %v5841
    %5961 = vmatprep.subr.bf16.mxu0 %v5840
    %5962 = vmatpush1.bf16.msra.mxu0 %v5839
    %5963 = vmatprep.subr.bf16.mxu0 %v5838
    %5964 = vmatpush1.bf16.msra.mxu0 %v5837
    %5965 = vmatprep.subr.bf16.mxu0 %v5836
    %5966 = vmatpush1.bf16.msra.mxu0 %v5835
    %5967 = vmatprep.subr.bf16.mxu0 %v5834
    %5968 = vmatpush1.bf16.msra.mxu0 %v5833
    %5969 = vmatprep.subr.bf16.mxu0 %v5832
    %5970 = vmatpush1.bf16.msra.mxu0 %v5831
    %5971 = vmatprep.subr.bf16.mxu0 %v5830
    %5972 = vmatpush1.bf16.msra.mxu0 %v5829
    %5973 = vmatprep.subr.bf16.mxu0 %v5860
    %5974 = vmatpush2.bf16.msra.mxu0 %v5859
    %5975 = vmatprep.subr.bf16.mxu0 %v5858
    %5976 = vmatpush2.bf16.msra.mxu0 %v5857
    %5977 = vmatprep.subr.bf16.mxu0 %v5856
    %5978 = vmatpush2.bf16.msra.mxu0 %v5855
    %5979 = vmatprep.subr.bf16.mxu0 %v5854
    %5980 = vmatpush2.bf16.msra.mxu0 %v5853
    %5981 = vmatprep.subr.bf16.mxu0 %v5852
    %5982 = vmatpush2.bf16.msra.mxu0 %v5851
    %5983 = vmatprep.subr.bf16.mxu0 %v5850
    %5984 = vmatpush2.bf16.msra.mxu0 %v5849
    %5985 = vmatprep.subr.bf16.mxu0 %v5848
    %5986 = vmatpush2.bf16.msra.mxu0 %v5847
    %5987 = vmatprep.subr.bf16.mxu0 %v5846
    %5988 = vmatpush2.bf16.msra.mxu0 %v5845
    %5989 = vmatprep.mubr.bf16.mxu0 %v5558
    %5990 = vmatmul.mubr.bf16.gmra.mxu0 %v5557
    %v5991 = vpop.f32.mrf.mxu0
    %v5992 = vadd.f32 %v5630, %v5991
    %v5993 = vpop.f32.mrf.mxu0
    %v5994 = vadd.f32 %v5634, %v5993
    %v5995 = vpop.f32.mrf.mxu0
    %v5996 = vadd.f32 %v5630, %v5995
    %v5997 = vpop.f32.mrf.mxu0
    %v5998 = vadd.f32 %v5634, %v5997
    %5999 = vdwg.mxu0
    %6000 = vmatprep.subr.bf16.mxu0 %v5876
    %6001 = vmatpush1.bf16.msra.mxu0 %v5875
    %6002 = vmatprep.subr.bf16.mxu0 %v5874
    %6003 = vmatpush1.bf16.msra.mxu0 %v5873
    %6004 = vmatprep.subr.bf16.mxu0 %v5872
    %6005 = vmatpush1.bf16.msra.mxu0 %v5871
    %6006 = vmatprep.subr.bf16.mxu0 %v5870
    %6007 = vmatpush1.bf16.msra.mxu0 %v5869
    %6008 = vmatprep.subr.bf16.mxu0 %v5868
    %6009 = vmatpush1.bf16.msra.mxu0 %v5867
    %6010 = vmatprep.subr.bf16.mxu0 %v5866
    %6011 = vmatpush1.bf16.msra.mxu0 %v5865
    %6012 = vmatprep.subr.bf16.mxu0 %v5864
    %6013 = vmatpush1.bf16.msra.mxu0 %v5863
    %6014 = vmatprep.subr.bf16.mxu0 %v5862
    %6015 = vmatpush1.bf16.msra.mxu0 %v5861
    %6016 = vmatprep.subr.bf16.mxu0 %v5892
    %6017 = vmatpush2.bf16.msra.mxu0 %v5891
    %6018 = vmatprep.subr.bf16.mxu0 %v5890
    %6019 = vmatpush2.bf16.msra.mxu0 %v5889
    %6020 = vmatprep.subr.bf16.mxu0 %v5888
    %6021 = vmatpush2.bf16.msra.mxu0 %v5887
    %6022 = vmatprep.subr.bf16.mxu0 %v5886
    %6023 = vmatpush2.bf16.msra.mxu0 %v5885
    %6024 = vmatprep.subr.bf16.mxu0 %v5884
    %6025 = vmatpush2.bf16.msra.mxu0 %v5883
    %6026 = vmatprep.subr.bf16.mxu0 %v5882
    %6027 = vmatpush2.bf16.msra.mxu0 %v5881
    %6028 = vmatprep.subr.bf16.mxu0 %v5880
    %6029 = vmatpush2.bf16.msra.mxu0 %v5879
    %6030 = vmatprep.subr.bf16.mxu0 %v5878
    %6031 = vmatpush2.bf16.msra.mxu0 %v5877
    %6032 = vmatprep.mubr.bf16.mxu0 %v5560
    %6033 = vmatmul.mubr.bf16.gmra.mxu0 %v5559
    %v6034 = vpop.f32.mrf.mxu0
    %v6035 = vadd.f32 %v5992, %v6034
    %v6036 = vpop.f32.mrf.mxu0
    %v6037 = vadd.f32 %v5994, %v6036
    %v6038 = vpop.f32.mrf.mxu0
    %v6039 = vadd.f32 %v5996, %v6038
    %v6040 = vpop.f32.mrf.mxu0
    %v6041 = vadd.f32 %v5998, %v6040
    %6042 = vdwg.mxu0
    %vm6043 = vcmp.gt.f32.partialorder %v6035, 0.0
    %vm6044 = vcmp.gt.f32.partialorder %v6037, 0.0
    %vm6045 = vcmp.gt.f32.partialorder %v6039, 0.0
    %vm6046 = vcmp.gt.f32.partialorder %v6041, 0.0
    %v6047 = vmul.f32 %v6035, 0.2
    %v6048 = vmul.f32 %v6037, 0.2
    %v6049 = vmul.f32 %v6039, 0.2
    %v6050 = vmul.f32 %v6041, 0.2
    %v6051 = vsel %vm6043, %v6035, %v6047
    %v6052 = vsel %vm6044, %v6037, %v6048
    %v6053 = vsel %vm6045, %v6039, %v6049
    %v6054 = vsel %vm6046, %v6041, %v6050
    %v6055 = vld [vmem:[#allocation14] sm:$0x3]
    %v6057 = vlaneseq
    %v6058 = vshrl.u32 %v6057, 7
    %v6059 = vsub.s32 0, %v6058
    %v6060 = vrot.slane %v6055, %v6059
    %v6061 = vlaneseq
    %v6062 = vshrl.u32 %v6061, 7
    %v6063 = vsub.s32 1, %v6062
    %v6064 = vrot.slane %v6055, %v6063
    %v6067 = vmul.f32 %v6051, %v6060
    %v6068 = vmul.f32 %v6052, %v6064
    %v6069 = vmul.f32 %v6053, %v6060
    %v6070 = vmul.f32 %v6054, %v6064
    %v6071 = vadd.f32 %v6067, %v6068
    %6072 = vadd.xlane.f32.xlu0 %v6071
    %v6073 = vpop.xlane.xlu0 %6072
    %v6074 = vadd.f32 %v6069, %v6070
    %6075 = vadd.xlane.f32.xlu0 %v6074
    %v6076 = vpop.xlane.xlu0 %6075
    %v6077 = vld [vmem:[#allocation2] sm:$0x1]
    %v6079 = vlaneseq
    %v6080 = vshrl.u32 %v6079, 7
    %v6081 = vsub.s32 0, %v6080
    %v6082 = vrot.slane %v6077, %v6081
    %v6084 = vadd.f32 %v6073, %v6082
    %v6085 = vadd.f32 %v6076, %v6082
    %v6086 = vxor.u32 %v6084, 2147483648
    %v6087 = vxor.u32 %v6085, 2147483648
    %v6088 = vmul.f32 %v6086, 1.442695
    %v6089 = vpow.pop %v6088
    %v6090 = vmul.f32 %v6087, 1.442695
    %v6091 = vpow.pop %v6090
    %v6092 = vadd.f32 %v6089, 1.0
    %v6093 = vadd.f32 %v6091, 1.0
    %v6094 = vrcp.pop %v6092
    %v6095 = vmul.f32 1.0, %v6094
    %v6096 = vrcp.pop %v6093
    %v6097 = vmul.f32 1.0, %v6096
    %vm6098 = vcmask 7168
    %6099 = vst.msk [vmem:[%s9] sm:$0xff] %vm6098, %v6095
    %6100 = vst.msk [vmem:[%s9 + $0x8] sm:$0xff] %vm6098, %v6097
    // Predicated region
    $region70: #{tpu_custom_call.1} parent=1 // pred_check
      _
    $region71: #{tpu_custom_call.1} parent=1 // pred_check_branch
      %6102 = sbr.rel (0) target = $region73
    $region72: #{tpu_custom_call.1} parent=1 // pred_region
      _
    $region73: #{tpu_custom_call.1} parent=1 // pred_fallthru
      _
    // Predicated region
    $region74: #{tpu_custom_call.1} parent=1 // pred_check
      _
    $region75: #{tpu_custom_call.1} parent=1 // pred_check_branch
      %6104 = sbr.rel (0) target = $region77
    $region76: #{tpu_custom_call.1} parent=1 // pred_region
      _
    $region77: #{tpu_custom_call.1} parent=1 // pred_fallthru
      _
    %6105 = vsyncpa [#allocation4], 1
    %6106 = vsyncpa [#allocation6], 1
    %6107 = vsyncpa [#allocation9], 1
    %6108 = vsyncpa [#allocation12], 1
    %6109 = vsyncpa [#allocation15], 1

</llo_original>
